<compile_context>
chip_gen: v7x
topology: tpu7x:2x2x1
jax: 0.10.0
libtpu: 0.0.40
codegen_flags: <defaults>
</compile_context>

<pallas_src>
import functools

import jax
import jax.numpy as jnp
from jax.experimental import pallas as pl

HIDDEN = 32000          # connect_1_2 in the PyTorch module
LANES = 128             # TPU lane width
CHUNK = 1280            # lane-aligned chunk (10 vregs wide per operand, f32)
NCHUNK = HIDDEN // CHUNK  # 25 unrolled inner iterations
assert CHUNK % LANES == 0 and HIDDEN % CHUNK == 0


def _net2_kernel(*refs, p):
    """fc1 (outer product, input width 1) -> ReLU -> dropout -> fc2 dot.

    refs = (x_ref, params_ref, b2_ref[, bits_ref], o_ref)
      x_ref      : (N, 1)      f32
      params_ref : (3, HIDDEN) f32   rows = [fc1.weight^T, fc1.bias, fc2.weight]
      b2_ref     : (1, 1)      f32
      bits_ref   : (N, HIDDEN) u32   (only present when p > 0)
      o_ref      : (N, 1)      f32
    """
    if p > 0.0:
        x_ref, params_ref, b2_ref, bits_ref, o_ref = refs
        # keep iff bits >= thr  =>  P(drop) = thr / 2^32 = p
        keep_thr = jnp.uint32(min(int(round(p * 2.0 ** 32)), 2 ** 32 - 1))
    else:
        x_ref, params_ref, b2_ref, o_ref = refs
        bits_ref = None
        keep_thr = None

    x = x_ref[...]                              # (N, 1)
    n = x.shape[0]

    def body(i, acc):                           # acc: (N, LANES) f32
        off = pl.multiple_of(i * CHUNK, LANES)
        w1c = params_ref[pl.ds(0, 1), pl.ds(off, CHUNK)]   # (1, CHUNK)
        b1c = params_ref[pl.ds(1, 1), pl.ds(off, CHUNK)]   # (1, CHUNK)
        w2c = params_ref[pl.ds(2, 1), pl.ds(off, CHUNK)]   # (1, CHUNK)

        # fc1 on a width-1 input is an outer product, then ReLU.
        h = jnp.maximum(x * w1c + b1c, 0.0)                # (N, CHUNK)

        if p > 0.0:
            bits = bits_ref[:, pl.ds(off, CHUNK)]          # (N, CHUNK) u32
            # uint32 threshold compare; the 1/(1-p) rescale is deferred.
            h = jnp.where(bits >= keep_thr, h, 0.0)

        prod = h * w2c                                     # (N, CHUNK)

        # Lane-wise fold into the narrow accumulator (pure VPU adds on
        # tile-aligned 128-lane slices; no per-chunk cross-lane reduce).
        for j in range(CHUNK // LANES):
            acc = acc + prod[:, j * LANES:(j + 1) * LANES]
        return acc

    acc = jax.lax.fori_loop(
        0, NCHUNK, body, jnp.zeros((n, LANES), jnp.float32), unroll=True)

    # Single cross-lane reduction at the very end.
    total = jnp.sum(acc, axis=-1, keepdims=True)           # (N, 1)
    if p > 0.0:
        total = total * (1.0 / (1.0 - p))                  # hoisted dropout scale
    o_ref[...] = total + b2_ref[...]                       # (1,1) broadcasts


def net2_forward(x, w1, b1, w2, b2, *, dropout_p=0.0, rng_key=None):
    """x: (N, 1) f32.  w1/b1/w2: (1, HIDDEN) f32.  b2: (1, 1) f32 -> (N, 1)."""
    assert 0.0 <= dropout_p < 1.0
    n = x.shape[0]

    # Pack the three (1, HIDDEN) parameter rows into one (3, HIDDEN) array so
    # the kernel sees a single dense weight DMA.
    params = jnp.concatenate([w1, b1, w2], axis=0)          # (3, HIDDEN)

    kernel = functools.partial(_net2_kernel, p=float(dropout_p))
    out_shape = jax.ShapeDtypeStruct((n, 1), jnp.float32)

    if dropout_p > 0.0:
        if rng_key is None:
            rng_key = jax.random.PRNGKey(0)
        bits = jax.random.bits(rng_key, (n, HIDDEN), dtype=jnp.uint32)
        return pl.pallas_call(kernel, out_shape=out_shape)(x, params, b2, bits)

    return pl.pallas_call(kernel, out_shape=out_shape)(x, params, b2)


def init_params(key):
    """Deterministic init matching Net2.__init__ (shapes + uniform ranges)."""
    k1, k2, k3, k4 = jax.random.split(key, 4)
    # fc1: Linear(1 -> 32000). weight uniform(-0.5, 0.5); bias default
    # uniform(-1/sqrt(fan_in), 1/sqrt(fan_in)) with fan_in = 1.
    w1 = jax.random.uniform(k1, (1, HIDDEN), jnp.float32, -0.5, 0.5)
    b1 = jax.random.uniform(k2, (1, HIDDEN), jnp.float32, -1.0, 1.0)
    # fc2: Linear(32000 -> 1). weight uniform(-0.5, 0.5); bias fan_in = 32000.
    w2 = jax.random.uniform(k3, (1, HIDDEN), jnp.float32, -0.5, 0.5)
    bb = 1.0 / (HIDDEN ** 0.5)
    b2 = jax.random.uniform(k4, (1, 1), jnp.float32, -bb, bb)
    return w1, b1, w2, b2


def reference_forward(x, w1, b1, w2, b2):
    """Plain-JAX reference (dropout disabled) for a correctness check."""
    h = jnp.maximum(x * w1 + b1, 0.0)          # (N, HIDDEN)
    return jnp.sum(h * w2, axis=-1, keepdims=True) + b2


if __name__ == "__main__":
    key = jax.random.PRNGKey(0)
    kx, kp, kd = jax.random.split(key, 3)

    batch = 8
    x = jax.random.normal(kx, (batch, 1), dtype=jnp.float32)
    w1, b1, w2, b2 = init_params(kp)

    # Eval-style (dropout disabled): deterministic check vs plain-JAX reference.
    out = jax.block_until_ready(net2_forward(x, w1, b1, w2, b2, dropout_p=0.0))
    ref = reference_forward(x, w1, b1, w2, b2)
    assert out.shape == (batch, 1)
    assert jnp.allclose(out, ref, rtol=2e-3, atol=2e-3), (out, ref)

    # Training-style: exercise the dropout (uint32 threshold) path once.
    out_dp = jax.block_until_ready(
        net2_forward(x, w1, b1, w2, b2, dropout_p=0.5, rng_key=kd))
    assert out_dp.shape == (batch, 1)
    assert bool(jnp.all(jnp.isfinite(out_dp)))

    print("KERNEL_OK")
</pallas_src>

<mosaic_0001>
module attributes {stable_mosaic.version = 11 : i64} {
  func.func @_net2_kernel(%arg0: memref<8x1xf32, #tpu.memory_space<vmem>>, %arg1: memref<3x32000xf32, #tpu.memory_space<vmem>>, %arg2: memref<1x1xf32, #tpu.memory_space<vmem>>, %arg3: memref<8x1xf32, #tpu.memory_space<vmem>>) attributes {dimension_semantics = [], scalar_prefetch = 0 : i64, scratch_operands = 0 : i64, tpu.core_type = #tpu.core_type<tc>} {
    %c0 = arith.constant 0 : index
    %c0_0 = arith.constant 0 : index
    %0 = vector.load %arg0[%c0, %c0_0] : memref<8x1xf32, #tpu.memory_space<vmem>>, vector<8x1xf32>
    %cst = arith.constant 0.000000e+00 : f32
    %1 = vector.broadcast %cst : f32 to vector<8x128xf32>
    %c0_i32 = arith.constant 0 : i32
    %c1280_i32 = arith.constant 1280 : i32
    %2 = arith.muli %c0_i32, %c1280_i32 : i32
    %3 = tpu.assume_multiple %2, 128 : i32
    %c0_1 = arith.constant 0 : index
    %4 = arith.index_cast %3 : i32 to index
    %5 = vector.load %arg1[%c0_1, %4] : memref<3x32000xf32, #tpu.memory_space<vmem>>, vector<1x1280xf32>
    %c1 = arith.constant 1 : index
    %6 = arith.index_cast %3 : i32 to index
    %7 = vector.load %arg1[%c1, %6] : memref<3x32000xf32, #tpu.memory_space<vmem>>, vector<1x1280xf32>
    %c2 = arith.constant 2 : index
    %8 = arith.index_cast %3 : i32 to index
    %9 = vector.load %arg1[%c2, %8] : memref<3x32000xf32, #tpu.memory_space<vmem>>, vector<1x1280xf32>
    %10 = vector.broadcast %0 : vector<8x1xf32> to vector<8x1280xf32>
    %11 = vector.broadcast %5 : vector<1x1280xf32> to vector<8x1280xf32>
    %12 = arith.mulf %10, %11 : vector<8x1280xf32>
    %13 = vector.broadcast %7 : vector<1x1280xf32> to vector<8x1280xf32>
    %14 = arith.addf %12, %13 : vector<8x1280xf32>
    %cst_2 = arith.constant 0.000000e+00 : f32
    %15 = vector.broadcast %cst_2 : f32 to vector<8x1280xf32>
    %16 = arith.maximumf %14, %15 : vector<8x1280xf32>
    %17 = vector.broadcast %9 : vector<1x1280xf32> to vector<8x1280xf32>
    %18 = arith.mulf %16, %17 : vector<8x1280xf32>
    %19 = vector.extract_strided_slice %18 {offsets = [0, 0], sizes = [8, 128], strides = [1, 1]} : vector<8x1280xf32> to vector<8x128xf32>
    %20 = arith.addf %1, %19 : vector<8x128xf32>
    %21 = vector.extract_strided_slice %18 {offsets = [0, 128], sizes = [8, 128], strides = [1, 1]} : vector<8x1280xf32> to vector<8x128xf32>
    %22 = arith.addf %20, %21 : vector<8x128xf32>
    %23 = vector.extract_strided_slice %18 {offsets = [0, 256], sizes = [8, 128], strides = [1, 1]} : vector<8x1280xf32> to vector<8x128xf32>
    %24 = arith.addf %22, %23 : vector<8x128xf32>
    %25 = vector.extract_strided_slice %18 {offsets = [0, 384], sizes = [8, 128], strides = [1, 1]} : vector<8x1280xf32> to vector<8x128xf32>
    %26 = arith.addf %24, %25 : vector<8x128xf32>
    %27 = vector.extract_strided_slice %18 {offsets = [0, 512], sizes = [8, 128], strides = [1, 1]} : vector<8x1280xf32> to vector<8x128xf32>
    %28 = arith.addf %26, %27 : vector<8x128xf32>
    %29 = vector.extract_strided_slice %18 {offsets = [0, 640], sizes = [8, 128], strides = [1, 1]} : vector<8x1280xf32> to vector<8x128xf32>
    %30 = arith.addf %28, %29 : vector<8x128xf32>
    %31 = vector.extract_strided_slice %18 {offsets = [0, 768], sizes = [8, 128], strides = [1, 1]} : vector<8x1280xf32> to vector<8x128xf32>
    %32 = arith.addf %30, %31 : vector<8x128xf32>
    %33 = vector.extract_strided_slice %18 {offsets = [0, 896], sizes = [8, 128], strides = [1, 1]} : vector<8x1280xf32> to vector<8x128xf32>
    %34 = arith.addf %32, %33 : vector<8x128xf32>
    %35 = vector.extract_strided_slice %18 {offsets = [0, 1024], sizes = [8, 128], strides = [1, 1]} : vector<8x1280xf32> to vector<8x128xf32>
    %36 = arith.addf %34, %35 : vector<8x128xf32>
    %37 = vector.extract_strided_slice %18 {offsets = [0, 1152], sizes = [8, 128], strides = [1, 1]} : vector<8x1280xf32> to vector<8x128xf32>
    %38 = arith.addf %36, %37 : vector<8x128xf32>
    %c1_i32 = arith.constant 1 : i32
    %c1280_i32_3 = arith.constant 1280 : i32
    %39 = arith.muli %c1_i32, %c1280_i32_3 : i32
    %40 = tpu.assume_multiple %39, 128 : i32
    %c0_4 = arith.constant 0 : index
    %41 = arith.index_cast %40 : i32 to index
    %42 = vector.load %arg1[%c0_4, %41] : memref<3x32000xf32, #tpu.memory_space<vmem>>, vector<1x1280xf32>
    %c1_5 = arith.constant 1 : index
    %43 = arith.index_cast %40 : i32 to index
    %44 = vector.load %arg1[%c1_5, %43] : memref<3x32000xf32, #tpu.memory_space<vmem>>, vector<1x1280xf32>
    %c2_6 = arith.constant 2 : index
    %45 = arith.index_cast %40 : i32 to index
    %46 = vector.load %arg1[%c2_6, %45] : memref<3x32000xf32, #tpu.memory_space<vmem>>, vector<1x1280xf32>
    %47 = vector.broadcast %0 : vector<8x1xf32> to vector<8x1280xf32>
    %48 = vector.broadcast %42 : vector<1x1280xf32> to vector<8x1280xf32>
    %49 = arith.mulf %47, %48 : vector<8x1280xf32>
    %50 = vector.broadcast %44 : vector<1x1280xf32> to vector<8x1280xf32>
    %51 = arith.addf %49, %50 : vector<8x1280xf32>
    %cst_7 = arith.constant 0.000000e+00 : f32
    %52 = vector.broadcast %cst_7 : f32 to vector<8x1280xf32>
    %53 = arith.maximumf %51, %52 : vector<8x1280xf32>
    %54 = vector.broadcast %46 : vector<1x1280xf32> to vector<8x1280xf32>
    %55 = arith.mulf %53, %54 : vector<8x1280xf32>
    %56 = vector.extract_strided_slice %55 {offsets = [0, 0], sizes = [8, 128], strides = [1, 1]} : vector<8x1280xf32> to vector<8x128xf32>
    %57 = arith.addf %38, %56 : vector<8x128xf32>
    %58 = vector.extract_strided_slice %55 {offsets = [0, 128], sizes = [8, 128], strides = [1, 1]} : vector<8x1280xf32> to vector<8x128xf32>
    %59 = arith.addf %57, %58 : vector<8x128xf32>
    %60 = vector.extract_strided_slice %55 {offsets = [0, 256], sizes = [8, 128], strides = [1, 1]} : vector<8x1280xf32> to vector<8x128xf32>
    %61 = arith.addf %59, %60 : vector<8x128xf32>
    %62 = vector.extract_strided_slice %55 {offsets = [0, 384], sizes = [8, 128], strides = [1, 1]} : vector<8x1280xf32> to vector<8x128xf32>
    %63 = arith.addf %61, %62 : vector<8x128xf32>
    %64 = vector.extract_strided_slice %55 {offsets = [0, 512], sizes = [8, 128], strides = [1, 1]} : vector<8x1280xf32> to vector<8x128xf32>
    %65 = arith.addf %63, %64 : vector<8x128xf32>
    %66 = vector.extract_strided_slice %55 {offsets = [0, 640], sizes = [8, 128], strides = [1, 1]} : vector<8x1280xf32> to vector<8x128xf32>
    %67 = arith.addf %65, %66 : vector<8x128xf32>
    %68 = vector.extract_strided_slice %55 {offsets = [0, 768], sizes = [8, 128], strides = [1, 1]} : vector<8x1280xf32> to vector<8x128xf32>
    %69 = arith.addf %67, %68 : vector<8x128xf32>
    %70 = vector.extract_strided_slice %55 {offsets = [0, 896], sizes = [8, 128], strides = [1, 1]} : vector<8x1280xf32> to vector<8x128xf32>
    %71 = arith.addf %69, %70 : vector<8x128xf32>
    %72 = vector.extract_strided_slice %55 {offsets = [0, 1024], sizes = [8, 128], strides = [1, 1]} : vector<8x1280xf32> to vector<8x128xf32>
    %73 = arith.addf %71, %72 : vector<8x128xf32>
    %74 = vector.extract_strided_slice %55 {offsets = [0, 1152], sizes = [8, 128], strides = [1, 1]} : vector<8x1280xf32> to vector<8x128xf32>
    %75 = arith.addf %73, %74 : vector<8x128xf32>
    %c2_i32 = arith.constant 2 : i32
    %c1280_i32_8 = arith.constant 1280 : i32
    %76 = arith.muli %c2_i32, %c1280_i32_8 : i32
    %77 = tpu.assume_multiple %76, 128 : i32
    %c0_9 = arith.constant 0 : index
    %78 = arith.index_cast %77 : i32 to index
    %79 = vector.load %arg1[%c0_9, %78] : memref<3x32000xf32, #tpu.memory_space<vmem>>, vector<1x1280xf32>
    %c1_10 = arith.constant 1 : index
    %80 = arith.index_cast %77 : i32 to index
    %81 = vector.load %arg1[%c1_10, %80] : memref<3x32000xf32, #tpu.memory_space<vmem>>, vector<1x1280xf32>
    %c2_11 = arith.constant 2 : index
    %82 = arith.index_cast %77 : i32 to index
    %83 = vector.load %arg1[%c2_11, %82] : memref<3x32000xf32, #tpu.memory_space<vmem>>, vector<1x1280xf32>
    %84 = vector.broadcast %0 : vector<8x1xf32> to vector<8x1280xf32>
    %85 = vector.broadcast %79 : vector<1x1280xf32> to vector<8x1280xf32>
    %86 = arith.mulf %84, %85 : vector<8x1280xf32>
    %87 = vector.broadcast %81 : vector<1x1280xf32> to vector<8x1280xf32>
    %88 = arith.addf %86, %87 : vector<8x1280xf32>
    %cst_12 = arith.constant 0.000000e+00 : f32
    %89 = vector.broadcast %cst_12 : f32 to vector<8x1280xf32>
    %90 = arith.maximumf %88, %89 : vector<8x1280xf32>
    %91 = vector.broadcast %83 : vector<1x1280xf32> to vector<8x1280xf32>
    %92 = arith.mulf %90, %91 : vector<8x1280xf32>
    %93 = vector.extract_strided_slice %92 {offsets = [0, 0], sizes = [8, 128], strides = [1, 1]} : vector<8x1280xf32> to vector<8x128xf32>
    %94 = arith.addf %75, %93 : vector<8x128xf32>
    %95 = vector.extract_strided_slice %92 {offsets = [0, 128], sizes = [8, 128], strides = [1, 1]} : vector<8x1280xf32> to vector<8x128xf32>
    %96 = arith.addf %94, %95 : vector<8x128xf32>
    %97 = vector.extract_strided_slice %92 {offsets = [0, 256], sizes = [8, 128], strides = [1, 1]} : vector<8x1280xf32> to vector<8x128xf32>
    %98 = arith.addf %96, %97 : vector<8x128xf32>
    %99 = vector.extract_strided_slice %92 {offsets = [0, 384], sizes = [8, 128], strides = [1, 1]} : vector<8x1280xf32> to vector<8x128xf32>
    %100 = arith.addf %98, %99 : vector<8x128xf32>
    %101 = vector.extract_strided_slice %92 {offsets = [0, 512], sizes = [8, 128], strides = [1, 1]} : vector<8x1280xf32> to vector<8x128xf32>
    %102 = arith.addf %100, %101 : vector<8x128xf32>
    %103 = vector.extract_strided_slice %92 {offsets = [0, 640], sizes = [8, 128], strides = [1, 1]} : vector<8x1280xf32> to vector<8x128xf32>
    %104 = arith.addf %102, %103 : vector<8x128xf32>
    %105 = vector.extract_strided_slice %92 {offsets = [0, 768], sizes = [8, 128], strides = [1, 1]} : vector<8x1280xf32> to vector<8x128xf32>
    %106 = arith.addf %104, %105 : vector<8x128xf32>
    %107 = vector.extract_strided_slice %92 {offsets = [0, 896], sizes = [8, 128], strides = [1, 1]} : vector<8x1280xf32> to vector<8x128xf32>
    %108 = arith.addf %106, %107 : vector<8x128xf32>
    %109 = vector.extract_strided_slice %92 {offsets = [0, 1024], sizes = [8, 128], strides = [1, 1]} : vector<8x1280xf32> to vector<8x128xf32>
    %110 = arith.addf %108, %109 : vector<8x128xf32>
    %111 = vector.extract_strided_slice %92 {offsets = [0, 1152], sizes = [8, 128], strides = [1, 1]} : vector<8x1280xf32> to vector<8x128xf32>
    %112 = arith.addf %110, %111 : vector<8x128xf32>
    %c3_i32 = arith.constant 3 : i32
    %c1280_i32_13 = arith.constant 1280 : i32
    %113 = arith.muli %c3_i32, %c1280_i32_13 : i32
    %114 = tpu.assume_multiple %113, 128 : i32
    %c0_14 = arith.constant 0 : index
    %115 = arith.index_cast %114 : i32 to index
    %116 = vector.load %arg1[%c0_14, %115] : memref<3x32000xf32, #tpu.memory_space<vmem>>, vector<1x1280xf32>
    %c1_15 = arith.constant 1 : index
    %117 = arith.index_cast %114 : i32 to index
    %118 = vector.load %arg1[%c1_15, %117] : memref<3x32000xf32, #tpu.memory_space<vmem>>, vector<1x1280xf32>
    %c2_16 = arith.constant 2 : index
    %119 = arith.index_cast %114 : i32 to index
    %120 = vector.load %arg1[%c2_16, %119] : memref<3x32000xf32, #tpu.memory_space<vmem>>, vector<1x1280xf32>
    %121 = vector.broadcast %0 : vector<8x1xf32> to vector<8x1280xf32>
    %122 = vector.broadcast %116 : vector<1x1280xf32> to vector<8x1280xf32>
    %123 = arith.mulf %121, %122 : vector<8x1280xf32>
    %124 = vector.broadcast %118 : vector<1x1280xf32> to vector<8x1280xf32>
    %125 = arith.addf %123, %124 : vector<8x1280xf32>
    %cst_17 = arith.constant 0.000000e+00 : f32
    %126 = vector.broadcast %cst_17 : f32 to vector<8x1280xf32>
    %127 = arith.maximumf %125, %126 : vector<8x1280xf32>
    %128 = vector.broadcast %120 : vector<1x1280xf32> to vector<8x1280xf32>
    %129 = arith.mulf %127, %128 : vector<8x1280xf32>
    %130 = vector.extract_strided_slice %129 {offsets = [0, 0], sizes = [8, 128], strides = [1, 1]} : vector<8x1280xf32> to vector<8x128xf32>
    %131 = arith.addf %112, %130 : vector<8x128xf32>
    %132 = vector.extract_strided_slice %129 {offsets = [0, 128], sizes = [8, 128], strides = [1, 1]} : vector<8x1280xf32> to vector<8x128xf32>
    %133 = arith.addf %131, %132 : vector<8x128xf32>
    %134 = vector.extract_strided_slice %129 {offsets = [0, 256], sizes = [8, 128], strides = [1, 1]} : vector<8x1280xf32> to vector<8x128xf32>
    %135 = arith.addf %133, %134 : vector<8x128xf32>
    %136 = vector.extract_strided_slice %129 {offsets = [0, 384], sizes = [8, 128], strides = [1, 1]} : vector<8x1280xf32> to vector<8x128xf32>
    %137 = arith.addf %135, %136 : vector<8x128xf32>
    %138 = vector.extract_strided_slice %129 {offsets = [0, 512], sizes = [8, 128], strides = [1, 1]} : vector<8x1280xf32> to vector<8x128xf32>
    %139 = arith.addf %137, %138 : vector<8x128xf32>
    %140 = vector.extract_strided_slice %129 {offsets = [0, 640], sizes = [8, 128], strides = [1, 1]} : vector<8x1280xf32> to vector<8x128xf32>
    %141 = arith.addf %139, %140 : vector<8x128xf32>
    %142 = vector.extract_strided_slice %129 {offsets = [0, 768], sizes = [8, 128], strides = [1, 1]} : vector<8x1280xf32> to vector<8x128xf32>
    %143 = arith.addf %141, %142 : vector<8x128xf32>
    %144 = vector.extract_strided_slice %129 {offsets = [0, 896], sizes = [8, 128], strides = [1, 1]} : vector<8x1280xf32> to vector<8x128xf32>
    %145 = arith.addf %143, %144 : vector<8x128xf32>
    %146 = vector.extract_strided_slice %129 {offsets = [0, 1024], sizes = [8, 128], strides = [1, 1]} : vector<8x1280xf32> to vector<8x128xf32>
    %147 = arith.addf %145, %146 : vector<8x128xf32>
    %148 = vector.extract_strided_slice %129 {offsets = [0, 1152], sizes = [8, 128], strides = [1, 1]} : vector<8x1280xf32> to vector<8x128xf32>
    %149 = arith.addf %147, %148 : vector<8x128xf32>
    %c4_i32 = arith.constant 4 : i32
    %c1280_i32_18 = arith.constant 1280 : i32
    %150 = arith.muli %c4_i32, %c1280_i32_18 : i32
    %151 = tpu.assume_multiple %150, 128 : i32
    %c0_19 = arith.constant 0 : index
    %152 = arith.index_cast %151 : i32 to index
    %153 = vector.load %arg1[%c0_19, %152] : memref<3x32000xf32, #tpu.memory_space<vmem>>, vector<1x1280xf32>
    %c1_20 = arith.constant 1 : index
    %154 = arith.index_cast %151 : i32 to index
    %155 = vector.load %arg1[%c1_20, %154] : memref<3x32000xf32, #tpu.memory_space<vmem>>, vector<1x1280xf32>
    %c2_21 = arith.constant 2 : index
    %156 = arith.index_cast %151 : i32 to index
    %157 = vector.load %arg1[%c2_21, %156] : memref<3x32000xf32, #tpu.memory_space<vmem>>, vector<1x1280xf32>
    %158 = vector.broadcast %0 : vector<8x1xf32> to vector<8x1280xf32>
    %159 = vector.broadcast %153 : vector<1x1280xf32> to vector<8x1280xf32>
    %160 = arith.mulf %158, %159 : vector<8x1280xf32>
    %161 = vector.broadcast %155 : vector<1x1280xf32> to vector<8x1280xf32>
    %162 = arith.addf %160, %161 : vector<8x1280xf32>
    %cst_22 = arith.constant 0.000000e+00 : f32
    %163 = vector.broadcast %cst_22 : f32 to vector<8x1280xf32>
    %164 = arith.maximumf %162, %163 : vector<8x1280xf32>
    %165 = vector.broadcast %157 : vector<1x1280xf32> to vector<8x1280xf32>
    %166 = arith.mulf %164, %165 : vector<8x1280xf32>
    %167 = vector.extract_strided_slice %166 {offsets = [0, 0], sizes = [8, 128], strides = [1, 1]} : vector<8x1280xf32> to vector<8x128xf32>
    %168 = arith.addf %149, %167 : vector<8x128xf32>
    %169 = vector.extract_strided_slice %166 {offsets = [0, 128], sizes = [8, 128], strides = [1, 1]} : vector<8x1280xf32> to vector<8x128xf32>
    %170 = arith.addf %168, %169 : vector<8x128xf32>
    %171 = vector.extract_strided_slice %166 {offsets = [0, 256], sizes = [8, 128], strides = [1, 1]} : vector<8x1280xf32> to vector<8x128xf32>
    %172 = arith.addf %170, %171 : vector<8x128xf32>
    %173 = vector.extract_strided_slice %166 {offsets = [0, 384], sizes = [8, 128], strides = [1, 1]} : vector<8x1280xf32> to vector<8x128xf32>
    %174 = arith.addf %172, %173 : vector<8x128xf32>
    %175 = vector.extract_strided_slice %166 {offsets = [0, 512], sizes = [8, 128], strides = [1, 1]} : vector<8x1280xf32> to vector<8x128xf32>
    %176 = arith.addf %174, %175 : vector<8x128xf32>
    %177 = vector.extract_strided_slice %166 {offsets = [0, 640], sizes = [8, 128], strides = [1, 1]} : vector<8x1280xf32> to vector<8x128xf32>
    %178 = arith.addf %176, %177 : vector<8x128xf32>
    %179 = vector.extract_strided_slice %166 {offsets = [0, 768], sizes = [8, 128], strides = [1, 1]} : vector<8x1280xf32> to vector<8x128xf32>
    %180 = arith.addf %178, %179 : vector<8x128xf32>
    %181 = vector.extract_strided_slice %166 {offsets = [0, 896], sizes = [8, 128], strides = [1, 1]} : vector<8x1280xf32> to vector<8x128xf32>
    %182 = arith.addf %180, %181 : vector<8x128xf32>
    %183 = vector.extract_strided_slice %166 {offsets = [0, 1024], sizes = [8, 128], strides = [1, 1]} : vector<8x1280xf32> to vector<8x128xf32>
    %184 = arith.addf %182, %183 : vector<8x128xf32>
    %185 = vector.extract_strided_slice %166 {offsets = [0, 1152], sizes = [8, 128], strides = [1, 1]} : vector<8x1280xf32> to vector<8x128xf32>
    %186 = arith.addf %184, %185 : vector<8x128xf32>
    %c5_i32 = arith.constant 5 : i32
    %c1280_i32_23 = arith.constant 1280 : i32
    %187 = arith.muli %c5_i32, %c1280_i32_23 : i32
    %188 = tpu.assume_multiple %187, 128 : i32
    %c0_24 = arith.constant 0 : index
    %189 = arith.index_cast %188 : i32 to index
    %190 = vector.load %arg1[%c0_24, %189] : memref<3x32000xf32, #tpu.memory_space<vmem>>, vector<1x1280xf32>
    %c1_25 = arith.constant 1 : index
    %191 = arith.index_cast %188 : i32 to index
    %192 = vector.load %arg1[%c1_25, %191] : memref<3x32000xf32, #tpu.memory_space<vmem>>, vector<1x1280xf32>
    %c2_26 = arith.constant 2 : index
    %193 = arith.index_cast %188 : i32 to index
    %194 = vector.load %arg1[%c2_26, %193] : memref<3x32000xf32, #tpu.memory_space<vmem>>, vector<1x1280xf32>
    %195 = vector.broadcast %0 : vector<8x1xf32> to vector<8x1280xf32>
    %196 = vector.broadcast %190 : vector<1x1280xf32> to vector<8x1280xf32>
    %197 = arith.mulf %195, %196 : vector<8x1280xf32>
    %198 = vector.broadcast %192 : vector<1x1280xf32> to vector<8x1280xf32>
    %199 = arith.addf %197, %198 : vector<8x1280xf32>
    %cst_27 = arith.constant 0.000000e+00 : f32
    %200 = vector.broadcast %cst_27 : f32 to vector<8x1280xf32>
    %201 = arith.maximumf %199, %200 : vector<8x1280xf32>
    %202 = vector.broadcast %194 : vector<1x1280xf32> to vector<8x1280xf32>
    %203 = arith.mulf %201, %202 : vector<8x1280xf32>
    %204 = vector.extract_strided_slice %203 {offsets = [0, 0], sizes = [8, 128], strides = [1, 1]} : vector<8x1280xf32> to vector<8x128xf32>
    %205 = arith.addf %186, %204 : vector<8x128xf32>
    %206 = vector.extract_strided_slice %203 {offsets = [0, 128], sizes = [8, 128], strides = [1, 1]} : vector<8x1280xf32> to vector<8x128xf32>
    %207 = arith.addf %205, %206 : vector<8x128xf32>
    %208 = vector.extract_strided_slice %203 {offsets = [0, 256], sizes = [8, 128], strides = [1, 1]} : vector<8x1280xf32> to vector<8x128xf32>
    %209 = arith.addf %207, %208 : vector<8x128xf32>
    %210 = vector.extract_strided_slice %203 {offsets = [0, 384], sizes = [8, 128], strides = [1, 1]} : vector<8x1280xf32> to vector<8x128xf32>
    %211 = arith.addf %209, %210 : vector<8x128xf32>
    %212 = vector.extract_strided_slice %203 {offsets = [0, 512], sizes = [8, 128], strides = [1, 1]} : vector<8x1280xf32> to vector<8x128xf32>
    %213 = arith.addf %211, %212 : vector<8x128xf32>
    %214 = vector.extract_strided_slice %203 {offsets = [0, 640], sizes = [8, 128], strides = [1, 1]} : vector<8x1280xf32> to vector<8x128xf32>
    %215 = arith.addf %213, %214 : vector<8x128xf32>
    %216 = vector.extract_strided_slice %203 {offsets = [0, 768], sizes = [8, 128], strides = [1, 1]} : vector<8x1280xf32> to vector<8x128xf32>
    %217 = arith.addf %215, %216 : vector<8x128xf32>
    %218 = vector.extract_strided_slice %203 {offsets = [0, 896], sizes = [8, 128], strides = [1, 1]} : vector<8x1280xf32> to vector<8x128xf32>
    %219 = arith.addf %217, %218 : vector<8x128xf32>
    %220 = vector.extract_strided_slice %203 {offsets = [0, 1024], sizes = [8, 128], strides = [1, 1]} : vector<8x1280xf32> to vector<8x128xf32>
    %221 = arith.addf %219, %220 : vector<8x128xf32>
    %222 = vector.extract_strided_slice %203 {offsets = [0, 1152], sizes = [8, 128], strides = [1, 1]} : vector<8x1280xf32> to vector<8x128xf32>
    %223 = arith.addf %221, %222 : vector<8x128xf32>
    %c6_i32 = arith.constant 6 : i32
    %c1280_i32_28 = arith.constant 1280 : i32
    %224 = arith.muli %c6_i32, %c1280_i32_28 : i32
    %225 = tpu.assume_multiple %224, 128 : i32
    %c0_29 = arith.constant 0 : index
    %226 = arith.index_cast %225 : i32 to index
    %227 = vector.load %arg1[%c0_29, %226] : memref<3x32000xf32, #tpu.memory_space<vmem>>, vector<1x1280xf32>
    %c1_30 = arith.constant 1 : index
    %228 = arith.index_cast %225 : i32 to index
    %229 = vector.load %arg1[%c1_30, %228] : memref<3x32000xf32, #tpu.memory_space<vmem>>, vector<1x1280xf32>
    %c2_31 = arith.constant 2 : index
    %230 = arith.index_cast %225 : i32 to index
    %231 = vector.load %arg1[%c2_31, %230] : memref<3x32000xf32, #tpu.memory_space<vmem>>, vector<1x1280xf32>
    %232 = vector.broadcast %0 : vector<8x1xf32> to vector<8x1280xf32>
    %233 = vector.broadcast %227 : vector<1x1280xf32> to vector<8x1280xf32>
    %234 = arith.mulf %232, %233 : vector<8x1280xf32>
    %235 = vector.broadcast %229 : vector<1x1280xf32> to vector<8x1280xf32>
    %236 = arith.addf %234, %235 : vector<8x1280xf32>
    %cst_32 = arith.constant 0.000000e+00 : f32
    %237 = vector.broadcast %cst_32 : f32 to vector<8x1280xf32>
    %238 = arith.maximumf %236, %237 : vector<8x1280xf32>
    %239 = vector.broadcast %231 : vector<1x1280xf32> to vector<8x1280xf32>
    %240 = arith.mulf %238, %239 : vector<8x1280xf32>
    %241 = vector.extract_strided_slice %240 {offsets = [0, 0], sizes = [8, 128], strides = [1, 1]} : vector<8x1280xf32> to vector<8x128xf32>
    %242 = arith.addf %223, %241 : vector<8x128xf32>
    %243 = vector.extract_strided_slice %240 {offsets = [0, 128], sizes = [8, 128], strides = [1, 1]} : vector<8x1280xf32> to vector<8x128xf32>
    %244 = arith.addf %242, %243 : vector<8x128xf32>
    %245 = vector.extract_strided_slice %240 {offsets = [0, 256], sizes = [8, 128], strides = [1, 1]} : vector<8x1280xf32> to vector<8x128xf32>
    %246 = arith.addf %244, %245 : vector<8x128xf32>
    %247 = vector.extract_strided_slice %240 {offsets = [0, 384], sizes = [8, 128], strides = [1, 1]} : vector<8x1280xf32> to vector<8x128xf32>
    %248 = arith.addf %246, %247 : vector<8x128xf32>
    %249 = vector.extract_strided_slice %240 {offsets = [0, 512], sizes = [8, 128], strides = [1, 1]} : vector<8x1280xf32> to vector<8x128xf32>
    %250 = arith.addf %248, %249 : vector<8x128xf32>
    %251 = vector.extract_strided_slice %240 {offsets = [0, 640], sizes = [8, 128], strides = [1, 1]} : vector<8x1280xf32> to vector<8x128xf32>
    %252 = arith.addf %250, %251 : vector<8x128xf32>
    %253 = vector.extract_strided_slice %240 {offsets = [0, 768], sizes = [8, 128], strides = [1, 1]} : vector<8x1280xf32> to vector<8x128xf32>
    %254 = arith.addf %252, %253 : vector<8x128xf32>
    %255 = vector.extract_strided_slice %240 {offsets = [0, 896], sizes = [8, 128], strides = [1, 1]} : vector<8x1280xf32> to vector<8x128xf32>
    %256 = arith.addf %254, %255 : vector<8x128xf32>
    %257 = vector.extract_strided_slice %240 {offsets = [0, 1024], sizes = [8, 128], strides = [1, 1]} : vector<8x1280xf32> to vector<8x128xf32>
    %258 = arith.addf %256, %257 : vector<8x128xf32>
    %259 = vector.extract_strided_slice %240 {offsets = [0, 1152], sizes = [8, 128], strides = [1, 1]} : vector<8x1280xf32> to vector<8x128xf32>
    %260 = arith.addf %258, %259 : vector<8x128xf32>
    %c7_i32 = arith.constant 7 : i32
    %c1280_i32_33 = arith.constant 1280 : i32
    %261 = arith.muli %c7_i32, %c1280_i32_33 : i32
    %262 = tpu.assume_multiple %261, 128 : i32
    %c0_34 = arith.constant 0 : index
    %263 = arith.index_cast %262 : i32 to index
    %264 = vector.load %arg1[%c0_34, %263] : memref<3x32000xf32, #tpu.memory_space<vmem>>, vector<1x1280xf32>
    %c1_35 = arith.constant 1 : index
    %265 = arith.index_cast %262 : i32 to index
    %266 = vector.load %arg1[%c1_35, %265] : memref<3x32000xf32, #tpu.memory_space<vmem>>, vector<1x1280xf32>
    %c2_36 = arith.constant 2 : index
    %267 = arith.index_cast %262 : i32 to index
    %268 = vector.load %arg1[%c2_36, %267] : memref<3x32000xf32, #tpu.memory_space<vmem>>, vector<1x1280xf32>
    %269 = vector.broadcast %0 : vector<8x1xf32> to vector<8x1280xf32>
    %270 = vector.broadcast %264 : vector<1x1280xf32> to vector<8x1280xf32>
    %271 = arith.mulf %269, %270 : vector<8x1280xf32>
    %272 = vector.broadcast %266 : vector<1x1280xf32> to vector<8x1280xf32>
    %273 = arith.addf %271, %272 : vector<8x1280xf32>
    %cst_37 = arith.constant 0.000000e+00 : f32
    %274 = vector.broadcast %cst_37 : f32 to vector<8x1280xf32>
    %275 = arith.maximumf %273, %274 : vector<8x1280xf32>
    %276 = vector.broadcast %268 : vector<1x1280xf32> to vector<8x1280xf32>
    %277 = arith.mulf %275, %276 : vector<8x1280xf32>
    %278 = vector.extract_strided_slice %277 {offsets = [0, 0], sizes = [8, 128], strides = [1, 1]} : vector<8x1280xf32> to vector<8x128xf32>
    %279 = arith.addf %260, %278 : vector<8x128xf32>
    %280 = vector.extract_strided_slice %277 {offsets = [0, 128], sizes = [8, 128], strides = [1, 1]} : vector<8x1280xf32> to vector<8x128xf32>
    %281 = arith.addf %279, %280 : vector<8x128xf32>
    %282 = vector.extract_strided_slice %277 {offsets = [0, 256], sizes = [8, 128], strides = [1, 1]} : vector<8x1280xf32> to vector<8x128xf32>
    %283 = arith.addf %281, %282 : vector<8x128xf32>
    %284 = vector.extract_strided_slice %277 {offsets = [0, 384], sizes = [8, 128], strides = [1, 1]} : vector<8x1280xf32> to vector<8x128xf32>
    %285 = arith.addf %283, %284 : vector<8x128xf32>
    %286 = vector.extract_strided_slice %277 {offsets = [0, 512], sizes = [8, 128], strides = [1, 1]} : vector<8x1280xf32> to vector<8x128xf32>
    %287 = arith.addf %285, %286 : vector<8x128xf32>
    %288 = vector.extract_strided_slice %277 {offsets = [0, 640], sizes = [8, 128], strides = [1, 1]} : vector<8x1280xf32> to vector<8x128xf32>
    %289 = arith.addf %287, %288 : vector<8x128xf32>
    %290 = vector.extract_strided_slice %277 {offsets = [0, 768], sizes = [8, 128], strides = [1, 1]} : vector<8x1280xf32> to vector<8x128xf32>
    %291 = arith.addf %289, %290 : vector<8x128xf32>
    %292 = vector.extract_strided_slice %277 {offsets = [0, 896], sizes = [8, 128], strides = [1, 1]} : vector<8x1280xf32> to vector<8x128xf32>
    %293 = arith.addf %291, %292 : vector<8x128xf32>
    %294 = vector.extract_strided_slice %277 {offsets = [0, 1024], sizes = [8, 128], strides = [1, 1]} : vector<8x1280xf32> to vector<8x128xf32>
    %295 = arith.addf %293, %294 : vector<8x128xf32>
    %296 = vector.extract_strided_slice %277 {offsets = [0, 1152], sizes = [8, 128], strides = [1, 1]} : vector<8x1280xf32> to vector<8x128xf32>
    %297 = arith.addf %295, %296 : vector<8x128xf32>
    %c8_i32 = arith.constant 8 : i32
    %c1280_i32_38 = arith.constant 1280 : i32
    %298 = arith.muli %c8_i32, %c1280_i32_38 : i32
    %299 = tpu.assume_multiple %298, 128 : i32
    %c0_39 = arith.constant 0 : index
    %300 = arith.index_cast %299 : i32 to index
    %301 = vector.load %arg1[%c0_39, %300] : memref<3x32000xf32, #tpu.memory_space<vmem>>, vector<1x1280xf32>
    %c1_40 = arith.constant 1 : index
    %302 = arith.index_cast %299 : i32 to index
    %303 = vector.load %arg1[%c1_40, %302] : memref<3x32000xf32, #tpu.memory_space<vmem>>, vector<1x1280xf32>
    %c2_41 = arith.constant 2 : index
    %304 = arith.index_cast %299 : i32 to index
    %305 = vector.load %arg1[%c2_41, %304] : memref<3x32000xf32, #tpu.memory_space<vmem>>, vector<1x1280xf32>
    %306 = vector.broadcast %0 : vector<8x1xf32> to vector<8x1280xf32>
    %307 = vector.broadcast %301 : vector<1x1280xf32> to vector<8x1280xf32>
    %308 = arith.mulf %306, %307 : vector<8x1280xf32>
    %309 = vector.broadcast %303 : vector<1x1280xf32> to vector<8x1280xf32>
    %310 = arith.addf %308, %309 : vector<8x1280xf32>
    %cst_42 = arith.constant 0.000000e+00 : f32
    %311 = vector.broadcast %cst_42 : f32 to vector<8x1280xf32>
    %312 = arith.maximumf %310, %311 : vector<8x1280xf32>
    %313 = vector.broadcast %305 : vector<1x1280xf32> to vector<8x1280xf32>
    %314 = arith.mulf %312, %313 : vector<8x1280xf32>
    %315 = vector.extract_strided_slice %314 {offsets = [0, 0], sizes = [8, 128], strides = [1, 1]} : vector<8x1280xf32> to vector<8x128xf32>
    %316 = arith.addf %297, %315 : vector<8x128xf32>
    %317 = vector.extract_strided_slice %314 {offsets = [0, 128], sizes = [8, 128], strides = [1, 1]} : vector<8x1280xf32> to vector<8x128xf32>
    %318 = arith.addf %316, %317 : vector<8x128xf32>
    %319 = vector.extract_strided_slice %314 {offsets = [0, 256], sizes = [8, 128], strides = [1, 1]} : vector<8x1280xf32> to vector<8x128xf32>
    %320 = arith.addf %318, %319 : vector<8x128xf32>
    %321 = vector.extract_strided_slice %314 {offsets = [0, 384], sizes = [8, 128], strides = [1, 1]} : vector<8x1280xf32> to vector<8x128xf32>
    %322 = arith.addf %320, %321 : vector<8x128xf32>
    %323 = vector.extract_strided_slice %314 {offsets = [0, 512], sizes = [8, 128], strides = [1, 1]} : vector<8x1280xf32> to vector<8x128xf32>
    %324 = arith.addf %322, %323 : vector<8x128xf32>
    %325 = vector.extract_strided_slice %314 {offsets = [0, 640], sizes = [8, 128], strides = [1, 1]} : vector<8x1280xf32> to vector<8x128xf32>
    %326 = arith.addf %324, %325 : vector<8x128xf32>
    %327 = vector.extract_strided_slice %314 {offsets = [0, 768], sizes = [8, 128], strides = [1, 1]} : vector<8x1280xf32> to vector<8x128xf32>
    %328 = arith.addf %326, %327 : vector<8x128xf32>
    %329 = vector.extract_strided_slice %314 {offsets = [0, 896], sizes = [8, 128], strides = [1, 1]} : vector<8x1280xf32> to vector<8x128xf32>
    %330 = arith.addf %328, %329 : vector<8x128xf32>
    %331 = vector.extract_strided_slice %314 {offsets = [0, 1024], sizes = [8, 128], strides = [1, 1]} : vector<8x1280xf32> to vector<8x128xf32>
    %332 = arith.addf %330, %331 : vector<8x128xf32>
    %333 = vector.extract_strided_slice %314 {offsets = [0, 1152], sizes = [8, 128], strides = [1, 1]} : vector<8x1280xf32> to vector<8x128xf32>
    %334 = arith.addf %332, %333 : vector<8x128xf32>
    %c9_i32 = arith.constant 9 : i32
    %c1280_i32_43 = arith.constant 1280 : i32
    %335 = arith.muli %c9_i32, %c1280_i32_43 : i32
    %336 = tpu.assume_multiple %335, 128 : i32
    %c0_44 = arith.constant 0 : index
    %337 = arith.index_cast %336 : i32 to index
    %338 = vector.load %arg1[%c0_44, %337] : memref<3x32000xf32, #tpu.memory_space<vmem>>, vector<1x1280xf32>
    %c1_45 = arith.constant 1 : index
    %339 = arith.index_cast %336 : i32 to index
    %340 = vector.load %arg1[%c1_45, %339] : memref<3x32000xf32, #tpu.memory_space<vmem>>, vector<1x1280xf32>
    %c2_46 = arith.constant 2 : index
    %341 = arith.index_cast %336 : i32 to index
    %342 = vector.load %arg1[%c2_46, %341] : memref<3x32000xf32, #tpu.memory_space<vmem>>, vector<1x1280xf32>
    %343 = vector.broadcast %0 : vector<8x1xf32> to vector<8x1280xf32>
    %344 = vector.broadcast %338 : vector<1x1280xf32> to vector<8x1280xf32>
    %345 = arith.mulf %343, %344 : vector<8x1280xf32>
    %346 = vector.broadcast %340 : vector<1x1280xf32> to vector<8x1280xf32>
    %347 = arith.addf %345, %346 : vector<8x1280xf32>
    %cst_47 = arith.constant 0.000000e+00 : f32
    %348 = vector.broadcast %cst_47 : f32 to vector<8x1280xf32>
    %349 = arith.maximumf %347, %348 : vector<8x1280xf32>
    %350 = vector.broadcast %342 : vector<1x1280xf32> to vector<8x1280xf32>
    %351 = arith.mulf %349, %350 : vector<8x1280xf32>
    %352 = vector.extract_strided_slice %351 {offsets = [0, 0], sizes = [8, 128], strides = [1, 1]} : vector<8x1280xf32> to vector<8x128xf32>
    %353 = arith.addf %334, %352 : vector<8x128xf32>
    %354 = vector.extract_strided_slice %351 {offsets = [0, 128], sizes = [8, 128], strides = [1, 1]} : vector<8x1280xf32> to vector<8x128xf32>
    %355 = arith.addf %353, %354 : vector<8x128xf32>
    %356 = vector.extract_strided_slice %351 {offsets = [0, 256], sizes = [8, 128], strides = [1, 1]} : vector<8x1280xf32> to vector<8x128xf32>
    %357 = arith.addf %355, %356 : vector<8x128xf32>
    %358 = vector.extract_strided_slice %351 {offsets = [0, 384], sizes = [8, 128], strides = [1, 1]} : vector<8x1280xf32> to vector<8x128xf32>
    %359 = arith.addf %357, %358 : vector<8x128xf32>
    %360 = vector.extract_strided_slice %351 {offsets = [0, 512], sizes = [8, 128], strides = [1, 1]} : vector<8x1280xf32> to vector<8x128xf32>
    %361 = arith.addf %359, %360 : vector<8x128xf32>
    %362 = vector.extract_strided_slice %351 {offsets = [0, 640], sizes = [8, 128], strides = [1, 1]} : vector<8x1280xf32> to vector<8x128xf32>
    %363 = arith.addf %361, %362 : vector<8x128xf32>
    %364 = vector.extract_strided_slice %351 {offsets = [0, 768], sizes = [8, 128], strides = [1, 1]} : vector<8x1280xf32> to vector<8x128xf32>
    %365 = arith.addf %363, %364 : vector<8x128xf32>
    %366 = vector.extract_strided_slice %351 {offsets = [0, 896], sizes = [8, 128], strides = [1, 1]} : vector<8x1280xf32> to vector<8x128xf32>
    %367 = arith.addf %365, %366 : vector<8x128xf32>
    %368 = vector.extract_strided_slice %351 {offsets = [0, 1024], sizes = [8, 128], strides = [1, 1]} : vector<8x1280xf32> to vector<8x128xf32>
    %369 = arith.addf %367, %368 : vector<8x128xf32>
    %370 = vector.extract_strided_slice %351 {offsets = [0, 1152], sizes = [8, 128], strides = [1, 1]} : vector<8x1280xf32> to vector<8x128xf32>
    %371 = arith.addf %369, %370 : vector<8x128xf32>
    %c10_i32 = arith.constant 10 : i32
    %c1280_i32_48 = arith.constant 1280 : i32
    %372 = arith.muli %c10_i32, %c1280_i32_48 : i32
    %373 = tpu.assume_multiple %372, 128 : i32
    %c0_49 = arith.constant 0 : index
    %374 = arith.index_cast %373 : i32 to index
    %375 = vector.load %arg1[%c0_49, %374] : memref<3x32000xf32, #tpu.memory_space<vmem>>, vector<1x1280xf32>
    %c1_50 = arith.constant 1 : index
    %376 = arith.index_cast %373 : i32 to index
    %377 = vector.load %arg1[%c1_50, %376] : memref<3x32000xf32, #tpu.memory_space<vmem>>, vector<1x1280xf32>
    %c2_51 = arith.constant 2 : index
    %378 = arith.index_cast %373 : i32 to index
    %379 = vector.load %arg1[%c2_51, %378] : memref<3x32000xf32, #tpu.memory_space<vmem>>, vector<1x1280xf32>
    %380 = vector.broadcast %0 : vector<8x1xf32> to vector<8x1280xf32>
    %381 = vector.broadcast %375 : vector<1x1280xf32> to vector<8x1280xf32>
    %382 = arith.mulf %380, %381 : vector<8x1280xf32>
    %383 = vector.broadcast %377 : vector<1x1280xf32> to vector<8x1280xf32>
    %384 = arith.addf %382, %383 : vector<8x1280xf32>
    %cst_52 = arith.constant 0.000000e+00 : f32
    %385 = vector.broadcast %cst_52 : f32 to vector<8x1280xf32>
    %386 = arith.maximumf %384, %385 : vector<8x1280xf32>
    %387 = vector.broadcast %379 : vector<1x1280xf32> to vector<8x1280xf32>
    %388 = arith.mulf %386, %387 : vector<8x1280xf32>
    %389 = vector.extract_strided_slice %388 {offsets = [0, 0], sizes = [8, 128], strides = [1, 1]} : vector<8x1280xf32> to vector<8x128xf32>
    %390 = arith.addf %371, %389 : vector<8x128xf32>
    %391 = vector.extract_strided_slice %388 {offsets = [0, 128], sizes = [8, 128], strides = [1, 1]} : vector<8x1280xf32> to vector<8x128xf32>
    %392 = arith.addf %390, %391 : vector<8x128xf32>
    %393 = vector.extract_strided_slice %388 {offsets = [0, 256], sizes = [8, 128], strides = [1, 1]} : vector<8x1280xf32> to vector<8x128xf32>
    %394 = arith.addf %392, %393 : vector<8x128xf32>
    %395 = vector.extract_strided_slice %388 {offsets = [0, 384], sizes = [8, 128], strides = [1, 1]} : vector<8x1280xf32> to vector<8x128xf32>
    %396 = arith.addf %394, %395 : vector<8x128xf32>
    %397 = vector.extract_strided_slice %388 {offsets = [0, 512], sizes = [8, 128], strides = [1, 1]} : vector<8x1280xf32> to vector<8x128xf32>
    %398 = arith.addf %396, %397 : vector<8x128xf32>
    %399 = vector.extract_strided_slice %388 {offsets = [0, 640], sizes = [8, 128], strides = [1, 1]} : vector<8x1280xf32> to vector<8x128xf32>
    %400 = arith.addf %398, %399 : vector<8x128xf32>
    %401 = vector.extract_strided_slice %388 {offsets = [0, 768], sizes = [8, 128], strides = [1, 1]} : vector<8x1280xf32> to vector<8x128xf32>
    %402 = arith.addf %400, %401 : vector<8x128xf32>
    %403 = vector.extract_strided_slice %388 {offsets = [0, 896], sizes = [8, 128], strides = [1, 1]} : vector<8x1280xf32> to vector<8x128xf32>
    %404 = arith.addf %402, %403 : vector<8x128xf32>
    %405 = vector.extract_strided_slice %388 {offsets = [0, 1024], sizes = [8, 128], strides = [1, 1]} : vector<8x1280xf32> to vector<8x128xf32>
    %406 = arith.addf %404, %405 : vector<8x128xf32>
    %407 = vector.extract_strided_slice %388 {offsets = [0, 1152], sizes = [8, 128], strides = [1, 1]} : vector<8x1280xf32> to vector<8x128xf32>
    %408 = arith.addf %406, %407 : vector<8x128xf32>
    %c11_i32 = arith.constant 11 : i32
    %c1280_i32_53 = arith.constant 1280 : i32
    %409 = arith.muli %c11_i32, %c1280_i32_53 : i32
    %410 = tpu.assume_multiple %409, 128 : i32
    %c0_54 = arith.constant 0 : index
    %411 = arith.index_cast %410 : i32 to index
    %412 = vector.load %arg1[%c0_54, %411] : memref<3x32000xf32, #tpu.memory_space<vmem>>, vector<1x1280xf32>
    %c1_55 = arith.constant 1 : index
    %413 = arith.index_cast %410 : i32 to index
    %414 = vector.load %arg1[%c1_55, %413] : memref<3x32000xf32, #tpu.memory_space<vmem>>, vector<1x1280xf32>
    %c2_56 = arith.constant 2 : index
    %415 = arith.index_cast %410 : i32 to index
    %416 = vector.load %arg1[%c2_56, %415] : memref<3x32000xf32, #tpu.memory_space<vmem>>, vector<1x1280xf32>
    %417 = vector.broadcast %0 : vector<8x1xf32> to vector<8x1280xf32>
    %418 = vector.broadcast %412 : vector<1x1280xf32> to vector<8x1280xf32>
    %419 = arith.mulf %417, %418 : vector<8x1280xf32>
    %420 = vector.broadcast %414 : vector<1x1280xf32> to vector<8x1280xf32>
    %421 = arith.addf %419, %420 : vector<8x1280xf32>
    %cst_57 = arith.constant 0.000000e+00 : f32
    %422 = vector.broadcast %cst_57 : f32 to vector<8x1280xf32>
    %423 = arith.maximumf %421, %422 : vector<8x1280xf32>
    %424 = vector.broadcast %416 : vector<1x1280xf32> to vector<8x1280xf32>
    %425 = arith.mulf %423, %424 : vector<8x1280xf32>
    %426 = vector.extract_strided_slice %425 {offsets = [0, 0], sizes = [8, 128], strides = [1, 1]} : vector<8x1280xf32> to vector<8x128xf32>
    %427 = arith.addf %408, %426 : vector<8x128xf32>
    %428 = vector.extract_strided_slice %425 {offsets = [0, 128], sizes = [8, 128], strides = [1, 1]} : vector<8x1280xf32> to vector<8x128xf32>
    %429 = arith.addf %427, %428 : vector<8x128xf32>
    %430 = vector.extract_strided_slice %425 {offsets = [0, 256], sizes = [8, 128], strides = [1, 1]} : vector<8x1280xf32> to vector<8x128xf32>
    %431 = arith.addf %429, %430 : vector<8x128xf32>
    %432 = vector.extract_strided_slice %425 {offsets = [0, 384], sizes = [8, 128], strides = [1, 1]} : vector<8x1280xf32> to vector<8x128xf32>
    %433 = arith.addf %431, %432 : vector<8x128xf32>
    %434 = vector.extract_strided_slice %425 {offsets = [0, 512], sizes = [8, 128], strides = [1, 1]} : vector<8x1280xf32> to vector<8x128xf32>
    %435 = arith.addf %433, %434 : vector<8x128xf32>
    %436 = vector.extract_strided_slice %425 {offsets = [0, 640], sizes = [8, 128], strides = [1, 1]} : vector<8x1280xf32> to vector<8x128xf32>
    %437 = arith.addf %435, %436 : vector<8x128xf32>
    %438 = vector.extract_strided_slice %425 {offsets = [0, 768], sizes = [8, 128], strides = [1, 1]} : vector<8x1280xf32> to vector<8x128xf32>
    %439 = arith.addf %437, %438 : vector<8x128xf32>
    %440 = vector.extract_strided_slice %425 {offsets = [0, 896], sizes = [8, 128], strides = [1, 1]} : vector<8x1280xf32> to vector<8x128xf32>
    %441 = arith.addf %439, %440 : vector<8x128xf32>
    %442 = vector.extract_strided_slice %425 {offsets = [0, 1024], sizes = [8, 128], strides = [1, 1]} : vector<8x1280xf32> to vector<8x128xf32>
    %443 = arith.addf %441, %442 : vector<8x128xf32>
    %444 = vector.extract_strided_slice %425 {offsets = [0, 1152], sizes = [8, 128], strides = [1, 1]} : vector<8x1280xf32> to vector<8x128xf32>
    %445 = arith.addf %443, %444 : vector<8x128xf32>
    %c12_i32 = arith.constant 12 : i32
    %c1280_i32_58 = arith.constant 1280 : i32
    %446 = arith.muli %c12_i32, %c1280_i32_58 : i32
    %447 = tpu.assume_multiple %446, 128 : i32
    %c0_59 = arith.constant 0 : index
    %448 = arith.index_cast %447 : i32 to index
    %449 = vector.load %arg1[%c0_59, %448] : memref<3x32000xf32, #tpu.memory_space<vmem>>, vector<1x1280xf32>
    %c1_60 = arith.constant 1 : index
    %450 = arith.index_cast %447 : i32 to index
    %451 = vector.load %arg1[%c1_60, %450] : memref<3x32000xf32, #tpu.memory_space<vmem>>, vector<1x1280xf32>
    %c2_61 = arith.constant 2 : index
    %452 = arith.index_cast %447 : i32 to index
    %453 = vector.load %arg1[%c2_61, %452] : memref<3x32000xf32, #tpu.memory_space<vmem>>, vector<1x1280xf32>
    %454 = vector.broadcast %0 : vector<8x1xf32> to vector<8x1280xf32>
    %455 = vector.broadcast %449 : vector<1x1280xf32> to vector<8x1280xf32>
    %456 = arith.mulf %454, %455 : vector<8x1280xf32>
    %457 = vector.broadcast %451 : vector<1x1280xf32> to vector<8x1280xf32>
    %458 = arith.addf %456, %457 : vector<8x1280xf32>
    %cst_62 = arith.constant 0.000000e+00 : f32
    %459 = vector.broadcast %cst_62 : f32 to vector<8x1280xf32>
    %460 = arith.maximumf %458, %459 : vector<8x1280xf32>
    %461 = vector.broadcast %453 : vector<1x1280xf32> to vector<8x1280xf32>
    %462 = arith.mulf %460, %461 : vector<8x1280xf32>
    %463 = vector.extract_strided_slice %462 {offsets = [0, 0], sizes = [8, 128], strides = [1, 1]} : vector<8x1280xf32> to vector<8x128xf32>
    %464 = arith.addf %445, %463 : vector<8x128xf32>
    %465 = vector.extract_strided_slice %462 {offsets = [0, 128], sizes = [8, 128], strides = [1, 1]} : vector<8x1280xf32> to vector<8x128xf32>
    %466 = arith.addf %464, %465 : vector<8x128xf32>
    %467 = vector.extract_strided_slice %462 {offsets = [0, 256], sizes = [8, 128], strides = [1, 1]} : vector<8x1280xf32> to vector<8x128xf32>
    %468 = arith.addf %466, %467 : vector<8x128xf32>
    %469 = vector.extract_strided_slice %462 {offsets = [0, 384], sizes = [8, 128], strides = [1, 1]} : vector<8x1280xf32> to vector<8x128xf32>
    %470 = arith.addf %468, %469 : vector<8x128xf32>
    %471 = vector.extract_strided_slice %462 {offsets = [0, 512], sizes = [8, 128], strides = [1, 1]} : vector<8x1280xf32> to vector<8x128xf32>
    %472 = arith.addf %470, %471 : vector<8x128xf32>
    %473 = vector.extract_strided_slice %462 {offsets = [0, 640], sizes = [8, 128], strides = [1, 1]} : vector<8x1280xf32> to vector<8x128xf32>
    %474 = arith.addf %472, %473 : vector<8x128xf32>
    %475 = vector.extract_strided_slice %462 {offsets = [0, 768], sizes = [8, 128], strides = [1, 1]} : vector<8x1280xf32> to vector<8x128xf32>
    %476 = arith.addf %474, %475 : vector<8x128xf32>
    %477 = vector.extract_strided_slice %462 {offsets = [0, 896], sizes = [8, 128], strides = [1, 1]} : vector<8x1280xf32> to vector<8x128xf32>
    %478 = arith.addf %476, %477 : vector<8x128xf32>
    %479 = vector.extract_strided_slice %462 {offsets = [0, 1024], sizes = [8, 128], strides = [1, 1]} : vector<8x1280xf32> to vector<8x128xf32>
    %480 = arith.addf %478, %479 : vector<8x128xf32>
    %481 = vector.extract_strided_slice %462 {offsets = [0, 1152], sizes = [8, 128], strides = [1, 1]} : vector<8x1280xf32> to vector<8x128xf32>
    %482 = arith.addf %480, %481 : vector<8x128xf32>
    %c13_i32 = arith.constant 13 : i32
    %c1280_i32_63 = arith.constant 1280 : i32
    %483 = arith.muli %c13_i32, %c1280_i32_63 : i32
    %484 = tpu.assume_multiple %483, 128 : i32
    %c0_64 = arith.constant 0 : index
    %485 = arith.index_cast %484 : i32 to index
    %486 = vector.load %arg1[%c0_64, %485] : memref<3x32000xf32, #tpu.memory_space<vmem>>, vector<1x1280xf32>
    %c1_65 = arith.constant 1 : index
    %487 = arith.index_cast %484 : i32 to index
    %488 = vector.load %arg1[%c1_65, %487] : memref<3x32000xf32, #tpu.memory_space<vmem>>, vector<1x1280xf32>
    %c2_66 = arith.constant 2 : index
    %489 = arith.index_cast %484 : i32 to index
    %490 = vector.load %arg1[%c2_66, %489] : memref<3x32000xf32, #tpu.memory_space<vmem>>, vector<1x1280xf32>
    %491 = vector.broadcast %0 : vector<8x1xf32> to vector<8x1280xf32>
    %492 = vector.broadcast %486 : vector<1x1280xf32> to vector<8x1280xf32>
    %493 = arith.mulf %491, %492 : vector<8x1280xf32>
    %494 = vector.broadcast %488 : vector<1x1280xf32> to vector<8x1280xf32>
    %495 = arith.addf %493, %494 : vector<8x1280xf32>
    %cst_67 = arith.constant 0.000000e+00 : f32
    %496 = vector.broadcast %cst_67 : f32 to vector<8x1280xf32>
    %497 = arith.maximumf %495, %496 : vector<8x1280xf32>
    %498 = vector.broadcast %490 : vector<1x1280xf32> to vector<8x1280xf32>
    %499 = arith.mulf %497, %498 : vector<8x1280xf32>
    %500 = vector.extract_strided_slice %499 {offsets = [0, 0], sizes = [8, 128], strides = [1, 1]} : vector<8x1280xf32> to vector<8x128xf32>
    %501 = arith.addf %482, %500 : vector<8x128xf32>
    %502 = vector.extract_strided_slice %499 {offsets = [0, 128], sizes = [8, 128], strides = [1, 1]} : vector<8x1280xf32> to vector<8x128xf32>
    %503 = arith.addf %501, %502 : vector<8x128xf32>
    %504 = vector.extract_strided_slice %499 {offsets = [0, 256], sizes = [8, 128], strides = [1, 1]} : vector<8x1280xf32> to vector<8x128xf32>
    %505 = arith.addf %503, %504 : vector<8x128xf32>
    %506 = vector.extract_strided_slice %499 {offsets = [0, 384], sizes = [8, 128], strides = [1, 1]} : vector<8x1280xf32> to vector<8x128xf32>
    %507 = arith.addf %505, %506 : vector<8x128xf32>
    %508 = vector.extract_strided_slice %499 {offsets = [0, 512], sizes = [8, 128], strides = [1, 1]} : vector<8x1280xf32> to vector<8x128xf32>
    %509 = arith.addf %507, %508 : vector<8x128xf32>
    %510 = vector.extract_strided_slice %499 {offsets = [0, 640], sizes = [8, 128], strides = [1, 1]} : vector<8x1280xf32> to vector<8x128xf32>
    %511 = arith.addf %509, %510 : vector<8x128xf32>
    %512 = vector.extract_strided_slice %499 {offsets = [0, 768], sizes = [8, 128], strides = [1, 1]} : vector<8x1280xf32> to vector<8x128xf32>
    %513 = arith.addf %511, %512 : vector<8x128xf32>
    %514 = vector.extract_strided_slice %499 {offsets = [0, 896], sizes = [8, 128], strides = [1, 1]} : vector<8x1280xf32> to vector<8x128xf32>
    %515 = arith.addf %513, %514 : vector<8x128xf32>
    %516 = vector.extract_strided_slice %499 {offsets = [0, 1024], sizes = [8, 128], strides = [1, 1]} : vector<8x1280xf32> to vector<8x128xf32>
    %517 = arith.addf %515, %516 : vector<8x128xf32>
    %518 = vector.extract_strided_slice %499 {offsets = [0, 1152], sizes = [8, 128], strides = [1, 1]} : vector<8x1280xf32> to vector<8x128xf32>
    %519 = arith.addf %517, %518 : vector<8x128xf32>
    %c14_i32 = arith.constant 14 : i32
    %c1280_i32_68 = arith.constant 1280 : i32
    %520 = arith.muli %c14_i32, %c1280_i32_68 : i32
    %521 = tpu.assume_multiple %520, 128 : i32
    %c0_69 = arith.constant 0 : index
    %522 = arith.index_cast %521 : i32 to index
    %523 = vector.load %arg1[%c0_69, %522] : memref<3x32000xf32, #tpu.memory_space<vmem>>, vector<1x1280xf32>
    %c1_70 = arith.constant 1 : index
    %524 = arith.index_cast %521 : i32 to index
    %525 = vector.load %arg1[%c1_70, %524] : memref<3x32000xf32, #tpu.memory_space<vmem>>, vector<1x1280xf32>
    %c2_71 = arith.constant 2 : index
    %526 = arith.index_cast %521 : i32 to index
    %527 = vector.load %arg1[%c2_71, %526] : memref<3x32000xf32, #tpu.memory_space<vmem>>, vector<1x1280xf32>
    %528 = vector.broadcast %0 : vector<8x1xf32> to vector<8x1280xf32>
    %529 = vector.broadcast %523 : vector<1x1280xf32> to vector<8x1280xf32>
    %530 = arith.mulf %528, %529 : vector<8x1280xf32>
    %531 = vector.broadcast %525 : vector<1x1280xf32> to vector<8x1280xf32>
    %532 = arith.addf %530, %531 : vector<8x1280xf32>
    %cst_72 = arith.constant 0.000000e+00 : f32
    %533 = vector.broadcast %cst_72 : f32 to vector<8x1280xf32>
    %534 = arith.maximumf %532, %533 : vector<8x1280xf32>
    %535 = vector.broadcast %527 : vector<1x1280xf32> to vector<8x1280xf32>
    %536 = arith.mulf %534, %535 : vector<8x1280xf32>
    %537 = vector.extract_strided_slice %536 {offsets = [0, 0], sizes = [8, 128], strides = [1, 1]} : vector<8x1280xf32> to vector<8x128xf32>
    %538 = arith.addf %519, %537 : vector<8x128xf32>
    %539 = vector.extract_strided_slice %536 {offsets = [0, 128], sizes = [8, 128], strides = [1, 1]} : vector<8x1280xf32> to vector<8x128xf32>
    %540 = arith.addf %538, %539 : vector<8x128xf32>
    %541 = vector.extract_strided_slice %536 {offsets = [0, 256], sizes = [8, 128], strides = [1, 1]} : vector<8x1280xf32> to vector<8x128xf32>
    %542 = arith.addf %540, %541 : vector<8x128xf32>
    %543 = vector.extract_strided_slice %536 {offsets = [0, 384], sizes = [8, 128], strides = [1, 1]} : vector<8x1280xf32> to vector<8x128xf32>
    %544 = arith.addf %542, %543 : vector<8x128xf32>
    %545 = vector.extract_strided_slice %536 {offsets = [0, 512], sizes = [8, 128], strides = [1, 1]} : vector<8x1280xf32> to vector<8x128xf32>
    %546 = arith.addf %544, %545 : vector<8x128xf32>
    %547 = vector.extract_strided_slice %536 {offsets = [0, 640], sizes = [8, 128], strides = [1, 1]} : vector<8x1280xf32> to vector<8x128xf32>
    %548 = arith.addf %546, %547 : vector<8x128xf32>
    %549 = vector.extract_strided_slice %536 {offsets = [0, 768], sizes = [8, 128], strides = [1, 1]} : vector<8x1280xf32> to vector<8x128xf32>
    %550 = arith.addf %548, %549 : vector<8x128xf32>
    %551 = vector.extract_strided_slice %536 {offsets = [0, 896], sizes = [8, 128], strides = [1, 1]} : vector<8x1280xf32> to vector<8x128xf32>
    %552 = arith.addf %550, %551 : vector<8x128xf32>
    %553 = vector.extract_strided_slice %536 {offsets = [0, 1024], sizes = [8, 128], strides = [1, 1]} : vector<8x1280xf32> to vector<8x128xf32>
    %554 = arith.addf %552, %553 : vector<8x128xf32>
    %555 = vector.extract_strided_slice %536 {offsets = [0, 1152], sizes = [8, 128], strides = [1, 1]} : vector<8x1280xf32> to vector<8x128xf32>
    %556 = arith.addf %554, %555 : vector<8x128xf32>
    %c15_i32 = arith.constant 15 : i32
    %c1280_i32_73 = arith.constant 1280 : i32
    %557 = arith.muli %c15_i32, %c1280_i32_73 : i32
    %558 = tpu.assume_multiple %557, 128 : i32
    %c0_74 = arith.constant 0 : index
    %559 = arith.index_cast %558 : i32 to index
    %560 = vector.load %arg1[%c0_74, %559] : memref<3x32000xf32, #tpu.memory_space<vmem>>, vector<1x1280xf32>
    %c1_75 = arith.constant 1 : index
    %561 = arith.index_cast %558 : i32 to index
    %562 = vector.load %arg1[%c1_75, %561] : memref<3x32000xf32, #tpu.memory_space<vmem>>, vector<1x1280xf32>
    %c2_76 = arith.constant 2 : index
    %563 = arith.index_cast %558 : i32 to index
    %564 = vector.load %arg1[%c2_76, %563] : memref<3x32000xf32, #tpu.memory_space<vmem>>, vector<1x1280xf32>
    %565 = vector.broadcast %0 : vector<8x1xf32> to vector<8x1280xf32>
    %566 = vector.broadcast %560 : vector<1x1280xf32> to vector<8x1280xf32>
    %567 = arith.mulf %565, %566 : vector<8x1280xf32>
    %568 = vector.broadcast %562 : vector<1x1280xf32> to vector<8x1280xf32>
    %569 = arith.addf %567, %568 : vector<8x1280xf32>
    %cst_77 = arith.constant 0.000000e+00 : f32
    %570 = vector.broadcast %cst_77 : f32 to vector<8x1280xf32>
    %571 = arith.maximumf %569, %570 : vector<8x1280xf32>
    %572 = vector.broadcast %564 : vector<1x1280xf32> to vector<8x1280xf32>
    %573 = arith.mulf %571, %572 : vector<8x1280xf32>
    %574 = vector.extract_strided_slice %573 {offsets = [0, 0], sizes = [8, 128], strides = [1, 1]} : vector<8x1280xf32> to vector<8x128xf32>
    %575 = arith.addf %556, %574 : vector<8x128xf32>
    %576 = vector.extract_strided_slice %573 {offsets = [0, 128], sizes = [8, 128], strides = [1, 1]} : vector<8x1280xf32> to vector<8x128xf32>
    %577 = arith.addf %575, %576 : vector<8x128xf32>
    %578 = vector.extract_strided_slice %573 {offsets = [0, 256], sizes = [8, 128], strides = [1, 1]} : vector<8x1280xf32> to vector<8x128xf32>
    %579 = arith.addf %577, %578 : vector<8x128xf32>
    %580 = vector.extract_strided_slice %573 {offsets = [0, 384], sizes = [8, 128], strides = [1, 1]} : vector<8x1280xf32> to vector<8x128xf32>
    %581 = arith.addf %579, %580 : vector<8x128xf32>
    %582 = vector.extract_strided_slice %573 {offsets = [0, 512], sizes = [8, 128], strides = [1, 1]} : vector<8x1280xf32> to vector<8x128xf32>
    %583 = arith.addf %581, %582 : vector<8x128xf32>
    %584 = vector.extract_strided_slice %573 {offsets = [0, 640], sizes = [8, 128], strides = [1, 1]} : vector<8x1280xf32> to vector<8x128xf32>
    %585 = arith.addf %583, %584 : vector<8x128xf32>
    %586 = vector.extract_strided_slice %573 {offsets = [0, 768], sizes = [8, 128], strides = [1, 1]} : vector<8x1280xf32> to vector<8x128xf32>
    %587 = arith.addf %585, %586 : vector<8x128xf32>
    %588 = vector.extract_strided_slice %573 {offsets = [0, 896], sizes = [8, 128], strides = [1, 1]} : vector<8x1280xf32> to vector<8x128xf32>
    %589 = arith.addf %587, %588 : vector<8x128xf32>
    %590 = vector.extract_strided_slice %573 {offsets = [0, 1024], sizes = [8, 128], strides = [1, 1]} : vector<8x1280xf32> to vector<8x128xf32>
    %591 = arith.addf %589, %590 : vector<8x128xf32>
    %592 = vector.extract_strided_slice %573 {offsets = [0, 1152], sizes = [8, 128], strides = [1, 1]} : vector<8x1280xf32> to vector<8x128xf32>
    %593 = arith.addf %591, %592 : vector<8x128xf32>
    %c16_i32 = arith.constant 16 : i32
    %c1280_i32_78 = arith.constant 1280 : i32
    %594 = arith.muli %c16_i32, %c1280_i32_78 : i32
    %595 = tpu.assume_multiple %594, 128 : i32
    %c0_79 = arith.constant 0 : index
    %596 = arith.index_cast %595 : i32 to index
    %597 = vector.load %arg1[%c0_79, %596] : memref<3x32000xf32, #tpu.memory_space<vmem>>, vector<1x1280xf32>
    %c1_80 = arith.constant 1 : index
    %598 = arith.index_cast %595 : i32 to index
    %599 = vector.load %arg1[%c1_80, %598] : memref<3x32000xf32, #tpu.memory_space<vmem>>, vector<1x1280xf32>
    %c2_81 = arith.constant 2 : index
    %600 = arith.index_cast %595 : i32 to index
    %601 = vector.load %arg1[%c2_81, %600] : memref<3x32000xf32, #tpu.memory_space<vmem>>, vector<1x1280xf32>
    %602 = vector.broadcast %0 : vector<8x1xf32> to vector<8x1280xf32>
    %603 = vector.broadcast %597 : vector<1x1280xf32> to vector<8x1280xf32>
    %604 = arith.mulf %602, %603 : vector<8x1280xf32>
    %605 = vector.broadcast %599 : vector<1x1280xf32> to vector<8x1280xf32>
    %606 = arith.addf %604, %605 : vector<8x1280xf32>
    %cst_82 = arith.constant 0.000000e+00 : f32
    %607 = vector.broadcast %cst_82 : f32 to vector<8x1280xf32>
    %608 = arith.maximumf %606, %607 : vector<8x1280xf32>
    %609 = vector.broadcast %601 : vector<1x1280xf32> to vector<8x1280xf32>
    %610 = arith.mulf %608, %609 : vector<8x1280xf32>
    %611 = vector.extract_strided_slice %610 {offsets = [0, 0], sizes = [8, 128], strides = [1, 1]} : vector<8x1280xf32> to vector<8x128xf32>
    %612 = arith.addf %593, %611 : vector<8x128xf32>
    %613 = vector.extract_strided_slice %610 {offsets = [0, 128], sizes = [8, 128], strides = [1, 1]} : vector<8x1280xf32> to vector<8x128xf32>
    %614 = arith.addf %612, %613 : vector<8x128xf32>
    %615 = vector.extract_strided_slice %610 {offsets = [0, 256], sizes = [8, 128], strides = [1, 1]} : vector<8x1280xf32> to vector<8x128xf32>
    %616 = arith.addf %614, %615 : vector<8x128xf32>
    %617 = vector.extract_strided_slice %610 {offsets = [0, 384], sizes = [8, 128], strides = [1, 1]} : vector<8x1280xf32> to vector<8x128xf32>
    %618 = arith.addf %616, %617 : vector<8x128xf32>
    %619 = vector.extract_strided_slice %610 {offsets = [0, 512], sizes = [8, 128], strides = [1, 1]} : vector<8x1280xf32> to vector<8x128xf32>
    %620 = arith.addf %618, %619 : vector<8x128xf32>
    %621 = vector.extract_strided_slice %610 {offsets = [0, 640], sizes = [8, 128], strides = [1, 1]} : vector<8x1280xf32> to vector<8x128xf32>
    %622 = arith.addf %620, %621 : vector<8x128xf32>
    %623 = vector.extract_strided_slice %610 {offsets = [0, 768], sizes = [8, 128], strides = [1, 1]} : vector<8x1280xf32> to vector<8x128xf32>
    %624 = arith.addf %622, %623 : vector<8x128xf32>
    %625 = vector.extract_strided_slice %610 {offsets = [0, 896], sizes = [8, 128], strides = [1, 1]} : vector<8x1280xf32> to vector<8x128xf32>
    %626 = arith.addf %624, %625 : vector<8x128xf32>
    %627 = vector.extract_strided_slice %610 {offsets = [0, 1024], sizes = [8, 128], strides = [1, 1]} : vector<8x1280xf32> to vector<8x128xf32>
    %628 = arith.addf %626, %627 : vector<8x128xf32>
    %629 = vector.extract_strided_slice %610 {offsets = [0, 1152], sizes = [8, 128], strides = [1, 1]} : vector<8x1280xf32> to vector<8x128xf32>
    %630 = arith.addf %628, %629 : vector<8x128xf32>
    %c17_i32 = arith.constant 17 : i32
    %c1280_i32_83 = arith.constant 1280 : i32
    %631 = arith.muli %c17_i32, %c1280_i32_83 : i32
    %632 = tpu.assume_multiple %631, 128 : i32
    %c0_84 = arith.constant 0 : index
    %633 = arith.index_cast %632 : i32 to index
    %634 = vector.load %arg1[%c0_84, %633] : memref<3x32000xf32, #tpu.memory_space<vmem>>, vector<1x1280xf32>
    %c1_85 = arith.constant 1 : index
    %635 = arith.index_cast %632 : i32 to index
    %636 = vector.load %arg1[%c1_85, %635] : memref<3x32000xf32, #tpu.memory_space<vmem>>, vector<1x1280xf32>
    %c2_86 = arith.constant 2 : index
    %637 = arith.index_cast %632 : i32 to index
    %638 = vector.load %arg1[%c2_86, %637] : memref<3x32000xf32, #tpu.memory_space<vmem>>, vector<1x1280xf32>
    %639 = vector.broadcast %0 : vector<8x1xf32> to vector<8x1280xf32>
    %640 = vector.broadcast %634 : vector<1x1280xf32> to vector<8x1280xf32>
    %641 = arith.mulf %639, %640 : vector<8x1280xf32>
    %642 = vector.broadcast %636 : vector<1x1280xf32> to vector<8x1280xf32>
    %643 = arith.addf %641, %642 : vector<8x1280xf32>
    %cst_87 = arith.constant 0.000000e+00 : f32
    %644 = vector.broadcast %cst_87 : f32 to vector<8x1280xf32>
    %645 = arith.maximumf %643, %644 : vector<8x1280xf32>
    %646 = vector.broadcast %638 : vector<1x1280xf32> to vector<8x1280xf32>
    %647 = arith.mulf %645, %646 : vector<8x1280xf32>
    %648 = vector.extract_strided_slice %647 {offsets = [0, 0], sizes = [8, 128], strides = [1, 1]} : vector<8x1280xf32> to vector<8x128xf32>
    %649 = arith.addf %630, %648 : vector<8x128xf32>
    %650 = vector.extract_strided_slice %647 {offsets = [0, 128], sizes = [8, 128], strides = [1, 1]} : vector<8x1280xf32> to vector<8x128xf32>
    %651 = arith.addf %649, %650 : vector<8x128xf32>
    %652 = vector.extract_strided_slice %647 {offsets = [0, 256], sizes = [8, 128], strides = [1, 1]} : vector<8x1280xf32> to vector<8x128xf32>
    %653 = arith.addf %651, %652 : vector<8x128xf32>
    %654 = vector.extract_strided_slice %647 {offsets = [0, 384], sizes = [8, 128], strides = [1, 1]} : vector<8x1280xf32> to vector<8x128xf32>
    %655 = arith.addf %653, %654 : vector<8x128xf32>
    %656 = vector.extract_strided_slice %647 {offsets = [0, 512], sizes = [8, 128], strides = [1, 1]} : vector<8x1280xf32> to vector<8x128xf32>
    %657 = arith.addf %655, %656 : vector<8x128xf32>
    %658 = vector.extract_strided_slice %647 {offsets = [0, 640], sizes = [8, 128], strides = [1, 1]} : vector<8x1280xf32> to vector<8x128xf32>
    %659 = arith.addf %657, %658 : vector<8x128xf32>
    %660 = vector.extract_strided_slice %647 {offsets = [0, 768], sizes = [8, 128], strides = [1, 1]} : vector<8x1280xf32> to vector<8x128xf32>
    %661 = arith.addf %659, %660 : vector<8x128xf32>
    %662 = vector.extract_strided_slice %647 {offsets = [0, 896], sizes = [8, 128], strides = [1, 1]} : vector<8x1280xf32> to vector<8x128xf32>
    %663 = arith.addf %661, %662 : vector<8x128xf32>
    %664 = vector.extract_strided_slice %647 {offsets = [0, 1024], sizes = [8, 128], strides = [1, 1]} : vector<8x1280xf32> to vector<8x128xf32>
    %665 = arith.addf %663, %664 : vector<8x128xf32>
    %666 = vector.extract_strided_slice %647 {offsets = [0, 1152], sizes = [8, 128], strides = [1, 1]} : vector<8x1280xf32> to vector<8x128xf32>
    %667 = arith.addf %665, %666 : vector<8x128xf32>
    %c18_i32 = arith.constant 18 : i32
    %c1280_i32_88 = arith.constant 1280 : i32
    %668 = arith.muli %c18_i32, %c1280_i32_88 : i32
    %669 = tpu.assume_multiple %668, 128 : i32
    %c0_89 = arith.constant 0 : index
    %670 = arith.index_cast %669 : i32 to index
    %671 = vector.load %arg1[%c0_89, %670] : memref<3x32000xf32, #tpu.memory_space<vmem>>, vector<1x1280xf32>
    %c1_90 = arith.constant 1 : index
    %672 = arith.index_cast %669 : i32 to index
    %673 = vector.load %arg1[%c1_90, %672] : memref<3x32000xf32, #tpu.memory_space<vmem>>, vector<1x1280xf32>
    %c2_91 = arith.constant 2 : index
    %674 = arith.index_cast %669 : i32 to index
    %675 = vector.load %arg1[%c2_91, %674] : memref<3x32000xf32, #tpu.memory_space<vmem>>, vector<1x1280xf32>
    %676 = vector.broadcast %0 : vector<8x1xf32> to vector<8x1280xf32>
    %677 = vector.broadcast %671 : vector<1x1280xf32> to vector<8x1280xf32>
    %678 = arith.mulf %676, %677 : vector<8x1280xf32>
    %679 = vector.broadcast %673 : vector<1x1280xf32> to vector<8x1280xf32>
    %680 = arith.addf %678, %679 : vector<8x1280xf32>
    %cst_92 = arith.constant 0.000000e+00 : f32
    %681 = vector.broadcast %cst_92 : f32 to vector<8x1280xf32>
    %682 = arith.maximumf %680, %681 : vector<8x1280xf32>
    %683 = vector.broadcast %675 : vector<1x1280xf32> to vector<8x1280xf32>
    %684 = arith.mulf %682, %683 : vector<8x1280xf32>
    %685 = vector.extract_strided_slice %684 {offsets = [0, 0], sizes = [8, 128], strides = [1, 1]} : vector<8x1280xf32> to vector<8x128xf32>
    %686 = arith.addf %667, %685 : vector<8x128xf32>
    %687 = vector.extract_strided_slice %684 {offsets = [0, 128], sizes = [8, 128], strides = [1, 1]} : vector<8x1280xf32> to vector<8x128xf32>
    %688 = arith.addf %686, %687 : vector<8x128xf32>
    %689 = vector.extract_strided_slice %684 {offsets = [0, 256], sizes = [8, 128], strides = [1, 1]} : vector<8x1280xf32> to vector<8x128xf32>
    %690 = arith.addf %688, %689 : vector<8x128xf32>
    %691 = vector.extract_strided_slice %684 {offsets = [0, 384], sizes = [8, 128], strides = [1, 1]} : vector<8x1280xf32> to vector<8x128xf32>
    %692 = arith.addf %690, %691 : vector<8x128xf32>
    %693 = vector.extract_strided_slice %684 {offsets = [0, 512], sizes = [8, 128], strides = [1, 1]} : vector<8x1280xf32> to vector<8x128xf32>
    %694 = arith.addf %692, %693 : vector<8x128xf32>
    %695 = vector.extract_strided_slice %684 {offsets = [0, 640], sizes = [8, 128], strides = [1, 1]} : vector<8x1280xf32> to vector<8x128xf32>
    %696 = arith.addf %694, %695 : vector<8x128xf32>
    %697 = vector.extract_strided_slice %684 {offsets = [0, 768], sizes = [8, 128], strides = [1, 1]} : vector<8x1280xf32> to vector<8x128xf32>
    %698 = arith.addf %696, %697 : vector<8x128xf32>
    %699 = vector.extract_strided_slice %684 {offsets = [0, 896], sizes = [8, 128], strides = [1, 1]} : vector<8x1280xf32> to vector<8x128xf32>
    %700 = arith.addf %698, %699 : vector<8x128xf32>
    %701 = vector.extract_strided_slice %684 {offsets = [0, 1024], sizes = [8, 128], strides = [1, 1]} : vector<8x1280xf32> to vector<8x128xf32>
    %702 = arith.addf %700, %701 : vector<8x128xf32>
    %703 = vector.extract_strided_slice %684 {offsets = [0, 1152], sizes = [8, 128], strides = [1, 1]} : vector<8x1280xf32> to vector<8x128xf32>
    %704 = arith.addf %702, %703 : vector<8x128xf32>
    %c19_i32 = arith.constant 19 : i32
    %c1280_i32_93 = arith.constant 1280 : i32
    %705 = arith.muli %c19_i32, %c1280_i32_93 : i32
    %706 = tpu.assume_multiple %705, 128 : i32
    %c0_94 = arith.constant 0 : index
    %707 = arith.index_cast %706 : i32 to index
    %708 = vector.load %arg1[%c0_94, %707] : memref<3x32000xf32, #tpu.memory_space<vmem>>, vector<1x1280xf32>
    %c1_95 = arith.constant 1 : index
    %709 = arith.index_cast %706 : i32 to index
    %710 = vector.load %arg1[%c1_95, %709] : memref<3x32000xf32, #tpu.memory_space<vmem>>, vector<1x1280xf32>
    %c2_96 = arith.constant 2 : index
    %711 = arith.index_cast %706 : i32 to index
    %712 = vector.load %arg1[%c2_96, %711] : memref<3x32000xf32, #tpu.memory_space<vmem>>, vector<1x1280xf32>
    %713 = vector.broadcast %0 : vector<8x1xf32> to vector<8x1280xf32>
    %714 = vector.broadcast %708 : vector<1x1280xf32> to vector<8x1280xf32>
    %715 = arith.mulf %713, %714 : vector<8x1280xf32>
    %716 = vector.broadcast %710 : vector<1x1280xf32> to vector<8x1280xf32>
    %717 = arith.addf %715, %716 : vector<8x1280xf32>
    %cst_97 = arith.constant 0.000000e+00 : f32
    %718 = vector.broadcast %cst_97 : f32 to vector<8x1280xf32>
    %719 = arith.maximumf %717, %718 : vector<8x1280xf32>
    %720 = vector.broadcast %712 : vector<1x1280xf32> to vector<8x1280xf32>
    %721 = arith.mulf %719, %720 : vector<8x1280xf32>
    %722 = vector.extract_strided_slice %721 {offsets = [0, 0], sizes = [8, 128], strides = [1, 1]} : vector<8x1280xf32> to vector<8x128xf32>
    %723 = arith.addf %704, %722 : vector<8x128xf32>
    %724 = vector.extract_strided_slice %721 {offsets = [0, 128], sizes = [8, 128], strides = [1, 1]} : vector<8x1280xf32> to vector<8x128xf32>
    %725 = arith.addf %723, %724 : vector<8x128xf32>
    %726 = vector.extract_strided_slice %721 {offsets = [0, 256], sizes = [8, 128], strides = [1, 1]} : vector<8x1280xf32> to vector<8x128xf32>
    %727 = arith.addf %725, %726 : vector<8x128xf32>
    %728 = vector.extract_strided_slice %721 {offsets = [0, 384], sizes = [8, 128], strides = [1, 1]} : vector<8x1280xf32> to vector<8x128xf32>
    %729 = arith.addf %727, %728 : vector<8x128xf32>
    %730 = vector.extract_strided_slice %721 {offsets = [0, 512], sizes = [8, 128], strides = [1, 1]} : vector<8x1280xf32> to vector<8x128xf32>
    %731 = arith.addf %729, %730 : vector<8x128xf32>
    %732 = vector.extract_strided_slice %721 {offsets = [0, 640], sizes = [8, 128], strides = [1, 1]} : vector<8x1280xf32> to vector<8x128xf32>
    %733 = arith.addf %731, %732 : vector<8x128xf32>
    %734 = vector.extract_strided_slice %721 {offsets = [0, 768], sizes = [8, 128], strides = [1, 1]} : vector<8x1280xf32> to vector<8x128xf32>
    %735 = arith.addf %733, %734 : vector<8x128xf32>
    %736 = vector.extract_strided_slice %721 {offsets = [0, 896], sizes = [8, 128], strides = [1, 1]} : vector<8x1280xf32> to vector<8x128xf32>
    %737 = arith.addf %735, %736 : vector<8x128xf32>
    %738 = vector.extract_strided_slice %721 {offsets = [0, 1024], sizes = [8, 128], strides = [1, 1]} : vector<8x1280xf32> to vector<8x128xf32>
    %739 = arith.addf %737, %738 : vector<8x128xf32>
    %740 = vector.extract_strided_slice %721 {offsets = [0, 1152], sizes = [8, 128], strides = [1, 1]} : vector<8x1280xf32> to vector<8x128xf32>
    %741 = arith.addf %739, %740 : vector<8x128xf32>
    %c20_i32 = arith.constant 20 : i32
    %c1280_i32_98 = arith.constant 1280 : i32
    %742 = arith.muli %c20_i32, %c1280_i32_98 : i32
    %743 = tpu.assume_multiple %742, 128 : i32
    %c0_99 = arith.constant 0 : index
    %744 = arith.index_cast %743 : i32 to index
    %745 = vector.load %arg1[%c0_99, %744] : memref<3x32000xf32, #tpu.memory_space<vmem>>, vector<1x1280xf32>
    %c1_100 = arith.constant 1 : index
    %746 = arith.index_cast %743 : i32 to index
    %747 = vector.load %arg1[%c1_100, %746] : memref<3x32000xf32, #tpu.memory_space<vmem>>, vector<1x1280xf32>
    %c2_101 = arith.constant 2 : index
    %748 = arith.index_cast %743 : i32 to index
    %749 = vector.load %arg1[%c2_101, %748] : memref<3x32000xf32, #tpu.memory_space<vmem>>, vector<1x1280xf32>
    %750 = vector.broadcast %0 : vector<8x1xf32> to vector<8x1280xf32>
    %751 = vector.broadcast %745 : vector<1x1280xf32> to vector<8x1280xf32>
    %752 = arith.mulf %750, %751 : vector<8x1280xf32>
    %753 = vector.broadcast %747 : vector<1x1280xf32> to vector<8x1280xf32>
    %754 = arith.addf %752, %753 : vector<8x1280xf32>
    %cst_102 = arith.constant 0.000000e+00 : f32
    %755 = vector.broadcast %cst_102 : f32 to vector<8x1280xf32>
    %756 = arith.maximumf %754, %755 : vector<8x1280xf32>
    %757 = vector.broadcast %749 : vector<1x1280xf32> to vector<8x1280xf32>
    %758 = arith.mulf %756, %757 : vector<8x1280xf32>
    %759 = vector.extract_strided_slice %758 {offsets = [0, 0], sizes = [8, 128], strides = [1, 1]} : vector<8x1280xf32> to vector<8x128xf32>
    %760 = arith.addf %741, %759 : vector<8x128xf32>
    %761 = vector.extract_strided_slice %758 {offsets = [0, 128], sizes = [8, 128], strides = [1, 1]} : vector<8x1280xf32> to vector<8x128xf32>
    %762 = arith.addf %760, %761 : vector<8x128xf32>
    %763 = vector.extract_strided_slice %758 {offsets = [0, 256], sizes = [8, 128], strides = [1, 1]} : vector<8x1280xf32> to vector<8x128xf32>
    %764 = arith.addf %762, %763 : vector<8x128xf32>
    %765 = vector.extract_strided_slice %758 {offsets = [0, 384], sizes = [8, 128], strides = [1, 1]} : vector<8x1280xf32> to vector<8x128xf32>
    %766 = arith.addf %764, %765 : vector<8x128xf32>
    %767 = vector.extract_strided_slice %758 {offsets = [0, 512], sizes = [8, 128], strides = [1, 1]} : vector<8x1280xf32> to vector<8x128xf32>
    %768 = arith.addf %766, %767 : vector<8x128xf32>
    %769 = vector.extract_strided_slice %758 {offsets = [0, 640], sizes = [8, 128], strides = [1, 1]} : vector<8x1280xf32> to vector<8x128xf32>
    %770 = arith.addf %768, %769 : vector<8x128xf32>
    %771 = vector.extract_strided_slice %758 {offsets = [0, 768], sizes = [8, 128], strides = [1, 1]} : vector<8x1280xf32> to vector<8x128xf32>
    %772 = arith.addf %770, %771 : vector<8x128xf32>
    %773 = vector.extract_strided_slice %758 {offsets = [0, 896], sizes = [8, 128], strides = [1, 1]} : vector<8x1280xf32> to vector<8x128xf32>
    %774 = arith.addf %772, %773 : vector<8x128xf32>
    %775 = vector.extract_strided_slice %758 {offsets = [0, 1024], sizes = [8, 128], strides = [1, 1]} : vector<8x1280xf32> to vector<8x128xf32>
    %776 = arith.addf %774, %775 : vector<8x128xf32>
    %777 = vector.extract_strided_slice %758 {offsets = [0, 1152], sizes = [8, 128], strides = [1, 1]} : vector<8x1280xf32> to vector<8x128xf32>
    %778 = arith.addf %776, %777 : vector<8x128xf32>
    %c21_i32 = arith.constant 21 : i32
    %c1280_i32_103 = arith.constant 1280 : i32
    %779 = arith.muli %c21_i32, %c1280_i32_103 : i32
    %780 = tpu.assume_multiple %779, 128 : i32
    %c0_104 = arith.constant 0 : index
    %781 = arith.index_cast %780 : i32 to index
    %782 = vector.load %arg1[%c0_104, %781] : memref<3x32000xf32, #tpu.memory_space<vmem>>, vector<1x1280xf32>
    %c1_105 = arith.constant 1 : index
    %783 = arith.index_cast %780 : i32 to index
    %784 = vector.load %arg1[%c1_105, %783] : memref<3x32000xf32, #tpu.memory_space<vmem>>, vector<1x1280xf32>
    %c2_106 = arith.constant 2 : index
    %785 = arith.index_cast %780 : i32 to index
    %786 = vector.load %arg1[%c2_106, %785] : memref<3x32000xf32, #tpu.memory_space<vmem>>, vector<1x1280xf32>
    %787 = vector.broadcast %0 : vector<8x1xf32> to vector<8x1280xf32>
    %788 = vector.broadcast %782 : vector<1x1280xf32> to vector<8x1280xf32>
    %789 = arith.mulf %787, %788 : vector<8x1280xf32>
    %790 = vector.broadcast %784 : vector<1x1280xf32> to vector<8x1280xf32>
    %791 = arith.addf %789, %790 : vector<8x1280xf32>
    %cst_107 = arith.constant 0.000000e+00 : f32
    %792 = vector.broadcast %cst_107 : f32 to vector<8x1280xf32>
    %793 = arith.maximumf %791, %792 : vector<8x1280xf32>
    %794 = vector.broadcast %786 : vector<1x1280xf32> to vector<8x1280xf32>
    %795 = arith.mulf %793, %794 : vector<8x1280xf32>
    %796 = vector.extract_strided_slice %795 {offsets = [0, 0], sizes = [8, 128], strides = [1, 1]} : vector<8x1280xf32> to vector<8x128xf32>
    %797 = arith.addf %778, %796 : vector<8x128xf32>
    %798 = vector.extract_strided_slice %795 {offsets = [0, 128], sizes = [8, 128], strides = [1, 1]} : vector<8x1280xf32> to vector<8x128xf32>
    %799 = arith.addf %797, %798 : vector<8x128xf32>
    %800 = vector.extract_strided_slice %795 {offsets = [0, 256], sizes = [8, 128], strides = [1, 1]} : vector<8x1280xf32> to vector<8x128xf32>
    %801 = arith.addf %799, %800 : vector<8x128xf32>
    %802 = vector.extract_strided_slice %795 {offsets = [0, 384], sizes = [8, 128], strides = [1, 1]} : vector<8x1280xf32> to vector<8x128xf32>
    %803 = arith.addf %801, %802 : vector<8x128xf32>
    %804 = vector.extract_strided_slice %795 {offsets = [0, 512], sizes = [8, 128], strides = [1, 1]} : vector<8x1280xf32> to vector<8x128xf32>
    %805 = arith.addf %803, %804 : vector<8x128xf32>
    %806 = vector.extract_strided_slice %795 {offsets = [0, 640], sizes = [8, 128], strides = [1, 1]} : vector<8x1280xf32> to vector<8x128xf32>
    %807 = arith.addf %805, %806 : vector<8x128xf32>
    %808 = vector.extract_strided_slice %795 {offsets = [0, 768], sizes = [8, 128], strides = [1, 1]} : vector<8x1280xf32> to vector<8x128xf32>
    %809 = arith.addf %807, %808 : vector<8x128xf32>
    %810 = vector.extract_strided_slice %795 {offsets = [0, 896], sizes = [8, 128], strides = [1, 1]} : vector<8x1280xf32> to vector<8x128xf32>
    %811 = arith.addf %809, %810 : vector<8x128xf32>
    %812 = vector.extract_strided_slice %795 {offsets = [0, 1024], sizes = [8, 128], strides = [1, 1]} : vector<8x1280xf32> to vector<8x128xf32>
    %813 = arith.addf %811, %812 : vector<8x128xf32>
    %814 = vector.extract_strided_slice %795 {offsets = [0, 1152], sizes = [8, 128], strides = [1, 1]} : vector<8x1280xf32> to vector<8x128xf32>
    %815 = arith.addf %813, %814 : vector<8x128xf32>
    %c22_i32 = arith.constant 22 : i32
    %c1280_i32_108 = arith.constant 1280 : i32
    %816 = arith.muli %c22_i32, %c1280_i32_108 : i32
    %817 = tpu.assume_multiple %816, 128 : i32
    %c0_109 = arith.constant 0 : index
    %818 = arith.index_cast %817 : i32 to index
    %819 = vector.load %arg1[%c0_109, %818] : memref<3x32000xf32, #tpu.memory_space<vmem>>, vector<1x1280xf32>
    %c1_110 = arith.constant 1 : index
    %820 = arith.index_cast %817 : i32 to index
    %821 = vector.load %arg1[%c1_110, %820] : memref<3x32000xf32, #tpu.memory_space<vmem>>, vector<1x1280xf32>
    %c2_111 = arith.constant 2 : index
    %822 = arith.index_cast %817 : i32 to index
    %823 = vector.load %arg1[%c2_111, %822] : memref<3x32000xf32, #tpu.memory_space<vmem>>, vector<1x1280xf32>
    %824 = vector.broadcast %0 : vector<8x1xf32> to vector<8x1280xf32>
    %825 = vector.broadcast %819 : vector<1x1280xf32> to vector<8x1280xf32>
    %826 = arith.mulf %824, %825 : vector<8x1280xf32>
    %827 = vector.broadcast %821 : vector<1x1280xf32> to vector<8x1280xf32>
    %828 = arith.addf %826, %827 : vector<8x1280xf32>
    %cst_112 = arith.constant 0.000000e+00 : f32
    %829 = vector.broadcast %cst_112 : f32 to vector<8x1280xf32>
    %830 = arith.maximumf %828, %829 : vector<8x1280xf32>
    %831 = vector.broadcast %823 : vector<1x1280xf32> to vector<8x1280xf32>
    %832 = arith.mulf %830, %831 : vector<8x1280xf32>
    %833 = vector.extract_strided_slice %832 {offsets = [0, 0], sizes = [8, 128], strides = [1, 1]} : vector<8x1280xf32> to vector<8x128xf32>
    %834 = arith.addf %815, %833 : vector<8x128xf32>
    %835 = vector.extract_strided_slice %832 {offsets = [0, 128], sizes = [8, 128], strides = [1, 1]} : vector<8x1280xf32> to vector<8x128xf32>
    %836 = arith.addf %834, %835 : vector<8x128xf32>
    %837 = vector.extract_strided_slice %832 {offsets = [0, 256], sizes = [8, 128], strides = [1, 1]} : vector<8x1280xf32> to vector<8x128xf32>
    %838 = arith.addf %836, %837 : vector<8x128xf32>
    %839 = vector.extract_strided_slice %832 {offsets = [0, 384], sizes = [8, 128], strides = [1, 1]} : vector<8x1280xf32> to vector<8x128xf32>
    %840 = arith.addf %838, %839 : vector<8x128xf32>
    %841 = vector.extract_strided_slice %832 {offsets = [0, 512], sizes = [8, 128], strides = [1, 1]} : vector<8x1280xf32> to vector<8x128xf32>
    %842 = arith.addf %840, %841 : vector<8x128xf32>
    %843 = vector.extract_strided_slice %832 {offsets = [0, 640], sizes = [8, 128], strides = [1, 1]} : vector<8x1280xf32> to vector<8x128xf32>
    %844 = arith.addf %842, %843 : vector<8x128xf32>
    %845 = vector.extract_strided_slice %832 {offsets = [0, 768], sizes = [8, 128], strides = [1, 1]} : vector<8x1280xf32> to vector<8x128xf32>
    %846 = arith.addf %844, %845 : vector<8x128xf32>
    %847 = vector.extract_strided_slice %832 {offsets = [0, 896], sizes = [8, 128], strides = [1, 1]} : vector<8x1280xf32> to vector<8x128xf32>
    %848 = arith.addf %846, %847 : vector<8x128xf32>
    %849 = vector.extract_strided_slice %832 {offsets = [0, 1024], sizes = [8, 128], strides = [1, 1]} : vector<8x1280xf32> to vector<8x128xf32>
    %850 = arith.addf %848, %849 : vector<8x128xf32>
    %851 = vector.extract_strided_slice %832 {offsets = [0, 1152], sizes = [8, 128], strides = [1, 1]} : vector<8x1280xf32> to vector<8x128xf32>
    %852 = arith.addf %850, %851 : vector<8x128xf32>
    %c23_i32 = arith.constant 23 : i32
    %c1280_i32_113 = arith.constant 1280 : i32
    %853 = arith.muli %c23_i32, %c1280_i32_113 : i32
    %854 = tpu.assume_multiple %853, 128 : i32
    %c0_114 = arith.constant 0 : index
    %855 = arith.index_cast %854 : i32 to index
    %856 = vector.load %arg1[%c0_114, %855] : memref<3x32000xf32, #tpu.memory_space<vmem>>, vector<1x1280xf32>
    %c1_115 = arith.constant 1 : index
    %857 = arith.index_cast %854 : i32 to index
    %858 = vector.load %arg1[%c1_115, %857] : memref<3x32000xf32, #tpu.memory_space<vmem>>, vector<1x1280xf32>
    %c2_116 = arith.constant 2 : index
    %859 = arith.index_cast %854 : i32 to index
    %860 = vector.load %arg1[%c2_116, %859] : memref<3x32000xf32, #tpu.memory_space<vmem>>, vector<1x1280xf32>
    %861 = vector.broadcast %0 : vector<8x1xf32> to vector<8x1280xf32>
    %862 = vector.broadcast %856 : vector<1x1280xf32> to vector<8x1280xf32>
    %863 = arith.mulf %861, %862 : vector<8x1280xf32>
    %864 = vector.broadcast %858 : vector<1x1280xf32> to vector<8x1280xf32>
    %865 = arith.addf %863, %864 : vector<8x1280xf32>
    %cst_117 = arith.constant 0.000000e+00 : f32
    %866 = vector.broadcast %cst_117 : f32 to vector<8x1280xf32>
    %867 = arith.maximumf %865, %866 : vector<8x1280xf32>
    %868 = vector.broadcast %860 : vector<1x1280xf32> to vector<8x1280xf32>
    %869 = arith.mulf %867, %868 : vector<8x1280xf32>
    %870 = vector.extract_strided_slice %869 {offsets = [0, 0], sizes = [8, 128], strides = [1, 1]} : vector<8x1280xf32> to vector<8x128xf32>
    %871 = arith.addf %852, %870 : vector<8x128xf32>
    %872 = vector.extract_strided_slice %869 {offsets = [0, 128], sizes = [8, 128], strides = [1, 1]} : vector<8x1280xf32> to vector<8x128xf32>
    %873 = arith.addf %871, %872 : vector<8x128xf32>
    %874 = vector.extract_strided_slice %869 {offsets = [0, 256], sizes = [8, 128], strides = [1, 1]} : vector<8x1280xf32> to vector<8x128xf32>
    %875 = arith.addf %873, %874 : vector<8x128xf32>
    %876 = vector.extract_strided_slice %869 {offsets = [0, 384], sizes = [8, 128], strides = [1, 1]} : vector<8x1280xf32> to vector<8x128xf32>
    %877 = arith.addf %875, %876 : vector<8x128xf32>
    %878 = vector.extract_strided_slice %869 {offsets = [0, 512], sizes = [8, 128], strides = [1, 1]} : vector<8x1280xf32> to vector<8x128xf32>
    %879 = arith.addf %877, %878 : vector<8x128xf32>
    %880 = vector.extract_strided_slice %869 {offsets = [0, 640], sizes = [8, 128], strides = [1, 1]} : vector<8x1280xf32> to vector<8x128xf32>
    %881 = arith.addf %879, %880 : vector<8x128xf32>
    %882 = vector.extract_strided_slice %869 {offsets = [0, 768], sizes = [8, 128], strides = [1, 1]} : vector<8x1280xf32> to vector<8x128xf32>
    %883 = arith.addf %881, %882 : vector<8x128xf32>
    %884 = vector.extract_strided_slice %869 {offsets = [0, 896], sizes = [8, 128], strides = [1, 1]} : vector<8x1280xf32> to vector<8x128xf32>
    %885 = arith.addf %883, %884 : vector<8x128xf32>
    %886 = vector.extract_strided_slice %869 {offsets = [0, 1024], sizes = [8, 128], strides = [1, 1]} : vector<8x1280xf32> to vector<8x128xf32>
    %887 = arith.addf %885, %886 : vector<8x128xf32>
    %888 = vector.extract_strided_slice %869 {offsets = [0, 1152], sizes = [8, 128], strides = [1, 1]} : vector<8x1280xf32> to vector<8x128xf32>
    %889 = arith.addf %887, %888 : vector<8x128xf32>
    %c24_i32 = arith.constant 24 : i32
    %c1280_i32_118 = arith.constant 1280 : i32
    %890 = arith.muli %c24_i32, %c1280_i32_118 : i32
    %891 = tpu.assume_multiple %890, 128 : i32
    %c0_119 = arith.constant 0 : index
    %892 = arith.index_cast %891 : i32 to index
    %893 = vector.load %arg1[%c0_119, %892] : memref<3x32000xf32, #tpu.memory_space<vmem>>, vector<1x1280xf32>
    %c1_120 = arith.constant 1 : index
    %894 = arith.index_cast %891 : i32 to index
    %895 = vector.load %arg1[%c1_120, %894] : memref<3x32000xf32, #tpu.memory_space<vmem>>, vector<1x1280xf32>
    %c2_121 = arith.constant 2 : index
    %896 = arith.index_cast %891 : i32 to index
    %897 = vector.load %arg1[%c2_121, %896] : memref<3x32000xf32, #tpu.memory_space<vmem>>, vector<1x1280xf32>
    %898 = vector.broadcast %0 : vector<8x1xf32> to vector<8x1280xf32>
    %899 = vector.broadcast %893 : vector<1x1280xf32> to vector<8x1280xf32>
    %900 = arith.mulf %898, %899 : vector<8x1280xf32>
    %901 = vector.broadcast %895 : vector<1x1280xf32> to vector<8x1280xf32>
    %902 = arith.addf %900, %901 : vector<8x1280xf32>
    %cst_122 = arith.constant 0.000000e+00 : f32
    %903 = vector.broadcast %cst_122 : f32 to vector<8x1280xf32>
    %904 = arith.maximumf %902, %903 : vector<8x1280xf32>
    %905 = vector.broadcast %897 : vector<1x1280xf32> to vector<8x1280xf32>
    %906 = arith.mulf %904, %905 : vector<8x1280xf32>
    %907 = vector.extract_strided_slice %906 {offsets = [0, 0], sizes = [8, 128], strides = [1, 1]} : vector<8x1280xf32> to vector<8x128xf32>
    %908 = arith.addf %889, %907 : vector<8x128xf32>
    %909 = vector.extract_strided_slice %906 {offsets = [0, 128], sizes = [8, 128], strides = [1, 1]} : vector<8x1280xf32> to vector<8x128xf32>
    %910 = arith.addf %908, %909 : vector<8x128xf32>
    %911 = vector.extract_strided_slice %906 {offsets = [0, 256], sizes = [8, 128], strides = [1, 1]} : vector<8x1280xf32> to vector<8x128xf32>
    %912 = arith.addf %910, %911 : vector<8x128xf32>
    %913 = vector.extract_strided_slice %906 {offsets = [0, 384], sizes = [8, 128], strides = [1, 1]} : vector<8x1280xf32> to vector<8x128xf32>
    %914 = arith.addf %912, %913 : vector<8x128xf32>
    %915 = vector.extract_strided_slice %906 {offsets = [0, 512], sizes = [8, 128], strides = [1, 1]} : vector<8x1280xf32> to vector<8x128xf32>
    %916 = arith.addf %914, %915 : vector<8x128xf32>
    %917 = vector.extract_strided_slice %906 {offsets = [0, 640], sizes = [8, 128], strides = [1, 1]} : vector<8x1280xf32> to vector<8x128xf32>
    %918 = arith.addf %916, %917 : vector<8x128xf32>
    %919 = vector.extract_strided_slice %906 {offsets = [0, 768], sizes = [8, 128], strides = [1, 1]} : vector<8x1280xf32> to vector<8x128xf32>
    %920 = arith.addf %918, %919 : vector<8x128xf32>
    %921 = vector.extract_strided_slice %906 {offsets = [0, 896], sizes = [8, 128], strides = [1, 1]} : vector<8x1280xf32> to vector<8x128xf32>
    %922 = arith.addf %920, %921 : vector<8x128xf32>
    %923 = vector.extract_strided_slice %906 {offsets = [0, 1024], sizes = [8, 128], strides = [1, 1]} : vector<8x1280xf32> to vector<8x128xf32>
    %924 = arith.addf %922, %923 : vector<8x128xf32>
    %925 = vector.extract_strided_slice %906 {offsets = [0, 1152], sizes = [8, 128], strides = [1, 1]} : vector<8x1280xf32> to vector<8x128xf32>
    %926 = arith.addf %924, %925 : vector<8x128xf32>
    %c25_i32 = arith.constant 25 : i32
    %cst_123 = arith.constant dense<0.000000e+00> : vector<8xf32>
    %927 = vector.multi_reduction <add>, %926, %cst_123 [1] : vector<8x128xf32> to vector<8xf32>
    %928 = vector.shape_cast %927 : vector<8xf32> to vector<8x1xf32>
    %c0_124 = arith.constant 0 : index
    %c0_125 = arith.constant 0 : index
    %929 = vector.load %arg2[%c0_124, %c0_125] : memref<1x1xf32, #tpu.memory_space<vmem>>, vector<1x1xf32>
    %930 = vector.broadcast %929 : vector<1x1xf32> to vector<8x1xf32>
    %931 = arith.addf %928, %930 : vector<8x1xf32>
    %c0_126 = arith.constant 0 : index
    %c0_127 = arith.constant 0 : index
    %932 = vector.load %arg3[%c0_126, %c0_127] : memref<8x1xf32, #tpu.memory_space<vmem>>, vector<8x1xf32>
    tpu.vector_store %arg3[%c0_126, %c0_127], %931 {strides = array<i32>} : memref<8x1xf32, #tpu.memory_space<vmem>>, vector<8x1xf32>,
    return
  }
}

</mosaic_0001>

<llo_original>
// kernel: tpu_custom_call.1
$region0: #{tpu_custom_call.1}
  #allocation0 [shape = 'u32[]', space=smem, size = 0x4, offset = 0x4, fixed_abs, tag = 'smem constant byte address 0x4 - core index']
  #allocation1 [shape = 'u32[144,128]{1,0:T(1,128)}', space=vmem, size = 0x12000, scoped, tag = 'internal scratch']
  #allocation2 [shape = 'f32[1,1]{1,0:T(1,128)S(1)}', space=vmem, size = 0x200, scoped, tag = 'scoped memory for tpu_custom_call.1']
  %s0 = inlined_call_operand.vmem [shape: f32[8,1], index: 0, kind: input, shape index: {}]
  %s1 = inlined_call_operand.hbm [shape: f32[3,32000], index: 1, kind: input, shape index: {}]
  %s2 = inlined_call_operand.<no memory space> [shape: f32[1,1], index: 2, kind: input, shape index: {}]
  %s3 = inlined_call_operand.vmem [shape: f32[8,1], index: 3, kind: output, shape index: {}]
  %s4 = sld [smem:[#allocation0]]
  $region26: #{tpu_custom_call.1} parent=0
    _
  %s6 = ssub.s32 1, %s4
  %s7 = scalar_select 0, %s6, %s4
  %v8 = vstv %s2
  %9 = vst [vmem:[#allocation2] sm:$0x1] %v8
  $region1: #{tpu_custom_call.1} parent=0
    #allocation3 [shape = 'u8[512000]{0}', space=vmem, size = 0x7d000, scoped, tag = 'input window, operand 1, single buffered']
    #allocation4 [shape = 's32[1]{0}', space=sflag, size = 0x4, scoped, tag = 'scoped memory for tpu_custom_call.1']
    %10 = vsyncpa [#allocation4], 0
    // Predicated region
    $region2: #{tpu_custom_call.1} parent=1 // pred_check
      _
    $region3: #{tpu_custom_call.1} parent=1 // pred_check_branch
      %12 = sbr.rel (0) target = $region5
    $region4: #{tpu_custom_call.1} parent=1 // pred_region
      _
    $region5: #{tpu_custom_call.1} parent=1 // pred_fallthru
      _
    // Predicated region
    $region6: #{tpu_custom_call.1} parent=1 // pred_check
      _
    $region7: #{tpu_custom_call.1} parent=1 // pred_check_branch
      %14 = sbr.rel (0) target = $region9
    $region8: #{tpu_custom_call.1} parent=1 // pred_region
      %s16 = ssub.s32 16000, 16000
      %17 = vsyncadd [#allocation4], %s16
      %s19 = sshll.u32 [#allocation3], 4
      %s20 = int_to_ptr.vmem [resolvable:$true] %s19
      %22 = dma.hbm_to_vmem [thread:$0]  %s1, 16000, %s20, [#allocation4]
    $region9: #{tpu_custom_call.1} parent=1 // pred_fallthru
      _
    // Predicated region
    $region10: #{tpu_custom_call.1} parent=1 // pred_check
      _
    $region11: #{tpu_custom_call.1} parent=1 // pred_check_branch
      %24 = sbr.rel (0) target = $region13
    $region12: #{tpu_custom_call.1} parent=1 // pred_region
      _
    $region13: #{tpu_custom_call.1} parent=1 // pred_fallthru
      _
    // Predicated region
    $region14: #{tpu_custom_call.1} parent=1 // pred_check
      _
    $region15: #{tpu_custom_call.1} parent=1 // pred_check_branch
      %26 = sbr.rel (0) target = $region17
    $region16: #{tpu_custom_call.1} parent=1 // pred_region
      %27 = dma.done [#allocation4], 16000
    $region17: #{tpu_custom_call.1} parent=1 // pred_fallthru
      _
    %v28 = vld [vmem:[%s0] sm:$0xff]
    %v29 = vld [vmem:[#allocation3] ss:$4 sm:$0xff]
    %s30 = scalar_lea.vmem [#allocation3], 32
    %v31 = vld [vmem:[%s30] ss:$4 sm:$0x3]
    %s32 = scalar_lea.vmem [#allocation3], 1
    %v33 = vld [vmem:[%s32] ss:$4 sm:$0xff]
    %s34 = scalar_lea.vmem [#allocation3], 33
    %v35 = vld [vmem:[%s34] ss:$4 sm:$0x3]
    %s36 = scalar_lea.vmem [#allocation3], 2
    %v37 = vld [vmem:[%s36] ss:$4 sm:$0xff]
    %s38 = scalar_lea.vmem [#allocation3], 34
    %v39 = vld [vmem:[%s38] ss:$4 sm:$0x3]
    %41 = vset.pattern.permute.xlu0 0
    %42 = vperm.xlu0 %41, %v28
    %v43 = vpop.permute.xlu0 %42
    %v47 = vlaneseq
    %v48 = vshrl.u32 %v47, 7
    %v49 = vsub.s32 0, %v48
    %v50 = vrot.slane %v29, %v49
    %v51 = vlaneseq
    %v52 = vshrl.u32 %v51, 7
    %v53 = vsub.s32 1, %v52
    %v54 = vrot.slane %v29, %v53
    %v55 = vlaneseq
    %v56 = vshrl.u32 %v55, 7
    %v57 = vsub.s32 2, %v56
    %v58 = vrot.slane %v29, %v57
    %v59 = vlaneseq
    %v60 = vshrl.u32 %v59, 7
    %v61 = vsub.s32 3, %v60
    %v62 = vrot.slane %v29, %v61
    %v63 = vlaneseq
    %v64 = vshrl.u32 %v63, 7
    %v65 = vsub.s32 4, %v64
    %v66 = vrot.slane %v29, %v65
    %v67 = vlaneseq
    %v68 = vshrl.u32 %v67, 7
    %v69 = vsub.s32 5, %v68
    %v70 = vrot.slane %v29, %v69
    %v71 = vlaneseq
    %v72 = vshrl.u32 %v71, 7
    %v73 = vsub.s32 6, %v72
    %v74 = vrot.slane %v29, %v73
    %v75 = vlaneseq
    %v76 = vshrl.u32 %v75, 7
    %v77 = vsub.s32 7, %v76
    %v78 = vrot.slane %v29, %v77
    %v79 = vlaneseq
    %v80 = vshrl.u32 %v79, 7
    %v81 = vsub.s32 0, %v80
    %v82 = vrot.slane %v31, %v81
    %v83 = vlaneseq
    %v84 = vshrl.u32 %v83, 7
    %v85 = vsub.s32 1, %v84
    %v86 = vrot.slane %v31, %v85
    %v97 = vmul.f32 %v43, %v50
    %v98 = vmul.f32 %v43, %v54
    %v99 = vmul.f32 %v43, %v58
    %v100 = vmul.f32 %v43, %v62
    %v101 = vmul.f32 %v43, %v66
    %v102 = vmul.f32 %v43, %v70
    %v103 = vmul.f32 %v43, %v74
    %v104 = vmul.f32 %v43, %v78
    %v105 = vmul.f32 %v43, %v82
    %v106 = vmul.f32 %v43, %v86
    %v109 = vlaneseq
    %v110 = vshrl.u32 %v109, 7
    %v111 = vsub.s32 0, %v110
    %v112 = vrot.slane %v33, %v111
    %v113 = vlaneseq
    %v114 = vshrl.u32 %v113, 7
    %v115 = vsub.s32 1, %v114
    %v116 = vrot.slane %v33, %v115
    %v117 = vlaneseq
    %v118 = vshrl.u32 %v117, 7
    %v119 = vsub.s32 2, %v118
    %v120 = vrot.slane %v33, %v119
    %v121 = vlaneseq
    %v122 = vshrl.u32 %v121, 7
    %v123 = vsub.s32 3, %v122
    %v124 = vrot.slane %v33, %v123
    %v125 = vlaneseq
    %v126 = vshrl.u32 %v125, 7
    %v127 = vsub.s32 4, %v126
    %v128 = vrot.slane %v33, %v127
    %v129 = vlaneseq
    %v130 = vshrl.u32 %v129, 7
    %v131 = vsub.s32 5, %v130
    %v132 = vrot.slane %v33, %v131
    %v133 = vlaneseq
    %v134 = vshrl.u32 %v133, 7
    %v135 = vsub.s32 6, %v134
    %v136 = vrot.slane %v33, %v135
    %v137 = vlaneseq
    %v138 = vshrl.u32 %v137, 7
    %v139 = vsub.s32 7, %v138
    %v140 = vrot.slane %v33, %v139
    %v141 = vlaneseq
    %v142 = vshrl.u32 %v141, 7
    %v143 = vsub.s32 0, %v142
    %v144 = vrot.slane %v35, %v143
    %v145 = vlaneseq
    %v146 = vshrl.u32 %v145, 7
    %v147 = vsub.s32 1, %v146
    %v148 = vrot.slane %v35, %v147
    %v159 = vadd.f32 %v97, %v112
    %v160 = vadd.f32 %v98, %v116
    %v161 = vadd.f32 %v99, %v120
    %v162 = vadd.f32 %v100, %v124
    %v163 = vadd.f32 %v101, %v128
    %v164 = vadd.f32 %v102, %v132
    %v165 = vadd.f32 %v103, %v136
    %v166 = vadd.f32 %v104, %v140
    %v167 = vadd.f32 %v105, %v144
    %v168 = vadd.f32 %v106, %v148
    %v169 = vmax.f32 %v159, 0.0
    %v170 = vmax.f32 %v160, 0.0
    %v171 = vmax.f32 %v161, 0.0
    %v172 = vmax.f32 %v162, 0.0
    %v173 = vmax.f32 %v163, 0.0
    %v174 = vmax.f32 %v164, 0.0
    %v175 = vmax.f32 %v165, 0.0
    %v176 = vmax.f32 %v166, 0.0
    %v177 = vmax.f32 %v167, 0.0
    %v178 = vmax.f32 %v168, 0.0
    %v181 = vlaneseq
    %v182 = vshrl.u32 %v181, 7
    %v183 = vsub.s32 0, %v182
    %v184 = vrot.slane %v37, %v183
    %v185 = vlaneseq
    %v186 = vshrl.u32 %v185, 7
    %v187 = vsub.s32 1, %v186
    %v188 = vrot.slane %v37, %v187
    %v189 = vlaneseq
    %v190 = vshrl.u32 %v189, 7
    %v191 = vsub.s32 2, %v190
    %v192 = vrot.slane %v37, %v191
    %v193 = vlaneseq
    %v194 = vshrl.u32 %v193, 7
    %v195 = vsub.s32 3, %v194
    %v196 = vrot.slane %v37, %v195
    %v197 = vlaneseq
    %v198 = vshrl.u32 %v197, 7
    %v199 = vsub.s32 4, %v198
    %v200 = vrot.slane %v37, %v199
    %v201 = vlaneseq
    %v202 = vshrl.u32 %v201, 7
    %v203 = vsub.s32 5, %v202
    %v204 = vrot.slane %v37, %v203
    %v205 = vlaneseq
    %v206 = vshrl.u32 %v205, 7
    %v207 = vsub.s32 6, %v206
    %v208 = vrot.slane %v37, %v207
    %v209 = vlaneseq
    %v210 = vshrl.u32 %v209, 7
    %v211 = vsub.s32 7, %v210
    %v212 = vrot.slane %v37, %v211
    %v213 = vlaneseq
    %v214 = vshrl.u32 %v213, 7
    %v215 = vsub.s32 0, %v214
    %v216 = vrot.slane %v39, %v215
    %v217 = vlaneseq
    %v218 = vshrl.u32 %v217, 7
    %v219 = vsub.s32 1, %v218
    %v220 = vrot.slane %v39, %v219
    %v231 = vmul.f32 %v169, %v184
    %v232 = vmul.f32 %v170, %v188
    %v233 = vmul.f32 %v171, %v192
    %v234 = vmul.f32 %v172, %v196
    %v235 = vmul.f32 %v173, %v200
    %v236 = vmul.f32 %v174, %v204
    %v237 = vmul.f32 %v175, %v208
    %v238 = vmul.f32 %v176, %v212
    %v239 = vmul.f32 %v177, %v216
    %v240 = vmul.f32 %v178, %v220
    %v241 = vadd.f32 %v231, 0.0
    %v242 = vadd.f32 %v241, %v232
    %v243 = vadd.f32 %v242, %v233
    %v244 = vadd.f32 %v243, %v234
    %v245 = vadd.f32 %v244, %v235
    %v246 = vadd.f32 %v245, %v236
    %v247 = vadd.f32 %v246, %v237
    %v248 = vadd.f32 %v247, %v238
    %v249 = vadd.f32 %v248, %v239
    %v250 = vadd.f32 %v249, %v240
    %s251 = scalar_lea.vmem [#allocation3], 40
    %v252 = vld [vmem:[%s251] ss:$4 sm:$0xff]
    %s253 = scalar_lea.vmem %s251, 32 [#allocation3]
    %v254 = vld [vmem:[%s253] ss:$4 sm:$0x3]
    %s255 = scalar_lea.vmem %s251, 1 [#allocation3]
    %v256 = vld [vmem:[%s255] ss:$4 sm:$0xff]
    %s257 = scalar_lea.vmem %s251, 33 [#allocation3]
    %v258 = vld [vmem:[%s257] ss:$4 sm:$0x3]
    %s259 = scalar_lea.vmem %s251, 2 [#allocation3]
    %v260 = vld [vmem:[%s259] ss:$4 sm:$0xff]
    %s261 = scalar_lea.vmem %s251, 34 [#allocation3]
    %v262 = vld [vmem:[%s261] ss:$4 sm:$0x3]
    %v265 = vlaneseq
    %v266 = vshrl.u32 %v265, 7
    %v267 = vsub.s32 0, %v266
    %v268 = vrot.slane %v252, %v267
    %v269 = vlaneseq
    %v270 = vshrl.u32 %v269, 7
    %v271 = vsub.s32 1, %v270
    %v272 = vrot.slane %v252, %v271
    %v273 = vlaneseq
    %v274 = vshrl.u32 %v273, 7
    %v275 = vsub.s32 2, %v274
    %v276 = vrot.slane %v252, %v275
    %v277 = vlaneseq
    %v278 = vshrl.u32 %v277, 7
    %v279 = vsub.s32 3, %v278
    %v280 = vrot.slane %v252, %v279
    %v281 = vlaneseq
    %v282 = vshrl.u32 %v281, 7
    %v283 = vsub.s32 4, %v282
    %v284 = vrot.slane %v252, %v283
    %v285 = vlaneseq
    %v286 = vshrl.u32 %v285, 7
    %v287 = vsub.s32 5, %v286
    %v288 = vrot.slane %v252, %v287
    %v289 = vlaneseq
    %v290 = vshrl.u32 %v289, 7
    %v291 = vsub.s32 6, %v290
    %v292 = vrot.slane %v252, %v291
    %v293 = vlaneseq
    %v294 = vshrl.u32 %v293, 7
    %v295 = vsub.s32 7, %v294
    %v296 = vrot.slane %v252, %v295
    %v297 = vlaneseq
    %v298 = vshrl.u32 %v297, 7
    %v299 = vsub.s32 0, %v298
    %v300 = vrot.slane %v254, %v299
    %v301 = vlaneseq
    %v302 = vshrl.u32 %v301, 7
    %v303 = vsub.s32 1, %v302
    %v304 = vrot.slane %v254, %v303
    %v315 = vmul.f32 %v43, %v268
    %v316 = vmul.f32 %v43, %v272
    %v317 = vmul.f32 %v43, %v276
    %v318 = vmul.f32 %v43, %v280
    %v319 = vmul.f32 %v43, %v284
    %v320 = vmul.f32 %v43, %v288
    %v321 = vmul.f32 %v43, %v292
    %v322 = vmul.f32 %v43, %v296
    %v323 = vmul.f32 %v43, %v300
    %v324 = vmul.f32 %v43, %v304
    %v327 = vlaneseq
    %v328 = vshrl.u32 %v327, 7
    %v329 = vsub.s32 0, %v328
    %v330 = vrot.slane %v256, %v329
    %v331 = vlaneseq
    %v332 = vshrl.u32 %v331, 7
    %v333 = vsub.s32 1, %v332
    %v334 = vrot.slane %v256, %v333
    %v335 = vlaneseq
    %v336 = vshrl.u32 %v335, 7
    %v337 = vsub.s32 2, %v336
    %v338 = vrot.slane %v256, %v337
    %v339 = vlaneseq
    %v340 = vshrl.u32 %v339, 7
    %v341 = vsub.s32 3, %v340
    %v342 = vrot.slane %v256, %v341
    %v343 = vlaneseq
    %v344 = vshrl.u32 %v343, 7
    %v345 = vsub.s32 4, %v344
    %v346 = vrot.slane %v256, %v345
    %v347 = vlaneseq
    %v348 = vshrl.u32 %v347, 7
    %v349 = vsub.s32 5, %v348
    %v350 = vrot.slane %v256, %v349
    %v351 = vlaneseq
    %v352 = vshrl.u32 %v351, 7
    %v353 = vsub.s32 6, %v352
    %v354 = vrot.slane %v256, %v353
    %v355 = vlaneseq
    %v356 = vshrl.u32 %v355, 7
    %v357 = vsub.s32 7, %v356
    %v358 = vrot.slane %v256, %v357
    %v359 = vlaneseq
    %v360 = vshrl.u32 %v359, 7
    %v361 = vsub.s32 0, %v360
    %v362 = vrot.slane %v258, %v361
    %v363 = vlaneseq
    %v364 = vshrl.u32 %v363, 7
    %v365 = vsub.s32 1, %v364
    %v366 = vrot.slane %v258, %v365
    %v377 = vadd.f32 %v315, %v330
    %v378 = vadd.f32 %v316, %v334
    %v379 = vadd.f32 %v317, %v338
    %v380 = vadd.f32 %v318, %v342
    %v381 = vadd.f32 %v319, %v346
    %v382 = vadd.f32 %v320, %v350
    %v383 = vadd.f32 %v321, %v354
    %v384 = vadd.f32 %v322, %v358
    %v385 = vadd.f32 %v323, %v362
    %v386 = vadd.f32 %v324, %v366
    %v387 = vmax.f32 %v377, 0.0
    %v388 = vmax.f32 %v378, 0.0
    %v389 = vmax.f32 %v379, 0.0
    %v390 = vmax.f32 %v380, 0.0
    %v391 = vmax.f32 %v381, 0.0
    %v392 = vmax.f32 %v382, 0.0
    %v393 = vmax.f32 %v383, 0.0
    %v394 = vmax.f32 %v384, 0.0
    %v395 = vmax.f32 %v385, 0.0
    %v396 = vmax.f32 %v386, 0.0
    %v399 = vlaneseq
    %v400 = vshrl.u32 %v399, 7
    %v401 = vsub.s32 0, %v400
    %v402 = vrot.slane %v260, %v401
    %v403 = vlaneseq
    %v404 = vshrl.u32 %v403, 7
    %v405 = vsub.s32 1, %v404
    %v406 = vrot.slane %v260, %v405
    %v407 = vlaneseq
    %v408 = vshrl.u32 %v407, 7
    %v409 = vsub.s32 2, %v408
    %v410 = vrot.slane %v260, %v409
    %v411 = vlaneseq
    %v412 = vshrl.u32 %v411, 7
    %v413 = vsub.s32 3, %v412
    %v414 = vrot.slane %v260, %v413
    %v415 = vlaneseq
    %v416 = vshrl.u32 %v415, 7
    %v417 = vsub.s32 4, %v416
    %v418 = vrot.slane %v260, %v417
    %v419 = vlaneseq
    %v420 = vshrl.u32 %v419, 7
    %v421 = vsub.s32 5, %v420
    %v422 = vrot.slane %v260, %v421
    %v423 = vlaneseq
    %v424 = vshrl.u32 %v423, 7
    %v425 = vsub.s32 6, %v424
    %v426 = vrot.slane %v260, %v425
    %v427 = vlaneseq
    %v428 = vshrl.u32 %v427, 7
    %v429 = vsub.s32 7, %v428
    %v430 = vrot.slane %v260, %v429
    %v431 = vlaneseq
    %v432 = vshrl.u32 %v431, 7
    %v433 = vsub.s32 0, %v432
    %v434 = vrot.slane %v262, %v433
    %v435 = vlaneseq
    %v436 = vshrl.u32 %v435, 7
    %v437 = vsub.s32 1, %v436
    %v438 = vrot.slane %v262, %v437
    %v449 = vmul.f32 %v387, %v402
    %v450 = vmul.f32 %v388, %v406
    %v451 = vmul.f32 %v389, %v410
    %v452 = vmul.f32 %v390, %v414
    %v453 = vmul.f32 %v391, %v418
    %v454 = vmul.f32 %v392, %v422
    %v455 = vmul.f32 %v393, %v426
    %v456 = vmul.f32 %v394, %v430
    %v457 = vmul.f32 %v395, %v434
    %v458 = vmul.f32 %v396, %v438
    %v459 = vadd.f32 %v250, %v449
    %v460 = vadd.f32 %v459, %v450
    %v461 = vadd.f32 %v460, %v451
    %v462 = vadd.f32 %v461, %v452
    %v463 = vadd.f32 %v462, %v453
    %v464 = vadd.f32 %v463, %v454
    %v465 = vadd.f32 %v464, %v455
    %v466 = vadd.f32 %v465, %v456
    %v467 = vadd.f32 %v466, %v457
    %v468 = vadd.f32 %v467, %v458
    %s469 = scalar_lea.vmem [#allocation3], 80
    %v470 = vld [vmem:[%s469] ss:$4 sm:$0xff]
    %s471 = scalar_lea.vmem %s469, 32 [#allocation3]
    %v472 = vld [vmem:[%s471] ss:$4 sm:$0x3]
    %s473 = scalar_lea.vmem %s469, 1 [#allocation3]
    %v474 = vld [vmem:[%s473] ss:$4 sm:$0xff]
    %s475 = scalar_lea.vmem %s469, 33 [#allocation3]
    %v476 = vld [vmem:[%s475] ss:$4 sm:$0x3]
    %s477 = scalar_lea.vmem %s469, 2 [#allocation3]
    %v478 = vld [vmem:[%s477] ss:$4 sm:$0xff]
    %s479 = scalar_lea.vmem %s469, 34 [#allocation3]
    %v480 = vld [vmem:[%s479] ss:$4 sm:$0x3]
    %v483 = vlaneseq
    %v484 = vshrl.u32 %v483, 7
    %v485 = vsub.s32 0, %v484
    %v486 = vrot.slane %v470, %v485
    %v487 = vlaneseq
    %v488 = vshrl.u32 %v487, 7
    %v489 = vsub.s32 1, %v488
    %v490 = vrot.slane %v470, %v489
    %v491 = vlaneseq
    %v492 = vshrl.u32 %v491, 7
    %v493 = vsub.s32 2, %v492
    %v494 = vrot.slane %v470, %v493
    %v495 = vlaneseq
    %v496 = vshrl.u32 %v495, 7
    %v497 = vsub.s32 3, %v496
    %v498 = vrot.slane %v470, %v497
    %v499 = vlaneseq
    %v500 = vshrl.u32 %v499, 7
    %v501 = vsub.s32 4, %v500
    %v502 = vrot.slane %v470, %v501
    %v503 = vlaneseq
    %v504 = vshrl.u32 %v503, 7
    %v505 = vsub.s32 5, %v504
    %v506 = vrot.slane %v470, %v505
    %v507 = vlaneseq
    %v508 = vshrl.u32 %v507, 7
    %v509 = vsub.s32 6, %v508
    %v510 = vrot.slane %v470, %v509
    %v511 = vlaneseq
    %v512 = vshrl.u32 %v511, 7
    %v513 = vsub.s32 7, %v512
    %v514 = vrot.slane %v470, %v513
    %v515 = vlaneseq
    %v516 = vshrl.u32 %v515, 7
    %v517 = vsub.s32 0, %v516
    %v518 = vrot.slane %v472, %v517
    %v519 = vlaneseq
    %v520 = vshrl.u32 %v519, 7
    %v521 = vsub.s32 1, %v520
    %v522 = vrot.slane %v472, %v521
    %v533 = vmul.f32 %v43, %v486
    %v534 = vmul.f32 %v43, %v490
    %v535 = vmul.f32 %v43, %v494
    %v536 = vmul.f32 %v43, %v498
    %v537 = vmul.f32 %v43, %v502
    %v538 = vmul.f32 %v43, %v506
    %v539 = vmul.f32 %v43, %v510
    %v540 = vmul.f32 %v43, %v514
    %v541 = vmul.f32 %v43, %v518
    %v542 = vmul.f32 %v43, %v522
    %v545 = vlaneseq
    %v546 = vshrl.u32 %v545, 7
    %v547 = vsub.s32 0, %v546
    %v548 = vrot.slane %v474, %v547
    %v549 = vlaneseq
    %v550 = vshrl.u32 %v549, 7
    %v551 = vsub.s32 1, %v550
    %v552 = vrot.slane %v474, %v551
    %v553 = vlaneseq
    %v554 = vshrl.u32 %v553, 7
    %v555 = vsub.s32 2, %v554
    %v556 = vrot.slane %v474, %v555
    %v557 = vlaneseq
    %v558 = vshrl.u32 %v557, 7
    %v559 = vsub.s32 3, %v558
    %v560 = vrot.slane %v474, %v559
    %v561 = vlaneseq
    %v562 = vshrl.u32 %v561, 7
    %v563 = vsub.s32 4, %v562
    %v564 = vrot.slane %v474, %v563
    %v565 = vlaneseq
    %v566 = vshrl.u32 %v565, 7
    %v567 = vsub.s32 5, %v566
    %v568 = vrot.slane %v474, %v567
    %v569 = vlaneseq
    %v570 = vshrl.u32 %v569, 7
    %v571 = vsub.s32 6, %v570
    %v572 = vrot.slane %v474, %v571
    %v573 = vlaneseq
    %v574 = vshrl.u32 %v573, 7
    %v575 = vsub.s32 7, %v574
    %v576 = vrot.slane %v474, %v575
    %v577 = vlaneseq
    %v578 = vshrl.u32 %v577, 7
    %v579 = vsub.s32 0, %v578
    %v580 = vrot.slane %v476, %v579
    %v581 = vlaneseq
    %v582 = vshrl.u32 %v581, 7
    %v583 = vsub.s32 1, %v582
    %v584 = vrot.slane %v476, %v583
    %v595 = vadd.f32 %v533, %v548
    %v596 = vadd.f32 %v534, %v552
    %v597 = vadd.f32 %v535, %v556
    %v598 = vadd.f32 %v536, %v560
    %v599 = vadd.f32 %v537, %v564
    %v600 = vadd.f32 %v538, %v568
    %v601 = vadd.f32 %v539, %v572
    %v602 = vadd.f32 %v540, %v576
    %v603 = vadd.f32 %v541, %v580
    %v604 = vadd.f32 %v542, %v584
    %v605 = vmax.f32 %v595, 0.0
    %v606 = vmax.f32 %v596, 0.0
    %v607 = vmax.f32 %v597, 0.0
    %v608 = vmax.f32 %v598, 0.0
    %v609 = vmax.f32 %v599, 0.0
    %v610 = vmax.f32 %v600, 0.0
    %v611 = vmax.f32 %v601, 0.0
    %v612 = vmax.f32 %v602, 0.0
    %v613 = vmax.f32 %v603, 0.0
    %v614 = vmax.f32 %v604, 0.0
    %v617 = vlaneseq
    %v618 = vshrl.u32 %v617, 7
    %v619 = vsub.s32 0, %v618
    %v620 = vrot.slane %v478, %v619
    %v621 = vlaneseq
    %v622 = vshrl.u32 %v621, 7
    %v623 = vsub.s32 1, %v622
    %v624 = vrot.slane %v478, %v623
    %v625 = vlaneseq
    %v626 = vshrl.u32 %v625, 7
    %v627 = vsub.s32 2, %v626
    %v628 = vrot.slane %v478, %v627
    %v629 = vlaneseq
    %v630 = vshrl.u32 %v629, 7
    %v631 = vsub.s32 3, %v630
    %v632 = vrot.slane %v478, %v631
    %v633 = vlaneseq
    %v634 = vshrl.u32 %v633, 7
    %v635 = vsub.s32 4, %v634
    %v636 = vrot.slane %v478, %v635
    %v637 = vlaneseq
    %v638 = vshrl.u32 %v637, 7
    %v639 = vsub.s32 5, %v638
    %v640 = vrot.slane %v478, %v639
    %v641 = vlaneseq
    %v642 = vshrl.u32 %v641, 7
    %v643 = vsub.s32 6, %v642
    %v644 = vrot.slane %v478, %v643
    %v645 = vlaneseq
    %v646 = vshrl.u32 %v645, 7
    %v647 = vsub.s32 7, %v646
    %v648 = vrot.slane %v478, %v647
    %v649 = vlaneseq
    %v650 = vshrl.u32 %v649, 7
    %v651 = vsub.s32 0, %v650
    %v652 = vrot.slane %v480, %v651
    %v653 = vlaneseq
    %v654 = vshrl.u32 %v653, 7
    %v655 = vsub.s32 1, %v654
    %v656 = vrot.slane %v480, %v655
    %v667 = vmul.f32 %v605, %v620
    %v668 = vmul.f32 %v606, %v624
    %v669 = vmul.f32 %v607, %v628
    %v670 = vmul.f32 %v608, %v632
    %v671 = vmul.f32 %v609, %v636
    %v672 = vmul.f32 %v610, %v640
    %v673 = vmul.f32 %v611, %v644
    %v674 = vmul.f32 %v612, %v648
    %v675 = vmul.f32 %v613, %v652
    %v676 = vmul.f32 %v614, %v656
    %v677 = vadd.f32 %v468, %v667
    %v678 = vadd.f32 %v677, %v668
    %v679 = vadd.f32 %v678, %v669
    %v680 = vadd.f32 %v679, %v670
    %v681 = vadd.f32 %v680, %v671
    %v682 = vadd.f32 %v681, %v672
    %v683 = vadd.f32 %v682, %v673
    %v684 = vadd.f32 %v683, %v674
    %v685 = vadd.f32 %v684, %v675
    %v686 = vadd.f32 %v685, %v676
    %s687 = scalar_lea.vmem [#allocation3], 120
    %v688 = vld [vmem:[%s687] ss:$4 sm:$0xff]
    %s689 = scalar_lea.vmem %s687, 32 [#allocation3]
    %v690 = vld [vmem:[%s689] ss:$4 sm:$0x3]
    %s691 = scalar_lea.vmem %s687, 1 [#allocation3]
    %v692 = vld [vmem:[%s691] ss:$4 sm:$0xff]
    %s693 = scalar_lea.vmem %s687, 33 [#allocation3]
    %v694 = vld [vmem:[%s693] ss:$4 sm:$0x3]
    %s695 = scalar_lea.vmem %s687, 2 [#allocation3]
    %v696 = vld [vmem:[%s695] ss:$4 sm:$0xff]
    %s697 = scalar_lea.vmem %s687, 34 [#allocation3]
    %v698 = vld [vmem:[%s697] ss:$4 sm:$0x3]
    %v701 = vlaneseq
    %v702 = vshrl.u32 %v701, 7
    %v703 = vsub.s32 0, %v702
    %v704 = vrot.slane %v688, %v703
    %v705 = vlaneseq
    %v706 = vshrl.u32 %v705, 7
    %v707 = vsub.s32 1, %v706
    %v708 = vrot.slane %v688, %v707
    %v709 = vlaneseq
    %v710 = vshrl.u32 %v709, 7
    %v711 = vsub.s32 2, %v710
    %v712 = vrot.slane %v688, %v711
    %v713 = vlaneseq
    %v714 = vshrl.u32 %v713, 7
    %v715 = vsub.s32 3, %v714
    %v716 = vrot.slane %v688, %v715
    %v717 = vlaneseq
    %v718 = vshrl.u32 %v717, 7
    %v719 = vsub.s32 4, %v718
    %v720 = vrot.slane %v688, %v719
    %v721 = vlaneseq
    %v722 = vshrl.u32 %v721, 7
    %v723 = vsub.s32 5, %v722
    %v724 = vrot.slane %v688, %v723
    %v725 = vlaneseq
    %v726 = vshrl.u32 %v725, 7
    %v727 = vsub.s32 6, %v726
    %v728 = vrot.slane %v688, %v727
    %v729 = vlaneseq
    %v730 = vshrl.u32 %v729, 7
    %v731 = vsub.s32 7, %v730
    %v732 = vrot.slane %v688, %v731
    %v733 = vlaneseq
    %v734 = vshrl.u32 %v733, 7
    %v735 = vsub.s32 0, %v734
    %v736 = vrot.slane %v690, %v735
    %v737 = vlaneseq
    %v738 = vshrl.u32 %v737, 7
    %v739 = vsub.s32 1, %v738
    %v740 = vrot.slane %v690, %v739
    %v751 = vmul.f32 %v43, %v704
    %v752 = vmul.f32 %v43, %v708
    %v753 = vmul.f32 %v43, %v712
    %v754 = vmul.f32 %v43, %v716
    %v755 = vmul.f32 %v43, %v720
    %v756 = vmul.f32 %v43, %v724
    %v757 = vmul.f32 %v43, %v728
    %v758 = vmul.f32 %v43, %v732
    %v759 = vmul.f32 %v43, %v736
    %v760 = vmul.f32 %v43, %v740
    %v763 = vlaneseq
    %v764 = vshrl.u32 %v763, 7
    %v765 = vsub.s32 0, %v764
    %v766 = vrot.slane %v692, %v765
    %v767 = vlaneseq
    %v768 = vshrl.u32 %v767, 7
    %v769 = vsub.s32 1, %v768
    %v770 = vrot.slane %v692, %v769
    %v771 = vlaneseq
    %v772 = vshrl.u32 %v771, 7
    %v773 = vsub.s32 2, %v772
    %v774 = vrot.slane %v692, %v773
    %v775 = vlaneseq
    %v776 = vshrl.u32 %v775, 7
    %v777 = vsub.s32 3, %v776
    %v778 = vrot.slane %v692, %v777
    %v779 = vlaneseq
    %v780 = vshrl.u32 %v779, 7
    %v781 = vsub.s32 4, %v780
    %v782 = vrot.slane %v692, %v781
    %v783 = vlaneseq
    %v784 = vshrl.u32 %v783, 7
    %v785 = vsub.s32 5, %v784
    %v786 = vrot.slane %v692, %v785
    %v787 = vlaneseq
    %v788 = vshrl.u32 %v787, 7
    %v789 = vsub.s32 6, %v788
    %v790 = vrot.slane %v692, %v789
    %v791 = vlaneseq
    %v792 = vshrl.u32 %v791, 7
    %v793 = vsub.s32 7, %v792
    %v794 = vrot.slane %v692, %v793
    %v795 = vlaneseq
    %v796 = vshrl.u32 %v795, 7
    %v797 = vsub.s32 0, %v796
    %v798 = vrot.slane %v694, %v797
    %v799 = vlaneseq
    %v800 = vshrl.u32 %v799, 7
    %v801 = vsub.s32 1, %v800
    %v802 = vrot.slane %v694, %v801
    %v813 = vadd.f32 %v751, %v766
    %v814 = vadd.f32 %v752, %v770
    %v815 = vadd.f32 %v753, %v774
    %v816 = vadd.f32 %v754, %v778
    %v817 = vadd.f32 %v755, %v782
    %v818 = vadd.f32 %v756, %v786
    %v819 = vadd.f32 %v757, %v790
    %v820 = vadd.f32 %v758, %v794
    %v821 = vadd.f32 %v759, %v798
    %v822 = vadd.f32 %v760, %v802
    %v823 = vmax.f32 %v813, 0.0
    %v824 = vmax.f32 %v814, 0.0
    %v825 = vmax.f32 %v815, 0.0
    %v826 = vmax.f32 %v816, 0.0
    %v827 = vmax.f32 %v817, 0.0
    %v828 = vmax.f32 %v818, 0.0
    %v829 = vmax.f32 %v819, 0.0
    %v830 = vmax.f32 %v820, 0.0
    %v831 = vmax.f32 %v821, 0.0
    %v832 = vmax.f32 %v822, 0.0
    %v835 = vlaneseq
    %v836 = vshrl.u32 %v835, 7
    %v837 = vsub.s32 0, %v836
    %v838 = vrot.slane %v696, %v837
    %v839 = vlaneseq
    %v840 = vshrl.u32 %v839, 7
    %v841 = vsub.s32 1, %v840
    %v842 = vrot.slane %v696, %v841
    %v843 = vlaneseq
    %v844 = vshrl.u32 %v843, 7
    %v845 = vsub.s32 2, %v844
    %v846 = vrot.slane %v696, %v845
    %v847 = vlaneseq
    %v848 = vshrl.u32 %v847, 7
    %v849 = vsub.s32 3, %v848
    %v850 = vrot.slane %v696, %v849
    %v851 = vlaneseq
    %v852 = vshrl.u32 %v851, 7
    %v853 = vsub.s32 4, %v852
    %v854 = vrot.slane %v696, %v853
    %v855 = vlaneseq
    %v856 = vshrl.u32 %v855, 7
    %v857 = vsub.s32 5, %v856
    %v858 = vrot.slane %v696, %v857
    %v859 = vlaneseq
    %v860 = vshrl.u32 %v859, 7
    %v861 = vsub.s32 6, %v860
    %v862 = vrot.slane %v696, %v861
    %v863 = vlaneseq
    %v864 = vshrl.u32 %v863, 7
    %v865 = vsub.s32 7, %v864
    %v866 = vrot.slane %v696, %v865
    %v867 = vlaneseq
    %v868 = vshrl.u32 %v867, 7
    %v869 = vsub.s32 0, %v868
    %v870 = vrot.slane %v698, %v869
    %v871 = vlaneseq
    %v872 = vshrl.u32 %v871, 7
    %v873 = vsub.s32 1, %v872
    %v874 = vrot.slane %v698, %v873
    %v885 = vmul.f32 %v823, %v838
    %v886 = vmul.f32 %v824, %v842
    %v887 = vmul.f32 %v825, %v846
    %v888 = vmul.f32 %v826, %v850
    %v889 = vmul.f32 %v827, %v854
    %v890 = vmul.f32 %v828, %v858
    %v891 = vmul.f32 %v829, %v862
    %v892 = vmul.f32 %v830, %v866
    %v893 = vmul.f32 %v831, %v870
    %v894 = vmul.f32 %v832, %v874
    %v895 = vadd.f32 %v686, %v885
    %v896 = vadd.f32 %v895, %v886
    %v897 = vadd.f32 %v896, %v887
    %v898 = vadd.f32 %v897, %v888
    %v899 = vadd.f32 %v898, %v889
    %v900 = vadd.f32 %v899, %v890
    %v901 = vadd.f32 %v900, %v891
    %v902 = vadd.f32 %v901, %v892
    %v903 = vadd.f32 %v902, %v893
    %v904 = vadd.f32 %v903, %v894
    %s905 = scalar_lea.vmem [#allocation3], 160
    %v906 = vld [vmem:[%s905] ss:$4 sm:$0xff]
    %s907 = scalar_lea.vmem %s905, 32 [#allocation3]
    %v908 = vld [vmem:[%s907] ss:$4 sm:$0x3]
    %s909 = scalar_lea.vmem %s905, 1 [#allocation3]
    %v910 = vld [vmem:[%s909] ss:$4 sm:$0xff]
    %s911 = scalar_lea.vmem %s905, 33 [#allocation3]
    %v912 = vld [vmem:[%s911] ss:$4 sm:$0x3]
    %s913 = scalar_lea.vmem %s905, 2 [#allocation3]
    %v914 = vld [vmem:[%s913] ss:$4 sm:$0xff]
    %s915 = scalar_lea.vmem %s905, 34 [#allocation3]
    %v916 = vld [vmem:[%s915] ss:$4 sm:$0x3]
    %v919 = vlaneseq
    %v920 = vshrl.u32 %v919, 7
    %v921 = vsub.s32 0, %v920
    %v922 = vrot.slane %v906, %v921
    %v923 = vlaneseq
    %v924 = vshrl.u32 %v923, 7
    %v925 = vsub.s32 1, %v924
    %v926 = vrot.slane %v906, %v925
    %v927 = vlaneseq
    %v928 = vshrl.u32 %v927, 7
    %v929 = vsub.s32 2, %v928
    %v930 = vrot.slane %v906, %v929
    %v931 = vlaneseq
    %v932 = vshrl.u32 %v931, 7
    %v933 = vsub.s32 3, %v932
    %v934 = vrot.slane %v906, %v933
    %v935 = vlaneseq
    %v936 = vshrl.u32 %v935, 7
    %v937 = vsub.s32 4, %v936
    %v938 = vrot.slane %v906, %v937
    %v939 = vlaneseq
    %v940 = vshrl.u32 %v939, 7
    %v941 = vsub.s32 5, %v940
    %v942 = vrot.slane %v906, %v941
    %v943 = vlaneseq
    %v944 = vshrl.u32 %v943, 7
    %v945 = vsub.s32 6, %v944
    %v946 = vrot.slane %v906, %v945
    %v947 = vlaneseq
    %v948 = vshrl.u32 %v947, 7
    %v949 = vsub.s32 7, %v948
    %v950 = vrot.slane %v906, %v949
    %v951 = vlaneseq
    %v952 = vshrl.u32 %v951, 7
    %v953 = vsub.s32 0, %v952
    %v954 = vrot.slane %v908, %v953
    %v955 = vlaneseq
    %v956 = vshrl.u32 %v955, 7
    %v957 = vsub.s32 1, %v956
    %v958 = vrot.slane %v908, %v957
    %v969 = vmul.f32 %v43, %v922
    %v970 = vmul.f32 %v43, %v926
    %v971 = vmul.f32 %v43, %v930
    %v972 = vmul.f32 %v43, %v934
    %v973 = vmul.f32 %v43, %v938
    %v974 = vmul.f32 %v43, %v942
    %v975 = vmul.f32 %v43, %v946
    %v976 = vmul.f32 %v43, %v950
    %v977 = vmul.f32 %v43, %v954
    %v978 = vmul.f32 %v43, %v958
    %v981 = vlaneseq
    %v982 = vshrl.u32 %v981, 7
    %v983 = vsub.s32 0, %v982
    %v984 = vrot.slane %v910, %v983
    %v985 = vlaneseq
    %v986 = vshrl.u32 %v985, 7
    %v987 = vsub.s32 1, %v986
    %v988 = vrot.slane %v910, %v987
    %v989 = vlaneseq
    %v990 = vshrl.u32 %v989, 7
    %v991 = vsub.s32 2, %v990
    %v992 = vrot.slane %v910, %v991
    %v993 = vlaneseq
    %v994 = vshrl.u32 %v993, 7
    %v995 = vsub.s32 3, %v994
    %v996 = vrot.slane %v910, %v995
    %v997 = vlaneseq
    %v998 = vshrl.u32 %v997, 7
    %v999 = vsub.s32 4, %v998
    %v1000 = vrot.slane %v910, %v999
    %v1001 = vlaneseq
    %v1002 = vshrl.u32 %v1001, 7
    %v1003 = vsub.s32 5, %v1002
    %v1004 = vrot.slane %v910, %v1003
    %v1005 = vlaneseq
    %v1006 = vshrl.u32 %v1005, 7
    %v1007 = vsub.s32 6, %v1006
    %v1008 = vrot.slane %v910, %v1007
    %v1009 = vlaneseq
    %v1010 = vshrl.u32 %v1009, 7
    %v1011 = vsub.s32 7, %v1010
    %v1012 = vrot.slane %v910, %v1011
    %v1013 = vlaneseq
    %v1014 = vshrl.u32 %v1013, 7
    %v1015 = vsub.s32 0, %v1014
    %v1016 = vrot.slane %v912, %v1015
    %v1017 = vlaneseq
    %v1018 = vshrl.u32 %v1017, 7
    %v1019 = vsub.s32 1, %v1018
    %v1020 = vrot.slane %v912, %v1019
    %v1031 = vadd.f32 %v969, %v984
    %v1032 = vadd.f32 %v970, %v988
    %v1033 = vadd.f32 %v971, %v992
    %v1034 = vadd.f32 %v972, %v996
    %v1035 = vadd.f32 %v973, %v1000
    %v1036 = vadd.f32 %v974, %v1004
    %v1037 = vadd.f32 %v975, %v1008
    %v1038 = vadd.f32 %v976, %v1012
    %v1039 = vadd.f32 %v977, %v1016
    %v1040 = vadd.f32 %v978, %v1020
    %v1041 = vmax.f32 %v1031, 0.0
    %v1042 = vmax.f32 %v1032, 0.0
    %v1043 = vmax.f32 %v1033, 0.0
    %v1044 = vmax.f32 %v1034, 0.0
    %v1045 = vmax.f32 %v1035, 0.0
    %v1046 = vmax.f32 %v1036, 0.0
    %v1047 = vmax.f32 %v1037, 0.0
    %v1048 = vmax.f32 %v1038, 0.0
    %v1049 = vmax.f32 %v1039, 0.0
    %v1050 = vmax.f32 %v1040, 0.0
    %v1053 = vlaneseq
    %v1054 = vshrl.u32 %v1053, 7
    %v1055 = vsub.s32 0, %v1054
    %v1056 = vrot.slane %v914, %v1055
    %v1057 = vlaneseq
    %v1058 = vshrl.u32 %v1057, 7
    %v1059 = vsub.s32 1, %v1058
    %v1060 = vrot.slane %v914, %v1059
    %v1061 = vlaneseq
    %v1062 = vshrl.u32 %v1061, 7
    %v1063 = vsub.s32 2, %v1062
    %v1064 = vrot.slane %v914, %v1063
    %v1065 = vlaneseq
    %v1066 = vshrl.u32 %v1065, 7
    %v1067 = vsub.s32 3, %v1066
    %v1068 = vrot.slane %v914, %v1067
    %v1069 = vlaneseq
    %v1070 = vshrl.u32 %v1069, 7
    %v1071 = vsub.s32 4, %v1070
    %v1072 = vrot.slane %v914, %v1071
    %v1073 = vlaneseq
    %v1074 = vshrl.u32 %v1073, 7
    %v1075 = vsub.s32 5, %v1074
    %v1076 = vrot.slane %v914, %v1075
    %v1077 = vlaneseq
    %v1078 = vshrl.u32 %v1077, 7
    %v1079 = vsub.s32 6, %v1078
    %v1080 = vrot.slane %v914, %v1079
    %v1081 = vlaneseq
    %v1082 = vshrl.u32 %v1081, 7
    %v1083 = vsub.s32 7, %v1082
    %v1084 = vrot.slane %v914, %v1083
    %v1085 = vlaneseq
    %v1086 = vshrl.u32 %v1085, 7
    %v1087 = vsub.s32 0, %v1086
    %v1088 = vrot.slane %v916, %v1087
    %v1089 = vlaneseq
    %v1090 = vshrl.u32 %v1089, 7
    %v1091 = vsub.s32 1, %v1090
    %v1092 = vrot.slane %v916, %v1091
    %v1103 = vmul.f32 %v1041, %v1056
    %v1104 = vmul.f32 %v1042, %v1060
    %v1105 = vmul.f32 %v1043, %v1064
    %v1106 = vmul.f32 %v1044, %v1068
    %v1107 = vmul.f32 %v1045, %v1072
    %v1108 = vmul.f32 %v1046, %v1076
    %v1109 = vmul.f32 %v1047, %v1080
    %v1110 = vmul.f32 %v1048, %v1084
    %v1111 = vmul.f32 %v1049, %v1088
    %v1112 = vmul.f32 %v1050, %v1092
    %v1113 = vadd.f32 %v904, %v1103
    %v1114 = vadd.f32 %v1113, %v1104
    %v1115 = vadd.f32 %v1114, %v1105
    %v1116 = vadd.f32 %v1115, %v1106
    %v1117 = vadd.f32 %v1116, %v1107
    %v1118 = vadd.f32 %v1117, %v1108
    %v1119 = vadd.f32 %v1118, %v1109
    %v1120 = vadd.f32 %v1119, %v1110
    %v1121 = vadd.f32 %v1120, %v1111
    %v1122 = vadd.f32 %v1121, %v1112
    %s1123 = scalar_lea.vmem [#allocation3], 200
    %v1124 = vld [vmem:[%s1123] ss:$4 sm:$0xff]
    %s1125 = scalar_lea.vmem %s1123, 32 [#allocation3]
    %v1126 = vld [vmem:[%s1125] ss:$4 sm:$0x3]
    %s1127 = scalar_lea.vmem %s1123, 1 [#allocation3]
    %v1128 = vld [vmem:[%s1127] ss:$4 sm:$0xff]
    %s1129 = scalar_lea.vmem %s1123, 33 [#allocation3]
    %v1130 = vld [vmem:[%s1129] ss:$4 sm:$0x3]
    %s1131 = scalar_lea.vmem %s1123, 2 [#allocation3]
    %v1132 = vld [vmem:[%s1131] ss:$4 sm:$0xff]
    %s1133 = scalar_lea.vmem %s1123, 34 [#allocation3]
    %v1134 = vld [vmem:[%s1133] ss:$4 sm:$0x3]
    %v1137 = vlaneseq
    %v1138 = vshrl.u32 %v1137, 7
    %v1139 = vsub.s32 0, %v1138
    %v1140 = vrot.slane %v1124, %v1139
    %v1141 = vlaneseq
    %v1142 = vshrl.u32 %v1141, 7
    %v1143 = vsub.s32 1, %v1142
    %v1144 = vrot.slane %v1124, %v1143
    %v1145 = vlaneseq
    %v1146 = vshrl.u32 %v1145, 7
    %v1147 = vsub.s32 2, %v1146
    %v1148 = vrot.slane %v1124, %v1147
    %v1149 = vlaneseq
    %v1150 = vshrl.u32 %v1149, 7
    %v1151 = vsub.s32 3, %v1150
    %v1152 = vrot.slane %v1124, %v1151
    %v1153 = vlaneseq
    %v1154 = vshrl.u32 %v1153, 7
    %v1155 = vsub.s32 4, %v1154
    %v1156 = vrot.slane %v1124, %v1155
    %v1157 = vlaneseq
    %v1158 = vshrl.u32 %v1157, 7
    %v1159 = vsub.s32 5, %v1158
    %v1160 = vrot.slane %v1124, %v1159
    %v1161 = vlaneseq
    %v1162 = vshrl.u32 %v1161, 7
    %v1163 = vsub.s32 6, %v1162
    %v1164 = vrot.slane %v1124, %v1163
    %v1165 = vlaneseq
    %v1166 = vshrl.u32 %v1165, 7
    %v1167 = vsub.s32 7, %v1166
    %v1168 = vrot.slane %v1124, %v1167
    %v1169 = vlaneseq
    %v1170 = vshrl.u32 %v1169, 7
    %v1171 = vsub.s32 0, %v1170
    %v1172 = vrot.slane %v1126, %v1171
    %v1173 = vlaneseq
    %v1174 = vshrl.u32 %v1173, 7
    %v1175 = vsub.s32 1, %v1174
    %v1176 = vrot.slane %v1126, %v1175
    %v1187 = vmul.f32 %v43, %v1140
    %v1188 = vmul.f32 %v43, %v1144
    %v1189 = vmul.f32 %v43, %v1148
    %v1190 = vmul.f32 %v43, %v1152
    %v1191 = vmul.f32 %v43, %v1156
    %v1192 = vmul.f32 %v43, %v1160
    %v1193 = vmul.f32 %v43, %v1164
    %v1194 = vmul.f32 %v43, %v1168
    %v1195 = vmul.f32 %v43, %v1172
    %v1196 = vmul.f32 %v43, %v1176
    %v1199 = vlaneseq
    %v1200 = vshrl.u32 %v1199, 7
    %v1201 = vsub.s32 0, %v1200
    %v1202 = vrot.slane %v1128, %v1201
    %v1203 = vlaneseq
    %v1204 = vshrl.u32 %v1203, 7
    %v1205 = vsub.s32 1, %v1204
    %v1206 = vrot.slane %v1128, %v1205
    %v1207 = vlaneseq
    %v1208 = vshrl.u32 %v1207, 7
    %v1209 = vsub.s32 2, %v1208
    %v1210 = vrot.slane %v1128, %v1209
    %v1211 = vlaneseq
    %v1212 = vshrl.u32 %v1211, 7
    %v1213 = vsub.s32 3, %v1212
    %v1214 = vrot.slane %v1128, %v1213
    %v1215 = vlaneseq
    %v1216 = vshrl.u32 %v1215, 7
    %v1217 = vsub.s32 4, %v1216
    %v1218 = vrot.slane %v1128, %v1217
    %v1219 = vlaneseq
    %v1220 = vshrl.u32 %v1219, 7
    %v1221 = vsub.s32 5, %v1220
    %v1222 = vrot.slane %v1128, %v1221
    %v1223 = vlaneseq
    %v1224 = vshrl.u32 %v1223, 7
    %v1225 = vsub.s32 6, %v1224
    %v1226 = vrot.slane %v1128, %v1225
    %v1227 = vlaneseq
    %v1228 = vshrl.u32 %v1227, 7
    %v1229 = vsub.s32 7, %v1228
    %v1230 = vrot.slane %v1128, %v1229
    %v1231 = vlaneseq
    %v1232 = vshrl.u32 %v1231, 7
    %v1233 = vsub.s32 0, %v1232
    %v1234 = vrot.slane %v1130, %v1233
    %v1235 = vlaneseq
    %v1236 = vshrl.u32 %v1235, 7
    %v1237 = vsub.s32 1, %v1236
    %v1238 = vrot.slane %v1130, %v1237
    %v1249 = vadd.f32 %v1187, %v1202
    %v1250 = vadd.f32 %v1188, %v1206
    %v1251 = vadd.f32 %v1189, %v1210
    %v1252 = vadd.f32 %v1190, %v1214
    %v1253 = vadd.f32 %v1191, %v1218
    %v1254 = vadd.f32 %v1192, %v1222
    %v1255 = vadd.f32 %v1193, %v1226
    %v1256 = vadd.f32 %v1194, %v1230
    %v1257 = vadd.f32 %v1195, %v1234
    %v1258 = vadd.f32 %v1196, %v1238
    %v1259 = vmax.f32 %v1249, 0.0
    %v1260 = vmax.f32 %v1250, 0.0
    %v1261 = vmax.f32 %v1251, 0.0
    %v1262 = vmax.f32 %v1252, 0.0
    %v1263 = vmax.f32 %v1253, 0.0
    %v1264 = vmax.f32 %v1254, 0.0
    %v1265 = vmax.f32 %v1255, 0.0
    %v1266 = vmax.f32 %v1256, 0.0
    %v1267 = vmax.f32 %v1257, 0.0
    %v1268 = vmax.f32 %v1258, 0.0
    %v1271 = vlaneseq
    %v1272 = vshrl.u32 %v1271, 7
    %v1273 = vsub.s32 0, %v1272
    %v1274 = vrot.slane %v1132, %v1273
    %v1275 = vlaneseq
    %v1276 = vshrl.u32 %v1275, 7
    %v1277 = vsub.s32 1, %v1276
    %v1278 = vrot.slane %v1132, %v1277
    %v1279 = vlaneseq
    %v1280 = vshrl.u32 %v1279, 7
    %v1281 = vsub.s32 2, %v1280
    %v1282 = vrot.slane %v1132, %v1281
    %v1283 = vlaneseq
    %v1284 = vshrl.u32 %v1283, 7
    %v1285 = vsub.s32 3, %v1284
    %v1286 = vrot.slane %v1132, %v1285
    %v1287 = vlaneseq
    %v1288 = vshrl.u32 %v1287, 7
    %v1289 = vsub.s32 4, %v1288
    %v1290 = vrot.slane %v1132, %v1289
    %v1291 = vlaneseq
    %v1292 = vshrl.u32 %v1291, 7
    %v1293 = vsub.s32 5, %v1292
    %v1294 = vrot.slane %v1132, %v1293
    %v1295 = vlaneseq
    %v1296 = vshrl.u32 %v1295, 7
    %v1297 = vsub.s32 6, %v1296
    %v1298 = vrot.slane %v1132, %v1297
    %v1299 = vlaneseq
    %v1300 = vshrl.u32 %v1299, 7
    %v1301 = vsub.s32 7, %v1300
    %v1302 = vrot.slane %v1132, %v1301
    %v1303 = vlaneseq
    %v1304 = vshrl.u32 %v1303, 7
    %v1305 = vsub.s32 0, %v1304
    %v1306 = vrot.slane %v1134, %v1305
    %v1307 = vlaneseq
    %v1308 = vshrl.u32 %v1307, 7
    %v1309 = vsub.s32 1, %v1308
    %v1310 = vrot.slane %v1134, %v1309
    %v1321 = vmul.f32 %v1259, %v1274
    %v1322 = vmul.f32 %v1260, %v1278
    %v1323 = vmul.f32 %v1261, %v1282
    %v1324 = vmul.f32 %v1262, %v1286
    %v1325 = vmul.f32 %v1263, %v1290
    %v1326 = vmul.f32 %v1264, %v1294
    %v1327 = vmul.f32 %v1265, %v1298
    %v1328 = vmul.f32 %v1266, %v1302
    %v1329 = vmul.f32 %v1267, %v1306
    %v1330 = vmul.f32 %v1268, %v1310
    %v1331 = vadd.f32 %v1122, %v1321
    %v1332 = vadd.f32 %v1331, %v1322
    %v1333 = vadd.f32 %v1332, %v1323
    %v1334 = vadd.f32 %v1333, %v1324
    %v1335 = vadd.f32 %v1334, %v1325
    %v1336 = vadd.f32 %v1335, %v1326
    %v1337 = vadd.f32 %v1336, %v1327
    %v1338 = vadd.f32 %v1337, %v1328
    %v1339 = vadd.f32 %v1338, %v1329
    %v1340 = vadd.f32 %v1339, %v1330
    %s1341 = scalar_lea.vmem [#allocation3], 240
    %v1342 = vld [vmem:[%s1341] ss:$4 sm:$0xff]
    %s1343 = scalar_lea.vmem %s1341, 32 [#allocation3]
    %v1344 = vld [vmem:[%s1343] ss:$4 sm:$0x3]
    %s1345 = scalar_lea.vmem %s1341, 1 [#allocation3]
    %v1346 = vld [vmem:[%s1345] ss:$4 sm:$0xff]
    %s1347 = scalar_lea.vmem %s1341, 33 [#allocation3]
    %v1348 = vld [vmem:[%s1347] ss:$4 sm:$0x3]
    %s1349 = scalar_lea.vmem %s1341, 2 [#allocation3]
    %v1350 = vld [vmem:[%s1349] ss:$4 sm:$0xff]
    %s1351 = scalar_lea.vmem %s1341, 34 [#allocation3]
    %v1352 = vld [vmem:[%s1351] ss:$4 sm:$0x3]
    %v1355 = vlaneseq
    %v1356 = vshrl.u32 %v1355, 7
    %v1357 = vsub.s32 0, %v1356
    %v1358 = vrot.slane %v1342, %v1357
    %v1359 = vlaneseq
    %v1360 = vshrl.u32 %v1359, 7
    %v1361 = vsub.s32 1, %v1360
    %v1362 = vrot.slane %v1342, %v1361
    %v1363 = vlaneseq
    %v1364 = vshrl.u32 %v1363, 7
    %v1365 = vsub.s32 2, %v1364
    %v1366 = vrot.slane %v1342, %v1365
    %v1367 = vlaneseq
    %v1368 = vshrl.u32 %v1367, 7
    %v1369 = vsub.s32 3, %v1368
    %v1370 = vrot.slane %v1342, %v1369
    %v1371 = vlaneseq
    %v1372 = vshrl.u32 %v1371, 7
    %v1373 = vsub.s32 4, %v1372
    %v1374 = vrot.slane %v1342, %v1373
    %v1375 = vlaneseq
    %v1376 = vshrl.u32 %v1375, 7
    %v1377 = vsub.s32 5, %v1376
    %v1378 = vrot.slane %v1342, %v1377
    %v1379 = vlaneseq
    %v1380 = vshrl.u32 %v1379, 7
    %v1381 = vsub.s32 6, %v1380
    %v1382 = vrot.slane %v1342, %v1381
    %v1383 = vlaneseq
    %v1384 = vshrl.u32 %v1383, 7
    %v1385 = vsub.s32 7, %v1384
    %v1386 = vrot.slane %v1342, %v1385
    %v1387 = vlaneseq
    %v1388 = vshrl.u32 %v1387, 7
    %v1389 = vsub.s32 0, %v1388
    %v1390 = vrot.slane %v1344, %v1389
    %v1391 = vlaneseq
    %v1392 = vshrl.u32 %v1391, 7
    %v1393 = vsub.s32 1, %v1392
    %v1394 = vrot.slane %v1344, %v1393
    %v1405 = vmul.f32 %v43, %v1358
    %v1406 = vmul.f32 %v43, %v1362
    %v1407 = vmul.f32 %v43, %v1366
    %v1408 = vmul.f32 %v43, %v1370
    %v1409 = vmul.f32 %v43, %v1374
    %v1410 = vmul.f32 %v43, %v1378
    %v1411 = vmul.f32 %v43, %v1382
    %v1412 = vmul.f32 %v43, %v1386
    %v1413 = vmul.f32 %v43, %v1390
    %v1414 = vmul.f32 %v43, %v1394
    %v1417 = vlaneseq
    %v1418 = vshrl.u32 %v1417, 7
    %v1419 = vsub.s32 0, %v1418
    %v1420 = vrot.slane %v1346, %v1419
    %v1421 = vlaneseq
    %v1422 = vshrl.u32 %v1421, 7
    %v1423 = vsub.s32 1, %v1422
    %v1424 = vrot.slane %v1346, %v1423
    %v1425 = vlaneseq
    %v1426 = vshrl.u32 %v1425, 7
    %v1427 = vsub.s32 2, %v1426
    %v1428 = vrot.slane %v1346, %v1427
    %v1429 = vlaneseq
    %v1430 = vshrl.u32 %v1429, 7
    %v1431 = vsub.s32 3, %v1430
    %v1432 = vrot.slane %v1346, %v1431
    %v1433 = vlaneseq
    %v1434 = vshrl.u32 %v1433, 7
    %v1435 = vsub.s32 4, %v1434
    %v1436 = vrot.slane %v1346, %v1435
    %v1437 = vlaneseq
    %v1438 = vshrl.u32 %v1437, 7
    %v1439 = vsub.s32 5, %v1438
    %v1440 = vrot.slane %v1346, %v1439
    %v1441 = vlaneseq
    %v1442 = vshrl.u32 %v1441, 7
    %v1443 = vsub.s32 6, %v1442
    %v1444 = vrot.slane %v1346, %v1443
    %v1445 = vlaneseq
    %v1446 = vshrl.u32 %v1445, 7
    %v1447 = vsub.s32 7, %v1446
    %v1448 = vrot.slane %v1346, %v1447
    %v1449 = vlaneseq
    %v1450 = vshrl.u32 %v1449, 7
    %v1451 = vsub.s32 0, %v1450
    %v1452 = vrot.slane %v1348, %v1451
    %v1453 = vlaneseq
    %v1454 = vshrl.u32 %v1453, 7
    %v1455 = vsub.s32 1, %v1454
    %v1456 = vrot.slane %v1348, %v1455
    %v1467 = vadd.f32 %v1405, %v1420
    %v1468 = vadd.f32 %v1406, %v1424
    %v1469 = vadd.f32 %v1407, %v1428
    %v1470 = vadd.f32 %v1408, %v1432
    %v1471 = vadd.f32 %v1409, %v1436
    %v1472 = vadd.f32 %v1410, %v1440
    %v1473 = vadd.f32 %v1411, %v1444
    %v1474 = vadd.f32 %v1412, %v1448
    %v1475 = vadd.f32 %v1413, %v1452
    %v1476 = vadd.f32 %v1414, %v1456
    %v1477 = vmax.f32 %v1467, 0.0
    %v1478 = vmax.f32 %v1468, 0.0
    %v1479 = vmax.f32 %v1469, 0.0
    %v1480 = vmax.f32 %v1470, 0.0
    %v1481 = vmax.f32 %v1471, 0.0
    %v1482 = vmax.f32 %v1472, 0.0
    %v1483 = vmax.f32 %v1473, 0.0
    %v1484 = vmax.f32 %v1474, 0.0
    %v1485 = vmax.f32 %v1475, 0.0
    %v1486 = vmax.f32 %v1476, 0.0
    %v1489 = vlaneseq
    %v1490 = vshrl.u32 %v1489, 7
    %v1491 = vsub.s32 0, %v1490
    %v1492 = vrot.slane %v1350, %v1491
    %v1493 = vlaneseq
    %v1494 = vshrl.u32 %v1493, 7
    %v1495 = vsub.s32 1, %v1494
    %v1496 = vrot.slane %v1350, %v1495
    %v1497 = vlaneseq
    %v1498 = vshrl.u32 %v1497, 7
    %v1499 = vsub.s32 2, %v1498
    %v1500 = vrot.slane %v1350, %v1499
    %v1501 = vlaneseq
    %v1502 = vshrl.u32 %v1501, 7
    %v1503 = vsub.s32 3, %v1502
    %v1504 = vrot.slane %v1350, %v1503
    %v1505 = vlaneseq
    %v1506 = vshrl.u32 %v1505, 7
    %v1507 = vsub.s32 4, %v1506
    %v1508 = vrot.slane %v1350, %v1507
    %v1509 = vlaneseq
    %v1510 = vshrl.u32 %v1509, 7
    %v1511 = vsub.s32 5, %v1510
    %v1512 = vrot.slane %v1350, %v1511
    %v1513 = vlaneseq
    %v1514 = vshrl.u32 %v1513, 7
    %v1515 = vsub.s32 6, %v1514
    %v1516 = vrot.slane %v1350, %v1515
    %v1517 = vlaneseq
    %v1518 = vshrl.u32 %v1517, 7
    %v1519 = vsub.s32 7, %v1518
    %v1520 = vrot.slane %v1350, %v1519
    %v1521 = vlaneseq
    %v1522 = vshrl.u32 %v1521, 7
    %v1523 = vsub.s32 0, %v1522
    %v1524 = vrot.slane %v1352, %v1523
    %v1525 = vlaneseq
    %v1526 = vshrl.u32 %v1525, 7
    %v1527 = vsub.s32 1, %v1526
    %v1528 = vrot.slane %v1352, %v1527
    %v1539 = vmul.f32 %v1477, %v1492
    %v1540 = vmul.f32 %v1478, %v1496
    %v1541 = vmul.f32 %v1479, %v1500
    %v1542 = vmul.f32 %v1480, %v1504
    %v1543 = vmul.f32 %v1481, %v1508
    %v1544 = vmul.f32 %v1482, %v1512
    %v1545 = vmul.f32 %v1483, %v1516
    %v1546 = vmul.f32 %v1484, %v1520
    %v1547 = vmul.f32 %v1485, %v1524
    %v1548 = vmul.f32 %v1486, %v1528
    %v1549 = vadd.f32 %v1340, %v1539
    %v1550 = vadd.f32 %v1549, %v1540
    %v1551 = vadd.f32 %v1550, %v1541
    %v1552 = vadd.f32 %v1551, %v1542
    %v1553 = vadd.f32 %v1552, %v1543
    %v1554 = vadd.f32 %v1553, %v1544
    %v1555 = vadd.f32 %v1554, %v1545
    %v1556 = vadd.f32 %v1555, %v1546
    %v1557 = vadd.f32 %v1556, %v1547
    %v1558 = vadd.f32 %v1557, %v1548
    %s1559 = scalar_lea.vmem [#allocation3], 280
    %v1560 = vld [vmem:[%s1559] ss:$4 sm:$0xff]
    %s1561 = scalar_lea.vmem %s1559, 32 [#allocation3]
    %v1562 = vld [vmem:[%s1561] ss:$4 sm:$0x3]
    %s1563 = scalar_lea.vmem %s1559, 1 [#allocation3]
    %v1564 = vld [vmem:[%s1563] ss:$4 sm:$0xff]
    %s1565 = scalar_lea.vmem %s1559, 33 [#allocation3]
    %v1566 = vld [vmem:[%s1565] ss:$4 sm:$0x3]
    %s1567 = scalar_lea.vmem %s1559, 2 [#allocation3]
    %v1568 = vld [vmem:[%s1567] ss:$4 sm:$0xff]
    %s1569 = scalar_lea.vmem %s1559, 34 [#allocation3]
    %v1570 = vld [vmem:[%s1569] ss:$4 sm:$0x3]
    %v1573 = vlaneseq
    %v1574 = vshrl.u32 %v1573, 7
    %v1575 = vsub.s32 0, %v1574
    %v1576 = vrot.slane %v1560, %v1575
    %v1577 = vlaneseq
    %v1578 = vshrl.u32 %v1577, 7
    %v1579 = vsub.s32 1, %v1578
    %v1580 = vrot.slane %v1560, %v1579
    %v1581 = vlaneseq
    %v1582 = vshrl.u32 %v1581, 7
    %v1583 = vsub.s32 2, %v1582
    %v1584 = vrot.slane %v1560, %v1583
    %v1585 = vlaneseq
    %v1586 = vshrl.u32 %v1585, 7
    %v1587 = vsub.s32 3, %v1586
    %v1588 = vrot.slane %v1560, %v1587
    %v1589 = vlaneseq
    %v1590 = vshrl.u32 %v1589, 7
    %v1591 = vsub.s32 4, %v1590
    %v1592 = vrot.slane %v1560, %v1591
    %v1593 = vlaneseq
    %v1594 = vshrl.u32 %v1593, 7
    %v1595 = vsub.s32 5, %v1594
    %v1596 = vrot.slane %v1560, %v1595
    %v1597 = vlaneseq
    %v1598 = vshrl.u32 %v1597, 7
    %v1599 = vsub.s32 6, %v1598
    %v1600 = vrot.slane %v1560, %v1599
    %v1601 = vlaneseq
    %v1602 = vshrl.u32 %v1601, 7
    %v1603 = vsub.s32 7, %v1602
    %v1604 = vrot.slane %v1560, %v1603
    %v1605 = vlaneseq
    %v1606 = vshrl.u32 %v1605, 7
    %v1607 = vsub.s32 0, %v1606
    %v1608 = vrot.slane %v1562, %v1607
    %v1609 = vlaneseq
    %v1610 = vshrl.u32 %v1609, 7
    %v1611 = vsub.s32 1, %v1610
    %v1612 = vrot.slane %v1562, %v1611
    %v1623 = vmul.f32 %v43, %v1576
    %v1624 = vmul.f32 %v43, %v1580
    %v1625 = vmul.f32 %v43, %v1584
    %v1626 = vmul.f32 %v43, %v1588
    %v1627 = vmul.f32 %v43, %v1592
    %v1628 = vmul.f32 %v43, %v1596
    %v1629 = vmul.f32 %v43, %v1600
    %v1630 = vmul.f32 %v43, %v1604
    %v1631 = vmul.f32 %v43, %v1608
    %v1632 = vmul.f32 %v43, %v1612
    %v1635 = vlaneseq
    %v1636 = vshrl.u32 %v1635, 7
    %v1637 = vsub.s32 0, %v1636
    %v1638 = vrot.slane %v1564, %v1637
    %v1639 = vlaneseq
    %v1640 = vshrl.u32 %v1639, 7
    %v1641 = vsub.s32 1, %v1640
    %v1642 = vrot.slane %v1564, %v1641
    %v1643 = vlaneseq
    %v1644 = vshrl.u32 %v1643, 7
    %v1645 = vsub.s32 2, %v1644
    %v1646 = vrot.slane %v1564, %v1645
    %v1647 = vlaneseq
    %v1648 = vshrl.u32 %v1647, 7
    %v1649 = vsub.s32 3, %v1648
    %v1650 = vrot.slane %v1564, %v1649
    %v1651 = vlaneseq
    %v1652 = vshrl.u32 %v1651, 7
    %v1653 = vsub.s32 4, %v1652
    %v1654 = vrot.slane %v1564, %v1653
    %v1655 = vlaneseq
    %v1656 = vshrl.u32 %v1655, 7
    %v1657 = vsub.s32 5, %v1656
    %v1658 = vrot.slane %v1564, %v1657
    %v1659 = vlaneseq
    %v1660 = vshrl.u32 %v1659, 7
    %v1661 = vsub.s32 6, %v1660
    %v1662 = vrot.slane %v1564, %v1661
    %v1663 = vlaneseq
    %v1664 = vshrl.u32 %v1663, 7
    %v1665 = vsub.s32 7, %v1664
    %v1666 = vrot.slane %v1564, %v1665
    %v1667 = vlaneseq
    %v1668 = vshrl.u32 %v1667, 7
    %v1669 = vsub.s32 0, %v1668
    %v1670 = vrot.slane %v1566, %v1669
    %v1671 = vlaneseq
    %v1672 = vshrl.u32 %v1671, 7
    %v1673 = vsub.s32 1, %v1672
    %v1674 = vrot.slane %v1566, %v1673
    %v1685 = vadd.f32 %v1623, %v1638
    %v1686 = vadd.f32 %v1624, %v1642
    %v1687 = vadd.f32 %v1625, %v1646
    %v1688 = vadd.f32 %v1626, %v1650
    %v1689 = vadd.f32 %v1627, %v1654
    %v1690 = vadd.f32 %v1628, %v1658
    %v1691 = vadd.f32 %v1629, %v1662
    %v1692 = vadd.f32 %v1630, %v1666
    %v1693 = vadd.f32 %v1631, %v1670
    %v1694 = vadd.f32 %v1632, %v1674
    %v1695 = vmax.f32 %v1685, 0.0
    %v1696 = vmax.f32 %v1686, 0.0
    %v1697 = vmax.f32 %v1687, 0.0
    %v1698 = vmax.f32 %v1688, 0.0
    %v1699 = vmax.f32 %v1689, 0.0
    %v1700 = vmax.f32 %v1690, 0.0
    %v1701 = vmax.f32 %v1691, 0.0
    %v1702 = vmax.f32 %v1692, 0.0
    %v1703 = vmax.f32 %v1693, 0.0
    %v1704 = vmax.f32 %v1694, 0.0
    %v1707 = vlaneseq
    %v1708 = vshrl.u32 %v1707, 7
    %v1709 = vsub.s32 0, %v1708
    %v1710 = vrot.slane %v1568, %v1709
    %v1711 = vlaneseq
    %v1712 = vshrl.u32 %v1711, 7
    %v1713 = vsub.s32 1, %v1712
    %v1714 = vrot.slane %v1568, %v1713
    %v1715 = vlaneseq
    %v1716 = vshrl.u32 %v1715, 7
    %v1717 = vsub.s32 2, %v1716
    %v1718 = vrot.slane %v1568, %v1717
    %v1719 = vlaneseq
    %v1720 = vshrl.u32 %v1719, 7
    %v1721 = vsub.s32 3, %v1720
    %v1722 = vrot.slane %v1568, %v1721
    %v1723 = vlaneseq
    %v1724 = vshrl.u32 %v1723, 7
    %v1725 = vsub.s32 4, %v1724
    %v1726 = vrot.slane %v1568, %v1725
    %v1727 = vlaneseq
    %v1728 = vshrl.u32 %v1727, 7
    %v1729 = vsub.s32 5, %v1728
    %v1730 = vrot.slane %v1568, %v1729
    %v1731 = vlaneseq
    %v1732 = vshrl.u32 %v1731, 7
    %v1733 = vsub.s32 6, %v1732
    %v1734 = vrot.slane %v1568, %v1733
    %v1735 = vlaneseq
    %v1736 = vshrl.u32 %v1735, 7
    %v1737 = vsub.s32 7, %v1736
    %v1738 = vrot.slane %v1568, %v1737
    %v1739 = vlaneseq
    %v1740 = vshrl.u32 %v1739, 7
    %v1741 = vsub.s32 0, %v1740
    %v1742 = vrot.slane %v1570, %v1741
    %v1743 = vlaneseq
    %v1744 = vshrl.u32 %v1743, 7
    %v1745 = vsub.s32 1, %v1744
    %v1746 = vrot.slane %v1570, %v1745
    %v1757 = vmul.f32 %v1695, %v1710
    %v1758 = vmul.f32 %v1696, %v1714
    %v1759 = vmul.f32 %v1697, %v1718
    %v1760 = vmul.f32 %v1698, %v1722
    %v1761 = vmul.f32 %v1699, %v1726
    %v1762 = vmul.f32 %v1700, %v1730
    %v1763 = vmul.f32 %v1701, %v1734
    %v1764 = vmul.f32 %v1702, %v1738
    %v1765 = vmul.f32 %v1703, %v1742
    %v1766 = vmul.f32 %v1704, %v1746
    %v1767 = vadd.f32 %v1558, %v1757
    %v1768 = vadd.f32 %v1767, %v1758
    %v1769 = vadd.f32 %v1768, %v1759
    %v1770 = vadd.f32 %v1769, %v1760
    %v1771 = vadd.f32 %v1770, %v1761
    %v1772 = vadd.f32 %v1771, %v1762
    %v1773 = vadd.f32 %v1772, %v1763
    %v1774 = vadd.f32 %v1773, %v1764
    %v1775 = vadd.f32 %v1774, %v1765
    %v1776 = vadd.f32 %v1775, %v1766
    %s1777 = scalar_lea.vmem [#allocation3], 320
    %v1778 = vld [vmem:[%s1777] ss:$4 sm:$0xff]
    %s1779 = scalar_lea.vmem %s1777, 32 [#allocation3]
    %v1780 = vld [vmem:[%s1779] ss:$4 sm:$0x3]
    %s1781 = scalar_lea.vmem %s1777, 1 [#allocation3]
    %v1782 = vld [vmem:[%s1781] ss:$4 sm:$0xff]
    %s1783 = scalar_lea.vmem %s1777, 33 [#allocation3]
    %v1784 = vld [vmem:[%s1783] ss:$4 sm:$0x3]
    %s1785 = scalar_lea.vmem %s1777, 2 [#allocation3]
    %v1786 = vld [vmem:[%s1785] ss:$4 sm:$0xff]
    %s1787 = scalar_lea.vmem %s1777, 34 [#allocation3]
    %v1788 = vld [vmem:[%s1787] ss:$4 sm:$0x3]
    %v1791 = vlaneseq
    %v1792 = vshrl.u32 %v1791, 7
    %v1793 = vsub.s32 0, %v1792
    %v1794 = vrot.slane %v1778, %v1793
    %v1795 = vlaneseq
    %v1796 = vshrl.u32 %v1795, 7
    %v1797 = vsub.s32 1, %v1796
    %v1798 = vrot.slane %v1778, %v1797
    %v1799 = vlaneseq
    %v1800 = vshrl.u32 %v1799, 7
    %v1801 = vsub.s32 2, %v1800
    %v1802 = vrot.slane %v1778, %v1801
    %v1803 = vlaneseq
    %v1804 = vshrl.u32 %v1803, 7
    %v1805 = vsub.s32 3, %v1804
    %v1806 = vrot.slane %v1778, %v1805
    %v1807 = vlaneseq
    %v1808 = vshrl.u32 %v1807, 7
    %v1809 = vsub.s32 4, %v1808
    %v1810 = vrot.slane %v1778, %v1809
    %v1811 = vlaneseq
    %v1812 = vshrl.u32 %v1811, 7
    %v1813 = vsub.s32 5, %v1812
    %v1814 = vrot.slane %v1778, %v1813
    %v1815 = vlaneseq
    %v1816 = vshrl.u32 %v1815, 7
    %v1817 = vsub.s32 6, %v1816
    %v1818 = vrot.slane %v1778, %v1817
    %v1819 = vlaneseq
    %v1820 = vshrl.u32 %v1819, 7
    %v1821 = vsub.s32 7, %v1820
    %v1822 = vrot.slane %v1778, %v1821
    %v1823 = vlaneseq
    %v1824 = vshrl.u32 %v1823, 7
    %v1825 = vsub.s32 0, %v1824
    %v1826 = vrot.slane %v1780, %v1825
    %v1827 = vlaneseq
    %v1828 = vshrl.u32 %v1827, 7
    %v1829 = vsub.s32 1, %v1828
    %v1830 = vrot.slane %v1780, %v1829
    %v1841 = vmul.f32 %v43, %v1794
    %v1842 = vmul.f32 %v43, %v1798
    %v1843 = vmul.f32 %v43, %v1802
    %v1844 = vmul.f32 %v43, %v1806
    %v1845 = vmul.f32 %v43, %v1810
    %v1846 = vmul.f32 %v43, %v1814
    %v1847 = vmul.f32 %v43, %v1818
    %v1848 = vmul.f32 %v43, %v1822
    %v1849 = vmul.f32 %v43, %v1826
    %v1850 = vmul.f32 %v43, %v1830
    %v1853 = vlaneseq
    %v1854 = vshrl.u32 %v1853, 7
    %v1855 = vsub.s32 0, %v1854
    %v1856 = vrot.slane %v1782, %v1855
    %v1857 = vlaneseq
    %v1858 = vshrl.u32 %v1857, 7
    %v1859 = vsub.s32 1, %v1858
    %v1860 = vrot.slane %v1782, %v1859
    %v1861 = vlaneseq
    %v1862 = vshrl.u32 %v1861, 7
    %v1863 = vsub.s32 2, %v1862
    %v1864 = vrot.slane %v1782, %v1863
    %v1865 = vlaneseq
    %v1866 = vshrl.u32 %v1865, 7
    %v1867 = vsub.s32 3, %v1866
    %v1868 = vrot.slane %v1782, %v1867
    %v1869 = vlaneseq
    %v1870 = vshrl.u32 %v1869, 7
    %v1871 = vsub.s32 4, %v1870
    %v1872 = vrot.slane %v1782, %v1871
    %v1873 = vlaneseq
    %v1874 = vshrl.u32 %v1873, 7
    %v1875 = vsub.s32 5, %v1874
    %v1876 = vrot.slane %v1782, %v1875
    %v1877 = vlaneseq
    %v1878 = vshrl.u32 %v1877, 7
    %v1879 = vsub.s32 6, %v1878
    %v1880 = vrot.slane %v1782, %v1879
    %v1881 = vlaneseq
    %v1882 = vshrl.u32 %v1881, 7
    %v1883 = vsub.s32 7, %v1882
    %v1884 = vrot.slane %v1782, %v1883
    %v1885 = vlaneseq
    %v1886 = vshrl.u32 %v1885, 7
    %v1887 = vsub.s32 0, %v1886
    %v1888 = vrot.slane %v1784, %v1887
    %v1889 = vlaneseq
    %v1890 = vshrl.u32 %v1889, 7
    %v1891 = vsub.s32 1, %v1890
    %v1892 = vrot.slane %v1784, %v1891
    %v1903 = vadd.f32 %v1841, %v1856
    %v1904 = vadd.f32 %v1842, %v1860
    %v1905 = vadd.f32 %v1843, %v1864
    %v1906 = vadd.f32 %v1844, %v1868
    %v1907 = vadd.f32 %v1845, %v1872
    %v1908 = vadd.f32 %v1846, %v1876
    %v1909 = vadd.f32 %v1847, %v1880
    %v1910 = vadd.f32 %v1848, %v1884
    %v1911 = vadd.f32 %v1849, %v1888
    %v1912 = vadd.f32 %v1850, %v1892
    %v1913 = vmax.f32 %v1903, 0.0
    %v1914 = vmax.f32 %v1904, 0.0
    %v1915 = vmax.f32 %v1905, 0.0
    %v1916 = vmax.f32 %v1906, 0.0
    %v1917 = vmax.f32 %v1907, 0.0
    %v1918 = vmax.f32 %v1908, 0.0
    %v1919 = vmax.f32 %v1909, 0.0
    %v1920 = vmax.f32 %v1910, 0.0
    %v1921 = vmax.f32 %v1911, 0.0
    %v1922 = vmax.f32 %v1912, 0.0
    %v1925 = vlaneseq
    %v1926 = vshrl.u32 %v1925, 7
    %v1927 = vsub.s32 0, %v1926
    %v1928 = vrot.slane %v1786, %v1927
    %v1929 = vlaneseq
    %v1930 = vshrl.u32 %v1929, 7
    %v1931 = vsub.s32 1, %v1930
    %v1932 = vrot.slane %v1786, %v1931
    %v1933 = vlaneseq
    %v1934 = vshrl.u32 %v1933, 7
    %v1935 = vsub.s32 2, %v1934
    %v1936 = vrot.slane %v1786, %v1935
    %v1937 = vlaneseq
    %v1938 = vshrl.u32 %v1937, 7
    %v1939 = vsub.s32 3, %v1938
    %v1940 = vrot.slane %v1786, %v1939
    %v1941 = vlaneseq
    %v1942 = vshrl.u32 %v1941, 7
    %v1943 = vsub.s32 4, %v1942
    %v1944 = vrot.slane %v1786, %v1943
    %v1945 = vlaneseq
    %v1946 = vshrl.u32 %v1945, 7
    %v1947 = vsub.s32 5, %v1946
    %v1948 = vrot.slane %v1786, %v1947
    %v1949 = vlaneseq
    %v1950 = vshrl.u32 %v1949, 7
    %v1951 = vsub.s32 6, %v1950
    %v1952 = vrot.slane %v1786, %v1951
    %v1953 = vlaneseq
    %v1954 = vshrl.u32 %v1953, 7
    %v1955 = vsub.s32 7, %v1954
    %v1956 = vrot.slane %v1786, %v1955
    %v1957 = vlaneseq
    %v1958 = vshrl.u32 %v1957, 7
    %v1959 = vsub.s32 0, %v1958
    %v1960 = vrot.slane %v1788, %v1959
    %v1961 = vlaneseq
    %v1962 = vshrl.u32 %v1961, 7
    %v1963 = vsub.s32 1, %v1962
    %v1964 = vrot.slane %v1788, %v1963
    %v1975 = vmul.f32 %v1913, %v1928
    %v1976 = vmul.f32 %v1914, %v1932
    %v1977 = vmul.f32 %v1915, %v1936
    %v1978 = vmul.f32 %v1916, %v1940
    %v1979 = vmul.f32 %v1917, %v1944
    %v1980 = vmul.f32 %v1918, %v1948
    %v1981 = vmul.f32 %v1919, %v1952
    %v1982 = vmul.f32 %v1920, %v1956
    %v1983 = vmul.f32 %v1921, %v1960
    %v1984 = vmul.f32 %v1922, %v1964
    %v1985 = vadd.f32 %v1776, %v1975
    %v1986 = vadd.f32 %v1985, %v1976
    %v1987 = vadd.f32 %v1986, %v1977
    %v1988 = vadd.f32 %v1987, %v1978
    %v1989 = vadd.f32 %v1988, %v1979
    %v1990 = vadd.f32 %v1989, %v1980
    %v1991 = vadd.f32 %v1990, %v1981
    %v1992 = vadd.f32 %v1991, %v1982
    %v1993 = vadd.f32 %v1992, %v1983
    %v1994 = vadd.f32 %v1993, %v1984
    %s1995 = scalar_lea.vmem [#allocation3], 360
    %v1996 = vld [vmem:[%s1995] ss:$4 sm:$0xff]
    %s1997 = scalar_lea.vmem %s1995, 32 [#allocation3]
    %v1998 = vld [vmem:[%s1997] ss:$4 sm:$0x3]
    %s1999 = scalar_lea.vmem %s1995, 1 [#allocation3]
    %v2000 = vld [vmem:[%s1999] ss:$4 sm:$0xff]
    %s2001 = scalar_lea.vmem %s1995, 33 [#allocation3]
    %v2002 = vld [vmem:[%s2001] ss:$4 sm:$0x3]
    %s2003 = scalar_lea.vmem %s1995, 2 [#allocation3]
    %v2004 = vld [vmem:[%s2003] ss:$4 sm:$0xff]
    %s2005 = scalar_lea.vmem %s1995, 34 [#allocation3]
    %v2006 = vld [vmem:[%s2005] ss:$4 sm:$0x3]
    %v2009 = vlaneseq
    %v2010 = vshrl.u32 %v2009, 7
    %v2011 = vsub.s32 0, %v2010
    %v2012 = vrot.slane %v1996, %v2011
    %v2013 = vlaneseq
    %v2014 = vshrl.u32 %v2013, 7
    %v2015 = vsub.s32 1, %v2014
    %v2016 = vrot.slane %v1996, %v2015
    %v2017 = vlaneseq
    %v2018 = vshrl.u32 %v2017, 7
    %v2019 = vsub.s32 2, %v2018
    %v2020 = vrot.slane %v1996, %v2019
    %v2021 = vlaneseq
    %v2022 = vshrl.u32 %v2021, 7
    %v2023 = vsub.s32 3, %v2022
    %v2024 = vrot.slane %v1996, %v2023
    %v2025 = vlaneseq
    %v2026 = vshrl.u32 %v2025, 7
    %v2027 = vsub.s32 4, %v2026
    %v2028 = vrot.slane %v1996, %v2027
    %v2029 = vlaneseq
    %v2030 = vshrl.u32 %v2029, 7
    %v2031 = vsub.s32 5, %v2030
    %v2032 = vrot.slane %v1996, %v2031
    %v2033 = vlaneseq
    %v2034 = vshrl.u32 %v2033, 7
    %v2035 = vsub.s32 6, %v2034
    %v2036 = vrot.slane %v1996, %v2035
    %v2037 = vlaneseq
    %v2038 = vshrl.u32 %v2037, 7
    %v2039 = vsub.s32 7, %v2038
    %v2040 = vrot.slane %v1996, %v2039
    %v2041 = vlaneseq
    %v2042 = vshrl.u32 %v2041, 7
    %v2043 = vsub.s32 0, %v2042
    %v2044 = vrot.slane %v1998, %v2043
    %v2045 = vlaneseq
    %v2046 = vshrl.u32 %v2045, 7
    %v2047 = vsub.s32 1, %v2046
    %v2048 = vrot.slane %v1998, %v2047
    %v2059 = vmul.f32 %v43, %v2012
    %v2060 = vmul.f32 %v43, %v2016
    %v2061 = vmul.f32 %v43, %v2020
    %v2062 = vmul.f32 %v43, %v2024
    %v2063 = vmul.f32 %v43, %v2028
    %v2064 = vmul.f32 %v43, %v2032
    %v2065 = vmul.f32 %v43, %v2036
    %v2066 = vmul.f32 %v43, %v2040
    %v2067 = vmul.f32 %v43, %v2044
    %v2068 = vmul.f32 %v43, %v2048
    %v2071 = vlaneseq
    %v2072 = vshrl.u32 %v2071, 7
    %v2073 = vsub.s32 0, %v2072
    %v2074 = vrot.slane %v2000, %v2073
    %v2075 = vlaneseq
    %v2076 = vshrl.u32 %v2075, 7
    %v2077 = vsub.s32 1, %v2076
    %v2078 = vrot.slane %v2000, %v2077
    %v2079 = vlaneseq
    %v2080 = vshrl.u32 %v2079, 7
    %v2081 = vsub.s32 2, %v2080
    %v2082 = vrot.slane %v2000, %v2081
    %v2083 = vlaneseq
    %v2084 = vshrl.u32 %v2083, 7
    %v2085 = vsub.s32 3, %v2084
    %v2086 = vrot.slane %v2000, %v2085
    %v2087 = vlaneseq
    %v2088 = vshrl.u32 %v2087, 7
    %v2089 = vsub.s32 4, %v2088
    %v2090 = vrot.slane %v2000, %v2089
    %v2091 = vlaneseq
    %v2092 = vshrl.u32 %v2091, 7
    %v2093 = vsub.s32 5, %v2092
    %v2094 = vrot.slane %v2000, %v2093
    %v2095 = vlaneseq
    %v2096 = vshrl.u32 %v2095, 7
    %v2097 = vsub.s32 6, %v2096
    %v2098 = vrot.slane %v2000, %v2097
    %v2099 = vlaneseq
    %v2100 = vshrl.u32 %v2099, 7
    %v2101 = vsub.s32 7, %v2100
    %v2102 = vrot.slane %v2000, %v2101
    %v2103 = vlaneseq
    %v2104 = vshrl.u32 %v2103, 7
    %v2105 = vsub.s32 0, %v2104
    %v2106 = vrot.slane %v2002, %v2105
    %v2107 = vlaneseq
    %v2108 = vshrl.u32 %v2107, 7
    %v2109 = vsub.s32 1, %v2108
    %v2110 = vrot.slane %v2002, %v2109
    %v2121 = vadd.f32 %v2059, %v2074
    %v2122 = vadd.f32 %v2060, %v2078
    %v2123 = vadd.f32 %v2061, %v2082
    %v2124 = vadd.f32 %v2062, %v2086
    %v2125 = vadd.f32 %v2063, %v2090
    %v2126 = vadd.f32 %v2064, %v2094
    %v2127 = vadd.f32 %v2065, %v2098
    %v2128 = vadd.f32 %v2066, %v2102
    %v2129 = vadd.f32 %v2067, %v2106
    %v2130 = vadd.f32 %v2068, %v2110
    %v2131 = vmax.f32 %v2121, 0.0
    %v2132 = vmax.f32 %v2122, 0.0
    %v2133 = vmax.f32 %v2123, 0.0
    %v2134 = vmax.f32 %v2124, 0.0
    %v2135 = vmax.f32 %v2125, 0.0
    %v2136 = vmax.f32 %v2126, 0.0
    %v2137 = vmax.f32 %v2127, 0.0
    %v2138 = vmax.f32 %v2128, 0.0
    %v2139 = vmax.f32 %v2129, 0.0
    %v2140 = vmax.f32 %v2130, 0.0
    %v2143 = vlaneseq
    %v2144 = vshrl.u32 %v2143, 7
    %v2145 = vsub.s32 0, %v2144
    %v2146 = vrot.slane %v2004, %v2145
    %v2147 = vlaneseq
    %v2148 = vshrl.u32 %v2147, 7
    %v2149 = vsub.s32 1, %v2148
    %v2150 = vrot.slane %v2004, %v2149
    %v2151 = vlaneseq
    %v2152 = vshrl.u32 %v2151, 7
    %v2153 = vsub.s32 2, %v2152
    %v2154 = vrot.slane %v2004, %v2153
    %v2155 = vlaneseq
    %v2156 = vshrl.u32 %v2155, 7
    %v2157 = vsub.s32 3, %v2156
    %v2158 = vrot.slane %v2004, %v2157
    %v2159 = vlaneseq
    %v2160 = vshrl.u32 %v2159, 7
    %v2161 = vsub.s32 4, %v2160
    %v2162 = vrot.slane %v2004, %v2161
    %v2163 = vlaneseq
    %v2164 = vshrl.u32 %v2163, 7
    %v2165 = vsub.s32 5, %v2164
    %v2166 = vrot.slane %v2004, %v2165
    %v2167 = vlaneseq
    %v2168 = vshrl.u32 %v2167, 7
    %v2169 = vsub.s32 6, %v2168
    %v2170 = vrot.slane %v2004, %v2169
    %v2171 = vlaneseq
    %v2172 = vshrl.u32 %v2171, 7
    %v2173 = vsub.s32 7, %v2172
    %v2174 = vrot.slane %v2004, %v2173
    %v2175 = vlaneseq
    %v2176 = vshrl.u32 %v2175, 7
    %v2177 = vsub.s32 0, %v2176
    %v2178 = vrot.slane %v2006, %v2177
    %v2179 = vlaneseq
    %v2180 = vshrl.u32 %v2179, 7
    %v2181 = vsub.s32 1, %v2180
    %v2182 = vrot.slane %v2006, %v2181
    %v2193 = vmul.f32 %v2131, %v2146
    %v2194 = vmul.f32 %v2132, %v2150
    %v2195 = vmul.f32 %v2133, %v2154
    %v2196 = vmul.f32 %v2134, %v2158
    %v2197 = vmul.f32 %v2135, %v2162
    %v2198 = vmul.f32 %v2136, %v2166
    %v2199 = vmul.f32 %v2137, %v2170
    %v2200 = vmul.f32 %v2138, %v2174
    %v2201 = vmul.f32 %v2139, %v2178
    %v2202 = vmul.f32 %v2140, %v2182
    %v2203 = vadd.f32 %v1994, %v2193
    %v2204 = vadd.f32 %v2203, %v2194
    %v2205 = vadd.f32 %v2204, %v2195
    %v2206 = vadd.f32 %v2205, %v2196
    %v2207 = vadd.f32 %v2206, %v2197
    %v2208 = vadd.f32 %v2207, %v2198
    %v2209 = vadd.f32 %v2208, %v2199
    %v2210 = vadd.f32 %v2209, %v2200
    %v2211 = vadd.f32 %v2210, %v2201
    %v2212 = vadd.f32 %v2211, %v2202
    %s2213 = scalar_lea.vmem [#allocation3], 400
    %v2214 = vld [vmem:[%s2213] ss:$4 sm:$0xff]
    %s2215 = scalar_lea.vmem %s2213, 32 [#allocation3]
    %v2216 = vld [vmem:[%s2215] ss:$4 sm:$0x3]
    %s2217 = scalar_lea.vmem %s2213, 1 [#allocation3]
    %v2218 = vld [vmem:[%s2217] ss:$4 sm:$0xff]
    %s2219 = scalar_lea.vmem %s2213, 33 [#allocation3]
    %v2220 = vld [vmem:[%s2219] ss:$4 sm:$0x3]
    %s2221 = scalar_lea.vmem %s2213, 2 [#allocation3]
    %v2222 = vld [vmem:[%s2221] ss:$4 sm:$0xff]
    %s2223 = scalar_lea.vmem %s2213, 34 [#allocation3]
    %v2224 = vld [vmem:[%s2223] ss:$4 sm:$0x3]
    %v2227 = vlaneseq
    %v2228 = vshrl.u32 %v2227, 7
    %v2229 = vsub.s32 0, %v2228
    %v2230 = vrot.slane %v2214, %v2229
    %v2231 = vlaneseq
    %v2232 = vshrl.u32 %v2231, 7
    %v2233 = vsub.s32 1, %v2232
    %v2234 = vrot.slane %v2214, %v2233
    %v2235 = vlaneseq
    %v2236 = vshrl.u32 %v2235, 7
    %v2237 = vsub.s32 2, %v2236
    %v2238 = vrot.slane %v2214, %v2237
    %v2239 = vlaneseq
    %v2240 = vshrl.u32 %v2239, 7
    %v2241 = vsub.s32 3, %v2240
    %v2242 = vrot.slane %v2214, %v2241
    %v2243 = vlaneseq
    %v2244 = vshrl.u32 %v2243, 7
    %v2245 = vsub.s32 4, %v2244
    %v2246 = vrot.slane %v2214, %v2245
    %v2247 = vlaneseq
    %v2248 = vshrl.u32 %v2247, 7
    %v2249 = vsub.s32 5, %v2248
    %v2250 = vrot.slane %v2214, %v2249
    %v2251 = vlaneseq
    %v2252 = vshrl.u32 %v2251, 7
    %v2253 = vsub.s32 6, %v2252
    %v2254 = vrot.slane %v2214, %v2253
    %v2255 = vlaneseq
    %v2256 = vshrl.u32 %v2255, 7
    %v2257 = vsub.s32 7, %v2256
    %v2258 = vrot.slane %v2214, %v2257
    %v2259 = vlaneseq
    %v2260 = vshrl.u32 %v2259, 7
    %v2261 = vsub.s32 0, %v2260
    %v2262 = vrot.slane %v2216, %v2261
    %v2263 = vlaneseq
    %v2264 = vshrl.u32 %v2263, 7
    %v2265 = vsub.s32 1, %v2264
    %v2266 = vrot.slane %v2216, %v2265
    %v2277 = vmul.f32 %v43, %v2230
    %v2278 = vmul.f32 %v43, %v2234
    %v2279 = vmul.f32 %v43, %v2238
    %v2280 = vmul.f32 %v43, %v2242
    %v2281 = vmul.f32 %v43, %v2246
    %v2282 = vmul.f32 %v43, %v2250
    %v2283 = vmul.f32 %v43, %v2254
    %v2284 = vmul.f32 %v43, %v2258
    %v2285 = vmul.f32 %v43, %v2262
    %v2286 = vmul.f32 %v43, %v2266
    %v2289 = vlaneseq
    %v2290 = vshrl.u32 %v2289, 7
    %v2291 = vsub.s32 0, %v2290
    %v2292 = vrot.slane %v2218, %v2291
    %v2293 = vlaneseq
    %v2294 = vshrl.u32 %v2293, 7
    %v2295 = vsub.s32 1, %v2294
    %v2296 = vrot.slane %v2218, %v2295
    %v2297 = vlaneseq
    %v2298 = vshrl.u32 %v2297, 7
    %v2299 = vsub.s32 2, %v2298
    %v2300 = vrot.slane %v2218, %v2299
    %v2301 = vlaneseq
    %v2302 = vshrl.u32 %v2301, 7
    %v2303 = vsub.s32 3, %v2302
    %v2304 = vrot.slane %v2218, %v2303
    %v2305 = vlaneseq
    %v2306 = vshrl.u32 %v2305, 7
    %v2307 = vsub.s32 4, %v2306
    %v2308 = vrot.slane %v2218, %v2307
    %v2309 = vlaneseq
    %v2310 = vshrl.u32 %v2309, 7
    %v2311 = vsub.s32 5, %v2310
    %v2312 = vrot.slane %v2218, %v2311
    %v2313 = vlaneseq
    %v2314 = vshrl.u32 %v2313, 7
    %v2315 = vsub.s32 6, %v2314
    %v2316 = vrot.slane %v2218, %v2315
    %v2317 = vlaneseq
    %v2318 = vshrl.u32 %v2317, 7
    %v2319 = vsub.s32 7, %v2318
    %v2320 = vrot.slane %v2218, %v2319
    %v2321 = vlaneseq
    %v2322 = vshrl.u32 %v2321, 7
    %v2323 = vsub.s32 0, %v2322
    %v2324 = vrot.slane %v2220, %v2323
    %v2325 = vlaneseq
    %v2326 = vshrl.u32 %v2325, 7
    %v2327 = vsub.s32 1, %v2326
    %v2328 = vrot.slane %v2220, %v2327
    %v2339 = vadd.f32 %v2277, %v2292
    %v2340 = vadd.f32 %v2278, %v2296
    %v2341 = vadd.f32 %v2279, %v2300
    %v2342 = vadd.f32 %v2280, %v2304
    %v2343 = vadd.f32 %v2281, %v2308
    %v2344 = vadd.f32 %v2282, %v2312
    %v2345 = vadd.f32 %v2283, %v2316
    %v2346 = vadd.f32 %v2284, %v2320
    %v2347 = vadd.f32 %v2285, %v2324
    %v2348 = vadd.f32 %v2286, %v2328
    %v2349 = vmax.f32 %v2339, 0.0
    %v2350 = vmax.f32 %v2340, 0.0
    %v2351 = vmax.f32 %v2341, 0.0
    %v2352 = vmax.f32 %v2342, 0.0
    %v2353 = vmax.f32 %v2343, 0.0
    %v2354 = vmax.f32 %v2344, 0.0
    %v2355 = vmax.f32 %v2345, 0.0
    %v2356 = vmax.f32 %v2346, 0.0
    %v2357 = vmax.f32 %v2347, 0.0
    %v2358 = vmax.f32 %v2348, 0.0
    %v2361 = vlaneseq
    %v2362 = vshrl.u32 %v2361, 7
    %v2363 = vsub.s32 0, %v2362
    %v2364 = vrot.slane %v2222, %v2363
    %v2365 = vlaneseq
    %v2366 = vshrl.u32 %v2365, 7
    %v2367 = vsub.s32 1, %v2366
    %v2368 = vrot.slane %v2222, %v2367
    %v2369 = vlaneseq
    %v2370 = vshrl.u32 %v2369, 7
    %v2371 = vsub.s32 2, %v2370
    %v2372 = vrot.slane %v2222, %v2371
    %v2373 = vlaneseq
    %v2374 = vshrl.u32 %v2373, 7
    %v2375 = vsub.s32 3, %v2374
    %v2376 = vrot.slane %v2222, %v2375
    %v2377 = vlaneseq
    %v2378 = vshrl.u32 %v2377, 7
    %v2379 = vsub.s32 4, %v2378
    %v2380 = vrot.slane %v2222, %v2379
    %v2381 = vlaneseq
    %v2382 = vshrl.u32 %v2381, 7
    %v2383 = vsub.s32 5, %v2382
    %v2384 = vrot.slane %v2222, %v2383
    %v2385 = vlaneseq
    %v2386 = vshrl.u32 %v2385, 7
    %v2387 = vsub.s32 6, %v2386
    %v2388 = vrot.slane %v2222, %v2387
    %v2389 = vlaneseq
    %v2390 = vshrl.u32 %v2389, 7
    %v2391 = vsub.s32 7, %v2390
    %v2392 = vrot.slane %v2222, %v2391
    %v2393 = vlaneseq
    %v2394 = vshrl.u32 %v2393, 7
    %v2395 = vsub.s32 0, %v2394
    %v2396 = vrot.slane %v2224, %v2395
    %v2397 = vlaneseq
    %v2398 = vshrl.u32 %v2397, 7
    %v2399 = vsub.s32 1, %v2398
    %v2400 = vrot.slane %v2224, %v2399
    %v2411 = vmul.f32 %v2349, %v2364
    %v2412 = vmul.f32 %v2350, %v2368
    %v2413 = vmul.f32 %v2351, %v2372
    %v2414 = vmul.f32 %v2352, %v2376
    %v2415 = vmul.f32 %v2353, %v2380
    %v2416 = vmul.f32 %v2354, %v2384
    %v2417 = vmul.f32 %v2355, %v2388
    %v2418 = vmul.f32 %v2356, %v2392
    %v2419 = vmul.f32 %v2357, %v2396
    %v2420 = vmul.f32 %v2358, %v2400
    %v2421 = vadd.f32 %v2212, %v2411
    %v2422 = vadd.f32 %v2421, %v2412
    %v2423 = vadd.f32 %v2422, %v2413
    %v2424 = vadd.f32 %v2423, %v2414
    %v2425 = vadd.f32 %v2424, %v2415
    %v2426 = vadd.f32 %v2425, %v2416
    %v2427 = vadd.f32 %v2426, %v2417
    %v2428 = vadd.f32 %v2427, %v2418
    %v2429 = vadd.f32 %v2428, %v2419
    %v2430 = vadd.f32 %v2429, %v2420
    %s2431 = scalar_lea.vmem [#allocation3], 440
    %v2432 = vld [vmem:[%s2431] ss:$4 sm:$0xff]
    %s2433 = scalar_lea.vmem %s2431, 32 [#allocation3]
    %v2434 = vld [vmem:[%s2433] ss:$4 sm:$0x3]
    %s2435 = scalar_lea.vmem %s2431, 1 [#allocation3]
    %v2436 = vld [vmem:[%s2435] ss:$4 sm:$0xff]
    %s2437 = scalar_lea.vmem %s2431, 33 [#allocation3]
    %v2438 = vld [vmem:[%s2437] ss:$4 sm:$0x3]
    %s2439 = scalar_lea.vmem %s2431, 2 [#allocation3]
    %v2440 = vld [vmem:[%s2439] ss:$4 sm:$0xff]
    %s2441 = scalar_lea.vmem %s2431, 34 [#allocation3]
    %v2442 = vld [vmem:[%s2441] ss:$4 sm:$0x3]
    %v2445 = vlaneseq
    %v2446 = vshrl.u32 %v2445, 7
    %v2447 = vsub.s32 0, %v2446
    %v2448 = vrot.slane %v2432, %v2447
    %v2449 = vlaneseq
    %v2450 = vshrl.u32 %v2449, 7
    %v2451 = vsub.s32 1, %v2450
    %v2452 = vrot.slane %v2432, %v2451
    %v2453 = vlaneseq
    %v2454 = vshrl.u32 %v2453, 7
    %v2455 = vsub.s32 2, %v2454
    %v2456 = vrot.slane %v2432, %v2455
    %v2457 = vlaneseq
    %v2458 = vshrl.u32 %v2457, 7
    %v2459 = vsub.s32 3, %v2458
    %v2460 = vrot.slane %v2432, %v2459
    %v2461 = vlaneseq
    %v2462 = vshrl.u32 %v2461, 7
    %v2463 = vsub.s32 4, %v2462
    %v2464 = vrot.slane %v2432, %v2463
    %v2465 = vlaneseq
    %v2466 = vshrl.u32 %v2465, 7
    %v2467 = vsub.s32 5, %v2466
    %v2468 = vrot.slane %v2432, %v2467
    %v2469 = vlaneseq
    %v2470 = vshrl.u32 %v2469, 7
    %v2471 = vsub.s32 6, %v2470
    %v2472 = vrot.slane %v2432, %v2471
    %v2473 = vlaneseq
    %v2474 = vshrl.u32 %v2473, 7
    %v2475 = vsub.s32 7, %v2474
    %v2476 = vrot.slane %v2432, %v2475
    %v2477 = vlaneseq
    %v2478 = vshrl.u32 %v2477, 7
    %v2479 = vsub.s32 0, %v2478
    %v2480 = vrot.slane %v2434, %v2479
    %v2481 = vlaneseq
    %v2482 = vshrl.u32 %v2481, 7
    %v2483 = vsub.s32 1, %v2482
    %v2484 = vrot.slane %v2434, %v2483
    %v2495 = vmul.f32 %v43, %v2448
    %v2496 = vmul.f32 %v43, %v2452
    %v2497 = vmul.f32 %v43, %v2456
    %v2498 = vmul.f32 %v43, %v2460
    %v2499 = vmul.f32 %v43, %v2464
    %v2500 = vmul.f32 %v43, %v2468
    %v2501 = vmul.f32 %v43, %v2472
    %v2502 = vmul.f32 %v43, %v2476
    %v2503 = vmul.f32 %v43, %v2480
    %v2504 = vmul.f32 %v43, %v2484
    %v2507 = vlaneseq
    %v2508 = vshrl.u32 %v2507, 7
    %v2509 = vsub.s32 0, %v2508
    %v2510 = vrot.slane %v2436, %v2509
    %v2511 = vlaneseq
    %v2512 = vshrl.u32 %v2511, 7
    %v2513 = vsub.s32 1, %v2512
    %v2514 = vrot.slane %v2436, %v2513
    %v2515 = vlaneseq
    %v2516 = vshrl.u32 %v2515, 7
    %v2517 = vsub.s32 2, %v2516
    %v2518 = vrot.slane %v2436, %v2517
    %v2519 = vlaneseq
    %v2520 = vshrl.u32 %v2519, 7
    %v2521 = vsub.s32 3, %v2520
    %v2522 = vrot.slane %v2436, %v2521
    %v2523 = vlaneseq
    %v2524 = vshrl.u32 %v2523, 7
    %v2525 = vsub.s32 4, %v2524
    %v2526 = vrot.slane %v2436, %v2525
    %v2527 = vlaneseq
    %v2528 = vshrl.u32 %v2527, 7
    %v2529 = vsub.s32 5, %v2528
    %v2530 = vrot.slane %v2436, %v2529
    %v2531 = vlaneseq
    %v2532 = vshrl.u32 %v2531, 7
    %v2533 = vsub.s32 6, %v2532
    %v2534 = vrot.slane %v2436, %v2533
    %v2535 = vlaneseq
    %v2536 = vshrl.u32 %v2535, 7
    %v2537 = vsub.s32 7, %v2536
    %v2538 = vrot.slane %v2436, %v2537
    %v2539 = vlaneseq
    %v2540 = vshrl.u32 %v2539, 7
    %v2541 = vsub.s32 0, %v2540
    %v2542 = vrot.slane %v2438, %v2541
    %v2543 = vlaneseq
    %v2544 = vshrl.u32 %v2543, 7
    %v2545 = vsub.s32 1, %v2544
    %v2546 = vrot.slane %v2438, %v2545
    %v2557 = vadd.f32 %v2495, %v2510
    %v2558 = vadd.f32 %v2496, %v2514
    %v2559 = vadd.f32 %v2497, %v2518
    %v2560 = vadd.f32 %v2498, %v2522
    %v2561 = vadd.f32 %v2499, %v2526
    %v2562 = vadd.f32 %v2500, %v2530
    %v2563 = vadd.f32 %v2501, %v2534
    %v2564 = vadd.f32 %v2502, %v2538
    %v2565 = vadd.f32 %v2503, %v2542
    %v2566 = vadd.f32 %v2504, %v2546
    %v2567 = vmax.f32 %v2557, 0.0
    %v2568 = vmax.f32 %v2558, 0.0
    %v2569 = vmax.f32 %v2559, 0.0
    %v2570 = vmax.f32 %v2560, 0.0
    %v2571 = vmax.f32 %v2561, 0.0
    %v2572 = vmax.f32 %v2562, 0.0
    %v2573 = vmax.f32 %v2563, 0.0
    %v2574 = vmax.f32 %v2564, 0.0
    %v2575 = vmax.f32 %v2565, 0.0
    %v2576 = vmax.f32 %v2566, 0.0
    %v2579 = vlaneseq
    %v2580 = vshrl.u32 %v2579, 7
    %v2581 = vsub.s32 0, %v2580
    %v2582 = vrot.slane %v2440, %v2581
    %v2583 = vlaneseq
    %v2584 = vshrl.u32 %v2583, 7
    %v2585 = vsub.s32 1, %v2584
    %v2586 = vrot.slane %v2440, %v2585
    %v2587 = vlaneseq
    %v2588 = vshrl.u32 %v2587, 7
    %v2589 = vsub.s32 2, %v2588
    %v2590 = vrot.slane %v2440, %v2589
    %v2591 = vlaneseq
    %v2592 = vshrl.u32 %v2591, 7
    %v2593 = vsub.s32 3, %v2592
    %v2594 = vrot.slane %v2440, %v2593
    %v2595 = vlaneseq
    %v2596 = vshrl.u32 %v2595, 7
    %v2597 = vsub.s32 4, %v2596
    %v2598 = vrot.slane %v2440, %v2597
    %v2599 = vlaneseq
    %v2600 = vshrl.u32 %v2599, 7
    %v2601 = vsub.s32 5, %v2600
    %v2602 = vrot.slane %v2440, %v2601
    %v2603 = vlaneseq
    %v2604 = vshrl.u32 %v2603, 7
    %v2605 = vsub.s32 6, %v2604
    %v2606 = vrot.slane %v2440, %v2605
    %v2607 = vlaneseq
    %v2608 = vshrl.u32 %v2607, 7
    %v2609 = vsub.s32 7, %v2608
    %v2610 = vrot.slane %v2440, %v2609
    %v2611 = vlaneseq
    %v2612 = vshrl.u32 %v2611, 7
    %v2613 = vsub.s32 0, %v2612
    %v2614 = vrot.slane %v2442, %v2613
    %v2615 = vlaneseq
    %v2616 = vshrl.u32 %v2615, 7
    %v2617 = vsub.s32 1, %v2616
    %v2618 = vrot.slane %v2442, %v2617
    %v2629 = vmul.f32 %v2567, %v2582
    %v2630 = vmul.f32 %v2568, %v2586
    %v2631 = vmul.f32 %v2569, %v2590
    %v2632 = vmul.f32 %v2570, %v2594
    %v2633 = vmul.f32 %v2571, %v2598
    %v2634 = vmul.f32 %v2572, %v2602
    %v2635 = vmul.f32 %v2573, %v2606
    %v2636 = vmul.f32 %v2574, %v2610
    %v2637 = vmul.f32 %v2575, %v2614
    %v2638 = vmul.f32 %v2576, %v2618
    %v2639 = vadd.f32 %v2430, %v2629
    %v2640 = vadd.f32 %v2639, %v2630
    %v2641 = vadd.f32 %v2640, %v2631
    %v2642 = vadd.f32 %v2641, %v2632
    %v2643 = vadd.f32 %v2642, %v2633
    %v2644 = vadd.f32 %v2643, %v2634
    %v2645 = vadd.f32 %v2644, %v2635
    %v2646 = vadd.f32 %v2645, %v2636
    %v2647 = vadd.f32 %v2646, %v2637
    %v2648 = vadd.f32 %v2647, %v2638
    %s2649 = scalar_lea.vmem [#allocation3], 480
    %v2650 = vld [vmem:[%s2649] ss:$4 sm:$0xff]
    %s2651 = scalar_lea.vmem %s2649, 32 [#allocation3]
    %v2652 = vld [vmem:[%s2651] ss:$4 sm:$0x3]
    %s2653 = scalar_lea.vmem %s2649, 1 [#allocation3]
    %v2654 = vld [vmem:[%s2653] ss:$4 sm:$0xff]
    %s2655 = scalar_lea.vmem %s2649, 33 [#allocation3]
    %v2656 = vld [vmem:[%s2655] ss:$4 sm:$0x3]
    %s2657 = scalar_lea.vmem %s2649, 2 [#allocation3]
    %v2658 = vld [vmem:[%s2657] ss:$4 sm:$0xff]
    %s2659 = scalar_lea.vmem %s2649, 34 [#allocation3]
    %v2660 = vld [vmem:[%s2659] ss:$4 sm:$0x3]
    %v2663 = vlaneseq
    %v2664 = vshrl.u32 %v2663, 7
    %v2665 = vsub.s32 0, %v2664
    %v2666 = vrot.slane %v2650, %v2665
    %v2667 = vlaneseq
    %v2668 = vshrl.u32 %v2667, 7
    %v2669 = vsub.s32 1, %v2668
    %v2670 = vrot.slane %v2650, %v2669
    %v2671 = vlaneseq
    %v2672 = vshrl.u32 %v2671, 7
    %v2673 = vsub.s32 2, %v2672
    %v2674 = vrot.slane %v2650, %v2673
    %v2675 = vlaneseq
    %v2676 = vshrl.u32 %v2675, 7
    %v2677 = vsub.s32 3, %v2676
    %v2678 = vrot.slane %v2650, %v2677
    %v2679 = vlaneseq
    %v2680 = vshrl.u32 %v2679, 7
    %v2681 = vsub.s32 4, %v2680
    %v2682 = vrot.slane %v2650, %v2681
    %v2683 = vlaneseq
    %v2684 = vshrl.u32 %v2683, 7
    %v2685 = vsub.s32 5, %v2684
    %v2686 = vrot.slane %v2650, %v2685
    %v2687 = vlaneseq
    %v2688 = vshrl.u32 %v2687, 7
    %v2689 = vsub.s32 6, %v2688
    %v2690 = vrot.slane %v2650, %v2689
    %v2691 = vlaneseq
    %v2692 = vshrl.u32 %v2691, 7
    %v2693 = vsub.s32 7, %v2692
    %v2694 = vrot.slane %v2650, %v2693
    %v2695 = vlaneseq
    %v2696 = vshrl.u32 %v2695, 7
    %v2697 = vsub.s32 0, %v2696
    %v2698 = vrot.slane %v2652, %v2697
    %v2699 = vlaneseq
    %v2700 = vshrl.u32 %v2699, 7
    %v2701 = vsub.s32 1, %v2700
    %v2702 = vrot.slane %v2652, %v2701
    %v2713 = vmul.f32 %v43, %v2666
    %v2714 = vmul.f32 %v43, %v2670
    %v2715 = vmul.f32 %v43, %v2674
    %v2716 = vmul.f32 %v43, %v2678
    %v2717 = vmul.f32 %v43, %v2682
    %v2718 = vmul.f32 %v43, %v2686
    %v2719 = vmul.f32 %v43, %v2690
    %v2720 = vmul.f32 %v43, %v2694
    %v2721 = vmul.f32 %v43, %v2698
    %v2722 = vmul.f32 %v43, %v2702
    %v2725 = vlaneseq
    %v2726 = vshrl.u32 %v2725, 7
    %v2727 = vsub.s32 0, %v2726
    %v2728 = vrot.slane %v2654, %v2727
    %v2729 = vlaneseq
    %v2730 = vshrl.u32 %v2729, 7
    %v2731 = vsub.s32 1, %v2730
    %v2732 = vrot.slane %v2654, %v2731
    %v2733 = vlaneseq
    %v2734 = vshrl.u32 %v2733, 7
    %v2735 = vsub.s32 2, %v2734
    %v2736 = vrot.slane %v2654, %v2735
    %v2737 = vlaneseq
    %v2738 = vshrl.u32 %v2737, 7
    %v2739 = vsub.s32 3, %v2738
    %v2740 = vrot.slane %v2654, %v2739
    %v2741 = vlaneseq
    %v2742 = vshrl.u32 %v2741, 7
    %v2743 = vsub.s32 4, %v2742
    %v2744 = vrot.slane %v2654, %v2743
    %v2745 = vlaneseq
    %v2746 = vshrl.u32 %v2745, 7
    %v2747 = vsub.s32 5, %v2746
    %v2748 = vrot.slane %v2654, %v2747
    %v2749 = vlaneseq
    %v2750 = vshrl.u32 %v2749, 7
    %v2751 = vsub.s32 6, %v2750
    %v2752 = vrot.slane %v2654, %v2751
    %v2753 = vlaneseq
    %v2754 = vshrl.u32 %v2753, 7
    %v2755 = vsub.s32 7, %v2754
    %v2756 = vrot.slane %v2654, %v2755
    %v2757 = vlaneseq
    %v2758 = vshrl.u32 %v2757, 7
    %v2759 = vsub.s32 0, %v2758
    %v2760 = vrot.slane %v2656, %v2759
    %v2761 = vlaneseq
    %v2762 = vshrl.u32 %v2761, 7
    %v2763 = vsub.s32 1, %v2762
    %v2764 = vrot.slane %v2656, %v2763
    %v2775 = vadd.f32 %v2713, %v2728
    %v2776 = vadd.f32 %v2714, %v2732
    %v2777 = vadd.f32 %v2715, %v2736
    %v2778 = vadd.f32 %v2716, %v2740
    %v2779 = vadd.f32 %v2717, %v2744
    %v2780 = vadd.f32 %v2718, %v2748
    %v2781 = vadd.f32 %v2719, %v2752
    %v2782 = vadd.f32 %v2720, %v2756
    %v2783 = vadd.f32 %v2721, %v2760
    %v2784 = vadd.f32 %v2722, %v2764
    %v2785 = vmax.f32 %v2775, 0.0
    %v2786 = vmax.f32 %v2776, 0.0
    %v2787 = vmax.f32 %v2777, 0.0
    %v2788 = vmax.f32 %v2778, 0.0
    %v2789 = vmax.f32 %v2779, 0.0
    %v2790 = vmax.f32 %v2780, 0.0
    %v2791 = vmax.f32 %v2781, 0.0
    %v2792 = vmax.f32 %v2782, 0.0
    %v2793 = vmax.f32 %v2783, 0.0
    %v2794 = vmax.f32 %v2784, 0.0
    %v2797 = vlaneseq
    %v2798 = vshrl.u32 %v2797, 7
    %v2799 = vsub.s32 0, %v2798
    %v2800 = vrot.slane %v2658, %v2799
    %v2801 = vlaneseq
    %v2802 = vshrl.u32 %v2801, 7
    %v2803 = vsub.s32 1, %v2802
    %v2804 = vrot.slane %v2658, %v2803
    %v2805 = vlaneseq
    %v2806 = vshrl.u32 %v2805, 7
    %v2807 = vsub.s32 2, %v2806
    %v2808 = vrot.slane %v2658, %v2807
    %v2809 = vlaneseq
    %v2810 = vshrl.u32 %v2809, 7
    %v2811 = vsub.s32 3, %v2810
    %v2812 = vrot.slane %v2658, %v2811
    %v2813 = vlaneseq
    %v2814 = vshrl.u32 %v2813, 7
    %v2815 = vsub.s32 4, %v2814
    %v2816 = vrot.slane %v2658, %v2815
    %v2817 = vlaneseq
    %v2818 = vshrl.u32 %v2817, 7
    %v2819 = vsub.s32 5, %v2818
    %v2820 = vrot.slane %v2658, %v2819
    %v2821 = vlaneseq
    %v2822 = vshrl.u32 %v2821, 7
    %v2823 = vsub.s32 6, %v2822
    %v2824 = vrot.slane %v2658, %v2823
    %v2825 = vlaneseq
    %v2826 = vshrl.u32 %v2825, 7
    %v2827 = vsub.s32 7, %v2826
    %v2828 = vrot.slane %v2658, %v2827
    %v2829 = vlaneseq
    %v2830 = vshrl.u32 %v2829, 7
    %v2831 = vsub.s32 0, %v2830
    %v2832 = vrot.slane %v2660, %v2831
    %v2833 = vlaneseq
    %v2834 = vshrl.u32 %v2833, 7
    %v2835 = vsub.s32 1, %v2834
    %v2836 = vrot.slane %v2660, %v2835
    %v2847 = vmul.f32 %v2785, %v2800
    %v2848 = vmul.f32 %v2786, %v2804
    %v2849 = vmul.f32 %v2787, %v2808
    %v2850 = vmul.f32 %v2788, %v2812
    %v2851 = vmul.f32 %v2789, %v2816
    %v2852 = vmul.f32 %v2790, %v2820
    %v2853 = vmul.f32 %v2791, %v2824
    %v2854 = vmul.f32 %v2792, %v2828
    %v2855 = vmul.f32 %v2793, %v2832
    %v2856 = vmul.f32 %v2794, %v2836
    %v2857 = vadd.f32 %v2648, %v2847
    %v2858 = vadd.f32 %v2857, %v2848
    %v2859 = vadd.f32 %v2858, %v2849
    %v2860 = vadd.f32 %v2859, %v2850
    %v2861 = vadd.f32 %v2860, %v2851
    %v2862 = vadd.f32 %v2861, %v2852
    %v2863 = vadd.f32 %v2862, %v2853
    %v2864 = vadd.f32 %v2863, %v2854
    %v2865 = vadd.f32 %v2864, %v2855
    %v2866 = vadd.f32 %v2865, %v2856
    %s2867 = scalar_lea.vmem [#allocation3], 520
    %v2868 = vld [vmem:[%s2867] ss:$4 sm:$0xff]
    %s2869 = scalar_lea.vmem %s2867, 32 [#allocation3]
    %v2870 = vld [vmem:[%s2869] ss:$4 sm:$0x3]
    %s2871 = scalar_lea.vmem %s2867, 1 [#allocation3]
    %v2872 = vld [vmem:[%s2871] ss:$4 sm:$0xff]
    %s2873 = scalar_lea.vmem %s2867, 33 [#allocation3]
    %v2874 = vld [vmem:[%s2873] ss:$4 sm:$0x3]
    %s2875 = scalar_lea.vmem %s2867, 2 [#allocation3]
    %v2876 = vld [vmem:[%s2875] ss:$4 sm:$0xff]
    %s2877 = scalar_lea.vmem %s2867, 34 [#allocation3]
    %v2878 = vld [vmem:[%s2877] ss:$4 sm:$0x3]
    %v2881 = vlaneseq
    %v2882 = vshrl.u32 %v2881, 7
    %v2883 = vsub.s32 0, %v2882
    %v2884 = vrot.slane %v2868, %v2883
    %v2885 = vlaneseq
    %v2886 = vshrl.u32 %v2885, 7
    %v2887 = vsub.s32 1, %v2886
    %v2888 = vrot.slane %v2868, %v2887
    %v2889 = vlaneseq
    %v2890 = vshrl.u32 %v2889, 7
    %v2891 = vsub.s32 2, %v2890
    %v2892 = vrot.slane %v2868, %v2891
    %v2893 = vlaneseq
    %v2894 = vshrl.u32 %v2893, 7
    %v2895 = vsub.s32 3, %v2894
    %v2896 = vrot.slane %v2868, %v2895
    %v2897 = vlaneseq
    %v2898 = vshrl.u32 %v2897, 7
    %v2899 = vsub.s32 4, %v2898
    %v2900 = vrot.slane %v2868, %v2899
    %v2901 = vlaneseq
    %v2902 = vshrl.u32 %v2901, 7
    %v2903 = vsub.s32 5, %v2902
    %v2904 = vrot.slane %v2868, %v2903
    %v2905 = vlaneseq
    %v2906 = vshrl.u32 %v2905, 7
    %v2907 = vsub.s32 6, %v2906
    %v2908 = vrot.slane %v2868, %v2907
    %v2909 = vlaneseq
    %v2910 = vshrl.u32 %v2909, 7
    %v2911 = vsub.s32 7, %v2910
    %v2912 = vrot.slane %v2868, %v2911
    %v2913 = vlaneseq
    %v2914 = vshrl.u32 %v2913, 7
    %v2915 = vsub.s32 0, %v2914
    %v2916 = vrot.slane %v2870, %v2915
    %v2917 = vlaneseq
    %v2918 = vshrl.u32 %v2917, 7
    %v2919 = vsub.s32 1, %v2918
    %v2920 = vrot.slane %v2870, %v2919
    %v2931 = vmul.f32 %v43, %v2884
    %v2932 = vmul.f32 %v43, %v2888
    %v2933 = vmul.f32 %v43, %v2892
    %v2934 = vmul.f32 %v43, %v2896
    %v2935 = vmul.f32 %v43, %v2900
    %v2936 = vmul.f32 %v43, %v2904
    %v2937 = vmul.f32 %v43, %v2908
    %v2938 = vmul.f32 %v43, %v2912
    %v2939 = vmul.f32 %v43, %v2916
    %v2940 = vmul.f32 %v43, %v2920
    %v2943 = vlaneseq
    %v2944 = vshrl.u32 %v2943, 7
    %v2945 = vsub.s32 0, %v2944
    %v2946 = vrot.slane %v2872, %v2945
    %v2947 = vlaneseq
    %v2948 = vshrl.u32 %v2947, 7
    %v2949 = vsub.s32 1, %v2948
    %v2950 = vrot.slane %v2872, %v2949
    %v2951 = vlaneseq
    %v2952 = vshrl.u32 %v2951, 7
    %v2953 = vsub.s32 2, %v2952
    %v2954 = vrot.slane %v2872, %v2953
    %v2955 = vlaneseq
    %v2956 = vshrl.u32 %v2955, 7
    %v2957 = vsub.s32 3, %v2956
    %v2958 = vrot.slane %v2872, %v2957
    %v2959 = vlaneseq
    %v2960 = vshrl.u32 %v2959, 7
    %v2961 = vsub.s32 4, %v2960
    %v2962 = vrot.slane %v2872, %v2961
    %v2963 = vlaneseq
    %v2964 = vshrl.u32 %v2963, 7
    %v2965 = vsub.s32 5, %v2964
    %v2966 = vrot.slane %v2872, %v2965
    %v2967 = vlaneseq
    %v2968 = vshrl.u32 %v2967, 7
    %v2969 = vsub.s32 6, %v2968
    %v2970 = vrot.slane %v2872, %v2969
    %v2971 = vlaneseq
    %v2972 = vshrl.u32 %v2971, 7
    %v2973 = vsub.s32 7, %v2972
    %v2974 = vrot.slane %v2872, %v2973
    %v2975 = vlaneseq
    %v2976 = vshrl.u32 %v2975, 7
    %v2977 = vsub.s32 0, %v2976
    %v2978 = vrot.slane %v2874, %v2977
    %v2979 = vlaneseq
    %v2980 = vshrl.u32 %v2979, 7
    %v2981 = vsub.s32 1, %v2980
    %v2982 = vrot.slane %v2874, %v2981
    %v2993 = vadd.f32 %v2931, %v2946
    %v2994 = vadd.f32 %v2932, %v2950
    %v2995 = vadd.f32 %v2933, %v2954
    %v2996 = vadd.f32 %v2934, %v2958
    %v2997 = vadd.f32 %v2935, %v2962
    %v2998 = vadd.f32 %v2936, %v2966
    %v2999 = vadd.f32 %v2937, %v2970
    %v3000 = vadd.f32 %v2938, %v2974
    %v3001 = vadd.f32 %v2939, %v2978
    %v3002 = vadd.f32 %v2940, %v2982
    %v3003 = vmax.f32 %v2993, 0.0
    %v3004 = vmax.f32 %v2994, 0.0
    %v3005 = vmax.f32 %v2995, 0.0
    %v3006 = vmax.f32 %v2996, 0.0
    %v3007 = vmax.f32 %v2997, 0.0
    %v3008 = vmax.f32 %v2998, 0.0
    %v3009 = vmax.f32 %v2999, 0.0
    %v3010 = vmax.f32 %v3000, 0.0
    %v3011 = vmax.f32 %v3001, 0.0
    %v3012 = vmax.f32 %v3002, 0.0
    %v3015 = vlaneseq
    %v3016 = vshrl.u32 %v3015, 7
    %v3017 = vsub.s32 0, %v3016
    %v3018 = vrot.slane %v2876, %v3017
    %v3019 = vlaneseq
    %v3020 = vshrl.u32 %v3019, 7
    %v3021 = vsub.s32 1, %v3020
    %v3022 = vrot.slane %v2876, %v3021
    %v3023 = vlaneseq
    %v3024 = vshrl.u32 %v3023, 7
    %v3025 = vsub.s32 2, %v3024
    %v3026 = vrot.slane %v2876, %v3025
    %v3027 = vlaneseq
    %v3028 = vshrl.u32 %v3027, 7
    %v3029 = vsub.s32 3, %v3028
    %v3030 = vrot.slane %v2876, %v3029
    %v3031 = vlaneseq
    %v3032 = vshrl.u32 %v3031, 7
    %v3033 = vsub.s32 4, %v3032
    %v3034 = vrot.slane %v2876, %v3033
    %v3035 = vlaneseq
    %v3036 = vshrl.u32 %v3035, 7
    %v3037 = vsub.s32 5, %v3036
    %v3038 = vrot.slane %v2876, %v3037
    %v3039 = vlaneseq
    %v3040 = vshrl.u32 %v3039, 7
    %v3041 = vsub.s32 6, %v3040
    %v3042 = vrot.slane %v2876, %v3041
    %v3043 = vlaneseq
    %v3044 = vshrl.u32 %v3043, 7
    %v3045 = vsub.s32 7, %v3044
    %v3046 = vrot.slane %v2876, %v3045
    %v3047 = vlaneseq
    %v3048 = vshrl.u32 %v3047, 7
    %v3049 = vsub.s32 0, %v3048
    %v3050 = vrot.slane %v2878, %v3049
    %v3051 = vlaneseq
    %v3052 = vshrl.u32 %v3051, 7
    %v3053 = vsub.s32 1, %v3052
    %v3054 = vrot.slane %v2878, %v3053
    %v3065 = vmul.f32 %v3003, %v3018
    %v3066 = vmul.f32 %v3004, %v3022
    %v3067 = vmul.f32 %v3005, %v3026
    %v3068 = vmul.f32 %v3006, %v3030
    %v3069 = vmul.f32 %v3007, %v3034
    %v3070 = vmul.f32 %v3008, %v3038
    %v3071 = vmul.f32 %v3009, %v3042
    %v3072 = vmul.f32 %v3010, %v3046
    %v3073 = vmul.f32 %v3011, %v3050
    %v3074 = vmul.f32 %v3012, %v3054
    %v3075 = vadd.f32 %v2866, %v3065
    %v3076 = vadd.f32 %v3075, %v3066
    %v3077 = vadd.f32 %v3076, %v3067
    %v3078 = vadd.f32 %v3077, %v3068
    %v3079 = vadd.f32 %v3078, %v3069
    %v3080 = vadd.f32 %v3079, %v3070
    %v3081 = vadd.f32 %v3080, %v3071
    %v3082 = vadd.f32 %v3081, %v3072
    %v3083 = vadd.f32 %v3082, %v3073
    %v3084 = vadd.f32 %v3083, %v3074
    %s3085 = scalar_lea.vmem [#allocation3], 560
    %v3086 = vld [vmem:[%s3085] ss:$4 sm:$0xff]
    %s3087 = scalar_lea.vmem %s3085, 32 [#allocation3]
    %v3088 = vld [vmem:[%s3087] ss:$4 sm:$0x3]
    %s3089 = scalar_lea.vmem %s3085, 1 [#allocation3]
    %v3090 = vld [vmem:[%s3089] ss:$4 sm:$0xff]
    %s3091 = scalar_lea.vmem %s3085, 33 [#allocation3]
    %v3092 = vld [vmem:[%s3091] ss:$4 sm:$0x3]
    %s3093 = scalar_lea.vmem %s3085, 2 [#allocation3]
    %v3094 = vld [vmem:[%s3093] ss:$4 sm:$0xff]
    %s3095 = scalar_lea.vmem %s3085, 34 [#allocation3]
    %v3096 = vld [vmem:[%s3095] ss:$4 sm:$0x3]
    %v3099 = vlaneseq
    %v3100 = vshrl.u32 %v3099, 7
    %v3101 = vsub.s32 0, %v3100
    %v3102 = vrot.slane %v3086, %v3101
    %v3103 = vlaneseq
    %v3104 = vshrl.u32 %v3103, 7
    %v3105 = vsub.s32 1, %v3104
    %v3106 = vrot.slane %v3086, %v3105
    %v3107 = vlaneseq
    %v3108 = vshrl.u32 %v3107, 7
    %v3109 = vsub.s32 2, %v3108
    %v3110 = vrot.slane %v3086, %v3109
    %v3111 = vlaneseq
    %v3112 = vshrl.u32 %v3111, 7
    %v3113 = vsub.s32 3, %v3112
    %v3114 = vrot.slane %v3086, %v3113
    %v3115 = vlaneseq
    %v3116 = vshrl.u32 %v3115, 7
    %v3117 = vsub.s32 4, %v3116
    %v3118 = vrot.slane %v3086, %v3117
    %v3119 = vlaneseq
    %v3120 = vshrl.u32 %v3119, 7
    %v3121 = vsub.s32 5, %v3120
    %v3122 = vrot.slane %v3086, %v3121
    %v3123 = vlaneseq
    %v3124 = vshrl.u32 %v3123, 7
    %v3125 = vsub.s32 6, %v3124
    %v3126 = vrot.slane %v3086, %v3125
    %v3127 = vlaneseq
    %v3128 = vshrl.u32 %v3127, 7
    %v3129 = vsub.s32 7, %v3128
    %v3130 = vrot.slane %v3086, %v3129
    %v3131 = vlaneseq
    %v3132 = vshrl.u32 %v3131, 7
    %v3133 = vsub.s32 0, %v3132
    %v3134 = vrot.slane %v3088, %v3133
    %v3135 = vlaneseq
    %v3136 = vshrl.u32 %v3135, 7
    %v3137 = vsub.s32 1, %v3136
    %v3138 = vrot.slane %v3088, %v3137
    %v3149 = vmul.f32 %v43, %v3102
    %v3150 = vmul.f32 %v43, %v3106
    %v3151 = vmul.f32 %v43, %v3110
    %v3152 = vmul.f32 %v43, %v3114
    %v3153 = vmul.f32 %v43, %v3118
    %v3154 = vmul.f32 %v43, %v3122
    %v3155 = vmul.f32 %v43, %v3126
    %v3156 = vmul.f32 %v43, %v3130
    %v3157 = vmul.f32 %v43, %v3134
    %v3158 = vmul.f32 %v43, %v3138
    %v3161 = vlaneseq
    %v3162 = vshrl.u32 %v3161, 7
    %v3163 = vsub.s32 0, %v3162
    %v3164 = vrot.slane %v3090, %v3163
    %v3165 = vlaneseq
    %v3166 = vshrl.u32 %v3165, 7
    %v3167 = vsub.s32 1, %v3166
    %v3168 = vrot.slane %v3090, %v3167
    %v3169 = vlaneseq
    %v3170 = vshrl.u32 %v3169, 7
    %v3171 = vsub.s32 2, %v3170
    %v3172 = vrot.slane %v3090, %v3171
    %v3173 = vlaneseq
    %v3174 = vshrl.u32 %v3173, 7
    %v3175 = vsub.s32 3, %v3174
    %v3176 = vrot.slane %v3090, %v3175
    %v3177 = vlaneseq
    %v3178 = vshrl.u32 %v3177, 7
    %v3179 = vsub.s32 4, %v3178
    %v3180 = vrot.slane %v3090, %v3179
    %v3181 = vlaneseq
    %v3182 = vshrl.u32 %v3181, 7
    %v3183 = vsub.s32 5, %v3182
    %v3184 = vrot.slane %v3090, %v3183
    %v3185 = vlaneseq
    %v3186 = vshrl.u32 %v3185, 7
    %v3187 = vsub.s32 6, %v3186
    %v3188 = vrot.slane %v3090, %v3187
    %v3189 = vlaneseq
    %v3190 = vshrl.u32 %v3189, 7
    %v3191 = vsub.s32 7, %v3190
    %v3192 = vrot.slane %v3090, %v3191
    %v3193 = vlaneseq
    %v3194 = vshrl.u32 %v3193, 7
    %v3195 = vsub.s32 0, %v3194
    %v3196 = vrot.slane %v3092, %v3195
    %v3197 = vlaneseq
    %v3198 = vshrl.u32 %v3197, 7
    %v3199 = vsub.s32 1, %v3198
    %v3200 = vrot.slane %v3092, %v3199
    %v3211 = vadd.f32 %v3149, %v3164
    %v3212 = vadd.f32 %v3150, %v3168
    %v3213 = vadd.f32 %v3151, %v3172
    %v3214 = vadd.f32 %v3152, %v3176
    %v3215 = vadd.f32 %v3153, %v3180
    %v3216 = vadd.f32 %v3154, %v3184
    %v3217 = vadd.f32 %v3155, %v3188
    %v3218 = vadd.f32 %v3156, %v3192
    %v3219 = vadd.f32 %v3157, %v3196
    %v3220 = vadd.f32 %v3158, %v3200
    %v3221 = vmax.f32 %v3211, 0.0
    %v3222 = vmax.f32 %v3212, 0.0
    %v3223 = vmax.f32 %v3213, 0.0
    %v3224 = vmax.f32 %v3214, 0.0
    %v3225 = vmax.f32 %v3215, 0.0
    %v3226 = vmax.f32 %v3216, 0.0
    %v3227 = vmax.f32 %v3217, 0.0
    %v3228 = vmax.f32 %v3218, 0.0
    %v3229 = vmax.f32 %v3219, 0.0
    %v3230 = vmax.f32 %v3220, 0.0
    %v3233 = vlaneseq
    %v3234 = vshrl.u32 %v3233, 7
    %v3235 = vsub.s32 0, %v3234
    %v3236 = vrot.slane %v3094, %v3235
    %v3237 = vlaneseq
    %v3238 = vshrl.u32 %v3237, 7
    %v3239 = vsub.s32 1, %v3238
    %v3240 = vrot.slane %v3094, %v3239
    %v3241 = vlaneseq
    %v3242 = vshrl.u32 %v3241, 7
    %v3243 = vsub.s32 2, %v3242
    %v3244 = vrot.slane %v3094, %v3243
    %v3245 = vlaneseq
    %v3246 = vshrl.u32 %v3245, 7
    %v3247 = vsub.s32 3, %v3246
    %v3248 = vrot.slane %v3094, %v3247
    %v3249 = vlaneseq
    %v3250 = vshrl.u32 %v3249, 7
    %v3251 = vsub.s32 4, %v3250
    %v3252 = vrot.slane %v3094, %v3251
    %v3253 = vlaneseq
    %v3254 = vshrl.u32 %v3253, 7
    %v3255 = vsub.s32 5, %v3254
    %v3256 = vrot.slane %v3094, %v3255
    %v3257 = vlaneseq
    %v3258 = vshrl.u32 %v3257, 7
    %v3259 = vsub.s32 6, %v3258
    %v3260 = vrot.slane %v3094, %v3259
    %v3261 = vlaneseq
    %v3262 = vshrl.u32 %v3261, 7
    %v3263 = vsub.s32 7, %v3262
    %v3264 = vrot.slane %v3094, %v3263
    %v3265 = vlaneseq
    %v3266 = vshrl.u32 %v3265, 7
    %v3267 = vsub.s32 0, %v3266
    %v3268 = vrot.slane %v3096, %v3267
    %v3269 = vlaneseq
    %v3270 = vshrl.u32 %v3269, 7
    %v3271 = vsub.s32 1, %v3270
    %v3272 = vrot.slane %v3096, %v3271
    %v3283 = vmul.f32 %v3221, %v3236
    %v3284 = vmul.f32 %v3222, %v3240
    %v3285 = vmul.f32 %v3223, %v3244
    %v3286 = vmul.f32 %v3224, %v3248
    %v3287 = vmul.f32 %v3225, %v3252
    %v3288 = vmul.f32 %v3226, %v3256
    %v3289 = vmul.f32 %v3227, %v3260
    %v3290 = vmul.f32 %v3228, %v3264
    %v3291 = vmul.f32 %v3229, %v3268
    %v3292 = vmul.f32 %v3230, %v3272
    %v3293 = vadd.f32 %v3084, %v3283
    %v3294 = vadd.f32 %v3293, %v3284
    %v3295 = vadd.f32 %v3294, %v3285
    %v3296 = vadd.f32 %v3295, %v3286
    %v3297 = vadd.f32 %v3296, %v3287
    %v3298 = vadd.f32 %v3297, %v3288
    %v3299 = vadd.f32 %v3298, %v3289
    %v3300 = vadd.f32 %v3299, %v3290
    %v3301 = vadd.f32 %v3300, %v3291
    %v3302 = vadd.f32 %v3301, %v3292
    %s3303 = scalar_lea.vmem [#allocation3], 600
    %v3304 = vld [vmem:[%s3303] ss:$4 sm:$0xff]
    %s3305 = scalar_lea.vmem %s3303, 32 [#allocation3]
    %v3306 = vld [vmem:[%s3305] ss:$4 sm:$0x3]
    %s3307 = scalar_lea.vmem %s3303, 1 [#allocation3]
    %v3308 = vld [vmem:[%s3307] ss:$4 sm:$0xff]
    %s3309 = scalar_lea.vmem %s3303, 33 [#allocation3]
    %v3310 = vld [vmem:[%s3309] ss:$4 sm:$0x3]
    %s3311 = scalar_lea.vmem %s3303, 2 [#allocation3]
    %v3312 = vld [vmem:[%s3311] ss:$4 sm:$0xff]
    %s3313 = scalar_lea.vmem %s3303, 34 [#allocation3]
    %v3314 = vld [vmem:[%s3313] ss:$4 sm:$0x3]
    %v3317 = vlaneseq
    %v3318 = vshrl.u32 %v3317, 7
    %v3319 = vsub.s32 0, %v3318
    %v3320 = vrot.slane %v3304, %v3319
    %v3321 = vlaneseq
    %v3322 = vshrl.u32 %v3321, 7
    %v3323 = vsub.s32 1, %v3322
    %v3324 = vrot.slane %v3304, %v3323
    %v3325 = vlaneseq
    %v3326 = vshrl.u32 %v3325, 7
    %v3327 = vsub.s32 2, %v3326
    %v3328 = vrot.slane %v3304, %v3327
    %v3329 = vlaneseq
    %v3330 = vshrl.u32 %v3329, 7
    %v3331 = vsub.s32 3, %v3330
    %v3332 = vrot.slane %v3304, %v3331
    %v3333 = vlaneseq
    %v3334 = vshrl.u32 %v3333, 7
    %v3335 = vsub.s32 4, %v3334
    %v3336 = vrot.slane %v3304, %v3335
    %v3337 = vlaneseq
    %v3338 = vshrl.u32 %v3337, 7
    %v3339 = vsub.s32 5, %v3338
    %v3340 = vrot.slane %v3304, %v3339
    %v3341 = vlaneseq
    %v3342 = vshrl.u32 %v3341, 7
    %v3343 = vsub.s32 6, %v3342
    %v3344 = vrot.slane %v3304, %v3343
    %v3345 = vlaneseq
    %v3346 = vshrl.u32 %v3345, 7
    %v3347 = vsub.s32 7, %v3346
    %v3348 = vrot.slane %v3304, %v3347
    %v3349 = vlaneseq
    %v3350 = vshrl.u32 %v3349, 7
    %v3351 = vsub.s32 0, %v3350
    %v3352 = vrot.slane %v3306, %v3351
    %v3353 = vlaneseq
    %v3354 = vshrl.u32 %v3353, 7
    %v3355 = vsub.s32 1, %v3354
    %v3356 = vrot.slane %v3306, %v3355
    %v3367 = vmul.f32 %v43, %v3320
    %v3368 = vmul.f32 %v43, %v3324
    %v3369 = vmul.f32 %v43, %v3328
    %v3370 = vmul.f32 %v43, %v3332
    %v3371 = vmul.f32 %v43, %v3336
    %v3372 = vmul.f32 %v43, %v3340
    %v3373 = vmul.f32 %v43, %v3344
    %v3374 = vmul.f32 %v43, %v3348
    %v3375 = vmul.f32 %v43, %v3352
    %v3376 = vmul.f32 %v43, %v3356
    %v3379 = vlaneseq
    %v3380 = vshrl.u32 %v3379, 7
    %v3381 = vsub.s32 0, %v3380
    %v3382 = vrot.slane %v3308, %v3381
    %v3383 = vlaneseq
    %v3384 = vshrl.u32 %v3383, 7
    %v3385 = vsub.s32 1, %v3384
    %v3386 = vrot.slane %v3308, %v3385
    %v3387 = vlaneseq
    %v3388 = vshrl.u32 %v3387, 7
    %v3389 = vsub.s32 2, %v3388
    %v3390 = vrot.slane %v3308, %v3389
    %v3391 = vlaneseq
    %v3392 = vshrl.u32 %v3391, 7
    %v3393 = vsub.s32 3, %v3392
    %v3394 = vrot.slane %v3308, %v3393
    %v3395 = vlaneseq
    %v3396 = vshrl.u32 %v3395, 7
    %v3397 = vsub.s32 4, %v3396
    %v3398 = vrot.slane %v3308, %v3397
    %v3399 = vlaneseq
    %v3400 = vshrl.u32 %v3399, 7
    %v3401 = vsub.s32 5, %v3400
    %v3402 = vrot.slane %v3308, %v3401
    %v3403 = vlaneseq
    %v3404 = vshrl.u32 %v3403, 7
    %v3405 = vsub.s32 6, %v3404
    %v3406 = vrot.slane %v3308, %v3405
    %v3407 = vlaneseq
    %v3408 = vshrl.u32 %v3407, 7
    %v3409 = vsub.s32 7, %v3408
    %v3410 = vrot.slane %v3308, %v3409
    %v3411 = vlaneseq
    %v3412 = vshrl.u32 %v3411, 7
    %v3413 = vsub.s32 0, %v3412
    %v3414 = vrot.slane %v3310, %v3413
    %v3415 = vlaneseq
    %v3416 = vshrl.u32 %v3415, 7
    %v3417 = vsub.s32 1, %v3416
    %v3418 = vrot.slane %v3310, %v3417
    %v3429 = vadd.f32 %v3367, %v3382
    %v3430 = vadd.f32 %v3368, %v3386
    %v3431 = vadd.f32 %v3369, %v3390
    %v3432 = vadd.f32 %v3370, %v3394
    %v3433 = vadd.f32 %v3371, %v3398
    %v3434 = vadd.f32 %v3372, %v3402
    %v3435 = vadd.f32 %v3373, %v3406
    %v3436 = vadd.f32 %v3374, %v3410
    %v3437 = vadd.f32 %v3375, %v3414
    %v3438 = vadd.f32 %v3376, %v3418
    %v3439 = vmax.f32 %v3429, 0.0
    %v3440 = vmax.f32 %v3430, 0.0
    %v3441 = vmax.f32 %v3431, 0.0
    %v3442 = vmax.f32 %v3432, 0.0
    %v3443 = vmax.f32 %v3433, 0.0
    %v3444 = vmax.f32 %v3434, 0.0
    %v3445 = vmax.f32 %v3435, 0.0
    %v3446 = vmax.f32 %v3436, 0.0
    %v3447 = vmax.f32 %v3437, 0.0
    %v3448 = vmax.f32 %v3438, 0.0
    %v3451 = vlaneseq
    %v3452 = vshrl.u32 %v3451, 7
    %v3453 = vsub.s32 0, %v3452
    %v3454 = vrot.slane %v3312, %v3453
    %v3455 = vlaneseq
    %v3456 = vshrl.u32 %v3455, 7
    %v3457 = vsub.s32 1, %v3456
    %v3458 = vrot.slane %v3312, %v3457
    %v3459 = vlaneseq
    %v3460 = vshrl.u32 %v3459, 7
    %v3461 = vsub.s32 2, %v3460
    %v3462 = vrot.slane %v3312, %v3461
    %v3463 = vlaneseq
    %v3464 = vshrl.u32 %v3463, 7
    %v3465 = vsub.s32 3, %v3464
    %v3466 = vrot.slane %v3312, %v3465
    %v3467 = vlaneseq
    %v3468 = vshrl.u32 %v3467, 7
    %v3469 = vsub.s32 4, %v3468
    %v3470 = vrot.slane %v3312, %v3469
    %v3471 = vlaneseq
    %v3472 = vshrl.u32 %v3471, 7
    %v3473 = vsub.s32 5, %v3472
    %v3474 = vrot.slane %v3312, %v3473
    %v3475 = vlaneseq
    %v3476 = vshrl.u32 %v3475, 7
    %v3477 = vsub.s32 6, %v3476
    %v3478 = vrot.slane %v3312, %v3477
    %v3479 = vlaneseq
    %v3480 = vshrl.u32 %v3479, 7
    %v3481 = vsub.s32 7, %v3480
    %v3482 = vrot.slane %v3312, %v3481
    %v3483 = vlaneseq
    %v3484 = vshrl.u32 %v3483, 7
    %v3485 = vsub.s32 0, %v3484
    %v3486 = vrot.slane %v3314, %v3485
    %v3487 = vlaneseq
    %v3488 = vshrl.u32 %v3487, 7
    %v3489 = vsub.s32 1, %v3488
    %v3490 = vrot.slane %v3314, %v3489
    %v3501 = vmul.f32 %v3439, %v3454
    %v3502 = vmul.f32 %v3440, %v3458
    %v3503 = vmul.f32 %v3441, %v3462
    %v3504 = vmul.f32 %v3442, %v3466
    %v3505 = vmul.f32 %v3443, %v3470
    %v3506 = vmul.f32 %v3444, %v3474
    %v3507 = vmul.f32 %v3445, %v3478
    %v3508 = vmul.f32 %v3446, %v3482
    %v3509 = vmul.f32 %v3447, %v3486
    %v3510 = vmul.f32 %v3448, %v3490
    %v3511 = vadd.f32 %v3302, %v3501
    %v3512 = vadd.f32 %v3511, %v3502
    %v3513 = vadd.f32 %v3512, %v3503
    %v3514 = vadd.f32 %v3513, %v3504
    %v3515 = vadd.f32 %v3514, %v3505
    %v3516 = vadd.f32 %v3515, %v3506
    %v3517 = vadd.f32 %v3516, %v3507
    %v3518 = vadd.f32 %v3517, %v3508
    %v3519 = vadd.f32 %v3518, %v3509
    %v3520 = vadd.f32 %v3519, %v3510
    %s3521 = scalar_lea.vmem [#allocation3], 640
    %v3522 = vld [vmem:[%s3521] ss:$4 sm:$0xff]
    %s3523 = scalar_lea.vmem %s3521, 32 [#allocation3]
    %v3524 = vld [vmem:[%s3523] ss:$4 sm:$0x3]
    %s3525 = scalar_lea.vmem %s3521, 1 [#allocation3]
    %v3526 = vld [vmem:[%s3525] ss:$4 sm:$0xff]
    %s3527 = scalar_lea.vmem %s3521, 33 [#allocation3]
    %v3528 = vld [vmem:[%s3527] ss:$4 sm:$0x3]
    %s3529 = scalar_lea.vmem %s3521, 2 [#allocation3]
    %v3530 = vld [vmem:[%s3529] ss:$4 sm:$0xff]
    %s3531 = scalar_lea.vmem %s3521, 34 [#allocation3]
    %v3532 = vld [vmem:[%s3531] ss:$4 sm:$0x3]
    %v3535 = vlaneseq
    %v3536 = vshrl.u32 %v3535, 7
    %v3537 = vsub.s32 0, %v3536
    %v3538 = vrot.slane %v3522, %v3537
    %v3539 = vlaneseq
    %v3540 = vshrl.u32 %v3539, 7
    %v3541 = vsub.s32 1, %v3540
    %v3542 = vrot.slane %v3522, %v3541
    %v3543 = vlaneseq
    %v3544 = vshrl.u32 %v3543, 7
    %v3545 = vsub.s32 2, %v3544
    %v3546 = vrot.slane %v3522, %v3545
    %v3547 = vlaneseq
    %v3548 = vshrl.u32 %v3547, 7
    %v3549 = vsub.s32 3, %v3548
    %v3550 = vrot.slane %v3522, %v3549
    %v3551 = vlaneseq
    %v3552 = vshrl.u32 %v3551, 7
    %v3553 = vsub.s32 4, %v3552
    %v3554 = vrot.slane %v3522, %v3553
    %v3555 = vlaneseq
    %v3556 = vshrl.u32 %v3555, 7
    %v3557 = vsub.s32 5, %v3556
    %v3558 = vrot.slane %v3522, %v3557
    %v3559 = vlaneseq
    %v3560 = vshrl.u32 %v3559, 7
    %v3561 = vsub.s32 6, %v3560
    %v3562 = vrot.slane %v3522, %v3561
    %v3563 = vlaneseq
    %v3564 = vshrl.u32 %v3563, 7
    %v3565 = vsub.s32 7, %v3564
    %v3566 = vrot.slane %v3522, %v3565
    %v3567 = vlaneseq
    %v3568 = vshrl.u32 %v3567, 7
    %v3569 = vsub.s32 0, %v3568
    %v3570 = vrot.slane %v3524, %v3569
    %v3571 = vlaneseq
    %v3572 = vshrl.u32 %v3571, 7
    %v3573 = vsub.s32 1, %v3572
    %v3574 = vrot.slane %v3524, %v3573
    %v3585 = vmul.f32 %v43, %v3538
    %v3586 = vmul.f32 %v43, %v3542
    %v3587 = vmul.f32 %v43, %v3546
    %v3588 = vmul.f32 %v43, %v3550
    %v3589 = vmul.f32 %v43, %v3554
    %v3590 = vmul.f32 %v43, %v3558
    %v3591 = vmul.f32 %v43, %v3562
    %v3592 = vmul.f32 %v43, %v3566
    %v3593 = vmul.f32 %v43, %v3570
    %v3594 = vmul.f32 %v43, %v3574
    %v3597 = vlaneseq
    %v3598 = vshrl.u32 %v3597, 7
    %v3599 = vsub.s32 0, %v3598
    %v3600 = vrot.slane %v3526, %v3599
    %v3601 = vlaneseq
    %v3602 = vshrl.u32 %v3601, 7
    %v3603 = vsub.s32 1, %v3602
    %v3604 = vrot.slane %v3526, %v3603
    %v3605 = vlaneseq
    %v3606 = vshrl.u32 %v3605, 7
    %v3607 = vsub.s32 2, %v3606
    %v3608 = vrot.slane %v3526, %v3607
    %v3609 = vlaneseq
    %v3610 = vshrl.u32 %v3609, 7
    %v3611 = vsub.s32 3, %v3610
    %v3612 = vrot.slane %v3526, %v3611
    %v3613 = vlaneseq
    %v3614 = vshrl.u32 %v3613, 7
    %v3615 = vsub.s32 4, %v3614
    %v3616 = vrot.slane %v3526, %v3615
    %v3617 = vlaneseq
    %v3618 = vshrl.u32 %v3617, 7
    %v3619 = vsub.s32 5, %v3618
    %v3620 = vrot.slane %v3526, %v3619
    %v3621 = vlaneseq
    %v3622 = vshrl.u32 %v3621, 7
    %v3623 = vsub.s32 6, %v3622
    %v3624 = vrot.slane %v3526, %v3623
    %v3625 = vlaneseq
    %v3626 = vshrl.u32 %v3625, 7
    %v3627 = vsub.s32 7, %v3626
    %v3628 = vrot.slane %v3526, %v3627
    %v3629 = vlaneseq
    %v3630 = vshrl.u32 %v3629, 7
    %v3631 = vsub.s32 0, %v3630
    %v3632 = vrot.slane %v3528, %v3631
    %v3633 = vlaneseq
    %v3634 = vshrl.u32 %v3633, 7
    %v3635 = vsub.s32 1, %v3634
    %v3636 = vrot.slane %v3528, %v3635
    %v3647 = vadd.f32 %v3585, %v3600
    %v3648 = vadd.f32 %v3586, %v3604
    %v3649 = vadd.f32 %v3587, %v3608
    %v3650 = vadd.f32 %v3588, %v3612
    %v3651 = vadd.f32 %v3589, %v3616
    %v3652 = vadd.f32 %v3590, %v3620
    %v3653 = vadd.f32 %v3591, %v3624
    %v3654 = vadd.f32 %v3592, %v3628
    %v3655 = vadd.f32 %v3593, %v3632
    %v3656 = vadd.f32 %v3594, %v3636
    %v3657 = vmax.f32 %v3647, 0.0
    %v3658 = vmax.f32 %v3648, 0.0
    %v3659 = vmax.f32 %v3649, 0.0
    %v3660 = vmax.f32 %v3650, 0.0
    %v3661 = vmax.f32 %v3651, 0.0
    %v3662 = vmax.f32 %v3652, 0.0
    %v3663 = vmax.f32 %v3653, 0.0
    %v3664 = vmax.f32 %v3654, 0.0
    %v3665 = vmax.f32 %v3655, 0.0
    %v3666 = vmax.f32 %v3656, 0.0
    %v3669 = vlaneseq
    %v3670 = vshrl.u32 %v3669, 7
    %v3671 = vsub.s32 0, %v3670
    %v3672 = vrot.slane %v3530, %v3671
    %v3673 = vlaneseq
    %v3674 = vshrl.u32 %v3673, 7
    %v3675 = vsub.s32 1, %v3674
    %v3676 = vrot.slane %v3530, %v3675
    %v3677 = vlaneseq
    %v3678 = vshrl.u32 %v3677, 7
    %v3679 = vsub.s32 2, %v3678
    %v3680 = vrot.slane %v3530, %v3679
    %v3681 = vlaneseq
    %v3682 = vshrl.u32 %v3681, 7
    %v3683 = vsub.s32 3, %v3682
    %v3684 = vrot.slane %v3530, %v3683
    %v3685 = vlaneseq
    %v3686 = vshrl.u32 %v3685, 7
    %v3687 = vsub.s32 4, %v3686
    %v3688 = vrot.slane %v3530, %v3687
    %v3689 = vlaneseq
    %v3690 = vshrl.u32 %v3689, 7
    %v3691 = vsub.s32 5, %v3690
    %v3692 = vrot.slane %v3530, %v3691
    %v3693 = vlaneseq
    %v3694 = vshrl.u32 %v3693, 7
    %v3695 = vsub.s32 6, %v3694
    %v3696 = vrot.slane %v3530, %v3695
    %v3697 = vlaneseq
    %v3698 = vshrl.u32 %v3697, 7
    %v3699 = vsub.s32 7, %v3698
    %v3700 = vrot.slane %v3530, %v3699
    %v3701 = vlaneseq
    %v3702 = vshrl.u32 %v3701, 7
    %v3703 = vsub.s32 0, %v3702
    %v3704 = vrot.slane %v3532, %v3703
    %v3705 = vlaneseq
    %v3706 = vshrl.u32 %v3705, 7
    %v3707 = vsub.s32 1, %v3706
    %v3708 = vrot.slane %v3532, %v3707
    %v3719 = vmul.f32 %v3657, %v3672
    %v3720 = vmul.f32 %v3658, %v3676
    %v3721 = vmul.f32 %v3659, %v3680
    %v3722 = vmul.f32 %v3660, %v3684
    %v3723 = vmul.f32 %v3661, %v3688
    %v3724 = vmul.f32 %v3662, %v3692
    %v3725 = vmul.f32 %v3663, %v3696
    %v3726 = vmul.f32 %v3664, %v3700
    %v3727 = vmul.f32 %v3665, %v3704
    %v3728 = vmul.f32 %v3666, %v3708
    %v3729 = vadd.f32 %v3520, %v3719
    %v3730 = vadd.f32 %v3729, %v3720
    %v3731 = vadd.f32 %v3730, %v3721
    %v3732 = vadd.f32 %v3731, %v3722
    %v3733 = vadd.f32 %v3732, %v3723
    %v3734 = vadd.f32 %v3733, %v3724
    %v3735 = vadd.f32 %v3734, %v3725
    %v3736 = vadd.f32 %v3735, %v3726
    %v3737 = vadd.f32 %v3736, %v3727
    %v3738 = vadd.f32 %v3737, %v3728
    %s3739 = scalar_lea.vmem [#allocation3], 680
    %v3740 = vld [vmem:[%s3739] ss:$4 sm:$0xff]
    %s3741 = scalar_lea.vmem %s3739, 32 [#allocation3]
    %v3742 = vld [vmem:[%s3741] ss:$4 sm:$0x3]
    %s3743 = scalar_lea.vmem %s3739, 1 [#allocation3]
    %v3744 = vld [vmem:[%s3743] ss:$4 sm:$0xff]
    %s3745 = scalar_lea.vmem %s3739, 33 [#allocation3]
    %v3746 = vld [vmem:[%s3745] ss:$4 sm:$0x3]
    %s3747 = scalar_lea.vmem %s3739, 2 [#allocation3]
    %v3748 = vld [vmem:[%s3747] ss:$4 sm:$0xff]
    %s3749 = scalar_lea.vmem %s3739, 34 [#allocation3]
    %v3750 = vld [vmem:[%s3749] ss:$4 sm:$0x3]
    %v3753 = vlaneseq
    %v3754 = vshrl.u32 %v3753, 7
    %v3755 = vsub.s32 0, %v3754
    %v3756 = vrot.slane %v3740, %v3755
    %v3757 = vlaneseq
    %v3758 = vshrl.u32 %v3757, 7
    %v3759 = vsub.s32 1, %v3758
    %v3760 = vrot.slane %v3740, %v3759
    %v3761 = vlaneseq
    %v3762 = vshrl.u32 %v3761, 7
    %v3763 = vsub.s32 2, %v3762
    %v3764 = vrot.slane %v3740, %v3763
    %v3765 = vlaneseq
    %v3766 = vshrl.u32 %v3765, 7
    %v3767 = vsub.s32 3, %v3766
    %v3768 = vrot.slane %v3740, %v3767
    %v3769 = vlaneseq
    %v3770 = vshrl.u32 %v3769, 7
    %v3771 = vsub.s32 4, %v3770
    %v3772 = vrot.slane %v3740, %v3771
    %v3773 = vlaneseq
    %v3774 = vshrl.u32 %v3773, 7
    %v3775 = vsub.s32 5, %v3774
    %v3776 = vrot.slane %v3740, %v3775
    %v3777 = vlaneseq
    %v3778 = vshrl.u32 %v3777, 7
    %v3779 = vsub.s32 6, %v3778
    %v3780 = vrot.slane %v3740, %v3779
    %v3781 = vlaneseq
    %v3782 = vshrl.u32 %v3781, 7
    %v3783 = vsub.s32 7, %v3782
    %v3784 = vrot.slane %v3740, %v3783
    %v3785 = vlaneseq
    %v3786 = vshrl.u32 %v3785, 7
    %v3787 = vsub.s32 0, %v3786
    %v3788 = vrot.slane %v3742, %v3787
    %v3789 = vlaneseq
    %v3790 = vshrl.u32 %v3789, 7
    %v3791 = vsub.s32 1, %v3790
    %v3792 = vrot.slane %v3742, %v3791
    %v3803 = vmul.f32 %v43, %v3756
    %v3804 = vmul.f32 %v43, %v3760
    %v3805 = vmul.f32 %v43, %v3764
    %v3806 = vmul.f32 %v43, %v3768
    %v3807 = vmul.f32 %v43, %v3772
    %v3808 = vmul.f32 %v43, %v3776
    %v3809 = vmul.f32 %v43, %v3780
    %v3810 = vmul.f32 %v43, %v3784
    %v3811 = vmul.f32 %v43, %v3788
    %v3812 = vmul.f32 %v43, %v3792
    %v3815 = vlaneseq
    %v3816 = vshrl.u32 %v3815, 7
    %v3817 = vsub.s32 0, %v3816
    %v3818 = vrot.slane %v3744, %v3817
    %v3819 = vlaneseq
    %v3820 = vshrl.u32 %v3819, 7
    %v3821 = vsub.s32 1, %v3820
    %v3822 = vrot.slane %v3744, %v3821
    %v3823 = vlaneseq
    %v3824 = vshrl.u32 %v3823, 7
    %v3825 = vsub.s32 2, %v3824
    %v3826 = vrot.slane %v3744, %v3825
    %v3827 = vlaneseq
    %v3828 = vshrl.u32 %v3827, 7
    %v3829 = vsub.s32 3, %v3828
    %v3830 = vrot.slane %v3744, %v3829
    %v3831 = vlaneseq
    %v3832 = vshrl.u32 %v3831, 7
    %v3833 = vsub.s32 4, %v3832
    %v3834 = vrot.slane %v3744, %v3833
    %v3835 = vlaneseq
    %v3836 = vshrl.u32 %v3835, 7
    %v3837 = vsub.s32 5, %v3836
    %v3838 = vrot.slane %v3744, %v3837
    %v3839 = vlaneseq
    %v3840 = vshrl.u32 %v3839, 7
    %v3841 = vsub.s32 6, %v3840
    %v3842 = vrot.slane %v3744, %v3841
    %v3843 = vlaneseq
    %v3844 = vshrl.u32 %v3843, 7
    %v3845 = vsub.s32 7, %v3844
    %v3846 = vrot.slane %v3744, %v3845
    %v3847 = vlaneseq
    %v3848 = vshrl.u32 %v3847, 7
    %v3849 = vsub.s32 0, %v3848
    %v3850 = vrot.slane %v3746, %v3849
    %v3851 = vlaneseq
    %v3852 = vshrl.u32 %v3851, 7
    %v3853 = vsub.s32 1, %v3852
    %v3854 = vrot.slane %v3746, %v3853
    %v3865 = vadd.f32 %v3803, %v3818
    %v3866 = vadd.f32 %v3804, %v3822
    %v3867 = vadd.f32 %v3805, %v3826
    %v3868 = vadd.f32 %v3806, %v3830
    %v3869 = vadd.f32 %v3807, %v3834
    %v3870 = vadd.f32 %v3808, %v3838
    %v3871 = vadd.f32 %v3809, %v3842
    %v3872 = vadd.f32 %v3810, %v3846
    %v3873 = vadd.f32 %v3811, %v3850
    %v3874 = vadd.f32 %v3812, %v3854
    %v3875 = vmax.f32 %v3865, 0.0
    %v3876 = vmax.f32 %v3866, 0.0
    %v3877 = vmax.f32 %v3867, 0.0
    %v3878 = vmax.f32 %v3868, 0.0
    %v3879 = vmax.f32 %v3869, 0.0
    %v3880 = vmax.f32 %v3870, 0.0
    %v3881 = vmax.f32 %v3871, 0.0
    %v3882 = vmax.f32 %v3872, 0.0
    %v3883 = vmax.f32 %v3873, 0.0
    %v3884 = vmax.f32 %v3874, 0.0
    %v3887 = vlaneseq
    %v3888 = vshrl.u32 %v3887, 7
    %v3889 = vsub.s32 0, %v3888
    %v3890 = vrot.slane %v3748, %v3889
    %v3891 = vlaneseq
    %v3892 = vshrl.u32 %v3891, 7
    %v3893 = vsub.s32 1, %v3892
    %v3894 = vrot.slane %v3748, %v3893
    %v3895 = vlaneseq
    %v3896 = vshrl.u32 %v3895, 7
    %v3897 = vsub.s32 2, %v3896
    %v3898 = vrot.slane %v3748, %v3897
    %v3899 = vlaneseq
    %v3900 = vshrl.u32 %v3899, 7
    %v3901 = vsub.s32 3, %v3900
    %v3902 = vrot.slane %v3748, %v3901
    %v3903 = vlaneseq
    %v3904 = vshrl.u32 %v3903, 7
    %v3905 = vsub.s32 4, %v3904
    %v3906 = vrot.slane %v3748, %v3905
    %v3907 = vlaneseq
    %v3908 = vshrl.u32 %v3907, 7
    %v3909 = vsub.s32 5, %v3908
    %v3910 = vrot.slane %v3748, %v3909
    %v3911 = vlaneseq
    %v3912 = vshrl.u32 %v3911, 7
    %v3913 = vsub.s32 6, %v3912
    %v3914 = vrot.slane %v3748, %v3913
    %v3915 = vlaneseq
    %v3916 = vshrl.u32 %v3915, 7
    %v3917 = vsub.s32 7, %v3916
    %v3918 = vrot.slane %v3748, %v3917
    %v3919 = vlaneseq
    %v3920 = vshrl.u32 %v3919, 7
    %v3921 = vsub.s32 0, %v3920
    %v3922 = vrot.slane %v3750, %v3921
    %v3923 = vlaneseq
    %v3924 = vshrl.u32 %v3923, 7
    %v3925 = vsub.s32 1, %v3924
    %v3926 = vrot.slane %v3750, %v3925
    %v3937 = vmul.f32 %v3875, %v3890
    %v3938 = vmul.f32 %v3876, %v3894
    %v3939 = vmul.f32 %v3877, %v3898
    %v3940 = vmul.f32 %v3878, %v3902
    %v3941 = vmul.f32 %v3879, %v3906
    %v3942 = vmul.f32 %v3880, %v3910
    %v3943 = vmul.f32 %v3881, %v3914
    %v3944 = vmul.f32 %v3882, %v3918
    %v3945 = vmul.f32 %v3883, %v3922
    %v3946 = vmul.f32 %v3884, %v3926
    %v3947 = vadd.f32 %v3738, %v3937
    %v3948 = vadd.f32 %v3947, %v3938
    %v3949 = vadd.f32 %v3948, %v3939
    %v3950 = vadd.f32 %v3949, %v3940
    %v3951 = vadd.f32 %v3950, %v3941
    %v3952 = vadd.f32 %v3951, %v3942
    %v3953 = vadd.f32 %v3952, %v3943
    %v3954 = vadd.f32 %v3953, %v3944
    %v3955 = vadd.f32 %v3954, %v3945
    %v3956 = vadd.f32 %v3955, %v3946
    %s3957 = scalar_lea.vmem [#allocation3], 720
    %v3958 = vld [vmem:[%s3957] ss:$4 sm:$0xff]
    %s3959 = scalar_lea.vmem %s3957, 32 [#allocation3]
    %v3960 = vld [vmem:[%s3959] ss:$4 sm:$0x3]
    %s3961 = scalar_lea.vmem %s3957, 1 [#allocation3]
    %v3962 = vld [vmem:[%s3961] ss:$4 sm:$0xff]
    %s3963 = scalar_lea.vmem %s3957, 33 [#allocation3]
    %v3964 = vld [vmem:[%s3963] ss:$4 sm:$0x3]
    %s3965 = scalar_lea.vmem %s3957, 2 [#allocation3]
    %v3966 = vld [vmem:[%s3965] ss:$4 sm:$0xff]
    %s3967 = scalar_lea.vmem %s3957, 34 [#allocation3]
    %v3968 = vld [vmem:[%s3967] ss:$4 sm:$0x3]
    %v3971 = vlaneseq
    %v3972 = vshrl.u32 %v3971, 7
    %v3973 = vsub.s32 0, %v3972
    %v3974 = vrot.slane %v3958, %v3973
    %v3975 = vlaneseq
    %v3976 = vshrl.u32 %v3975, 7
    %v3977 = vsub.s32 1, %v3976
    %v3978 = vrot.slane %v3958, %v3977
    %v3979 = vlaneseq
    %v3980 = vshrl.u32 %v3979, 7
    %v3981 = vsub.s32 2, %v3980
    %v3982 = vrot.slane %v3958, %v3981
    %v3983 = vlaneseq
    %v3984 = vshrl.u32 %v3983, 7
    %v3985 = vsub.s32 3, %v3984
    %v3986 = vrot.slane %v3958, %v3985
    %v3987 = vlaneseq
    %v3988 = vshrl.u32 %v3987, 7
    %v3989 = vsub.s32 4, %v3988
    %v3990 = vrot.slane %v3958, %v3989
    %v3991 = vlaneseq
    %v3992 = vshrl.u32 %v3991, 7
    %v3993 = vsub.s32 5, %v3992
    %v3994 = vrot.slane %v3958, %v3993
    %v3995 = vlaneseq
    %v3996 = vshrl.u32 %v3995, 7
    %v3997 = vsub.s32 6, %v3996
    %v3998 = vrot.slane %v3958, %v3997
    %v3999 = vlaneseq
    %v4000 = vshrl.u32 %v3999, 7
    %v4001 = vsub.s32 7, %v4000
    %v4002 = vrot.slane %v3958, %v4001
    %v4003 = vlaneseq
    %v4004 = vshrl.u32 %v4003, 7
    %v4005 = vsub.s32 0, %v4004
    %v4006 = vrot.slane %v3960, %v4005
    %v4007 = vlaneseq
    %v4008 = vshrl.u32 %v4007, 7
    %v4009 = vsub.s32 1, %v4008
    %v4010 = vrot.slane %v3960, %v4009
    %v4021 = vmul.f32 %v43, %v3974
    %v4022 = vmul.f32 %v43, %v3978
    %v4023 = vmul.f32 %v43, %v3982
    %v4024 = vmul.f32 %v43, %v3986
    %v4025 = vmul.f32 %v43, %v3990
    %v4026 = vmul.f32 %v43, %v3994
    %v4027 = vmul.f32 %v43, %v3998
    %v4028 = vmul.f32 %v43, %v4002
    %v4029 = vmul.f32 %v43, %v4006
    %v4030 = vmul.f32 %v43, %v4010
    %v4033 = vlaneseq
    %v4034 = vshrl.u32 %v4033, 7
    %v4035 = vsub.s32 0, %v4034
    %v4036 = vrot.slane %v3962, %v4035
    %v4037 = vlaneseq
    %v4038 = vshrl.u32 %v4037, 7
    %v4039 = vsub.s32 1, %v4038
    %v4040 = vrot.slane %v3962, %v4039
    %v4041 = vlaneseq
    %v4042 = vshrl.u32 %v4041, 7
    %v4043 = vsub.s32 2, %v4042
    %v4044 = vrot.slane %v3962, %v4043
    %v4045 = vlaneseq
    %v4046 = vshrl.u32 %v4045, 7
    %v4047 = vsub.s32 3, %v4046
    %v4048 = vrot.slane %v3962, %v4047
    %v4049 = vlaneseq
    %v4050 = vshrl.u32 %v4049, 7
    %v4051 = vsub.s32 4, %v4050
    %v4052 = vrot.slane %v3962, %v4051
    %v4053 = vlaneseq
    %v4054 = vshrl.u32 %v4053, 7
    %v4055 = vsub.s32 5, %v4054
    %v4056 = vrot.slane %v3962, %v4055
    %v4057 = vlaneseq
    %v4058 = vshrl.u32 %v4057, 7
    %v4059 = vsub.s32 6, %v4058
    %v4060 = vrot.slane %v3962, %v4059
    %v4061 = vlaneseq
    %v4062 = vshrl.u32 %v4061, 7
    %v4063 = vsub.s32 7, %v4062
    %v4064 = vrot.slane %v3962, %v4063
    %v4065 = vlaneseq
    %v4066 = vshrl.u32 %v4065, 7
    %v4067 = vsub.s32 0, %v4066
    %v4068 = vrot.slane %v3964, %v4067
    %v4069 = vlaneseq
    %v4070 = vshrl.u32 %v4069, 7
    %v4071 = vsub.s32 1, %v4070
    %v4072 = vrot.slane %v3964, %v4071
    %v4083 = vadd.f32 %v4021, %v4036
    %v4084 = vadd.f32 %v4022, %v4040
    %v4085 = vadd.f32 %v4023, %v4044
    %v4086 = vadd.f32 %v4024, %v4048
    %v4087 = vadd.f32 %v4025, %v4052
    %v4088 = vadd.f32 %v4026, %v4056
    %v4089 = vadd.f32 %v4027, %v4060
    %v4090 = vadd.f32 %v4028, %v4064
    %v4091 = vadd.f32 %v4029, %v4068
    %v4092 = vadd.f32 %v4030, %v4072
    %v4093 = vmax.f32 %v4083, 0.0
    %v4094 = vmax.f32 %v4084, 0.0
    %v4095 = vmax.f32 %v4085, 0.0
    %v4096 = vmax.f32 %v4086, 0.0
    %v4097 = vmax.f32 %v4087, 0.0
    %v4098 = vmax.f32 %v4088, 0.0
    %v4099 = vmax.f32 %v4089, 0.0
    %v4100 = vmax.f32 %v4090, 0.0
    %v4101 = vmax.f32 %v4091, 0.0
    %v4102 = vmax.f32 %v4092, 0.0
    %v4105 = vlaneseq
    %v4106 = vshrl.u32 %v4105, 7
    %v4107 = vsub.s32 0, %v4106
    %v4108 = vrot.slane %v3966, %v4107
    %v4109 = vlaneseq
    %v4110 = vshrl.u32 %v4109, 7
    %v4111 = vsub.s32 1, %v4110
    %v4112 = vrot.slane %v3966, %v4111
    %v4113 = vlaneseq
    %v4114 = vshrl.u32 %v4113, 7
    %v4115 = vsub.s32 2, %v4114
    %v4116 = vrot.slane %v3966, %v4115
    %v4117 = vlaneseq
    %v4118 = vshrl.u32 %v4117, 7
    %v4119 = vsub.s32 3, %v4118
    %v4120 = vrot.slane %v3966, %v4119
    %v4121 = vlaneseq
    %v4122 = vshrl.u32 %v4121, 7
    %v4123 = vsub.s32 4, %v4122
    %v4124 = vrot.slane %v3966, %v4123
    %v4125 = vlaneseq
    %v4126 = vshrl.u32 %v4125, 7
    %v4127 = vsub.s32 5, %v4126
    %v4128 = vrot.slane %v3966, %v4127
    %v4129 = vlaneseq
    %v4130 = vshrl.u32 %v4129, 7
    %v4131 = vsub.s32 6, %v4130
    %v4132 = vrot.slane %v3966, %v4131
    %v4133 = vlaneseq
    %v4134 = vshrl.u32 %v4133, 7
    %v4135 = vsub.s32 7, %v4134
    %v4136 = vrot.slane %v3966, %v4135
    %v4137 = vlaneseq
    %v4138 = vshrl.u32 %v4137, 7
    %v4139 = vsub.s32 0, %v4138
    %v4140 = vrot.slane %v3968, %v4139
    %v4141 = vlaneseq
    %v4142 = vshrl.u32 %v4141, 7
    %v4143 = vsub.s32 1, %v4142
    %v4144 = vrot.slane %v3968, %v4143
    %v4155 = vmul.f32 %v4093, %v4108
    %v4156 = vmul.f32 %v4094, %v4112
    %v4157 = vmul.f32 %v4095, %v4116
    %v4158 = vmul.f32 %v4096, %v4120
    %v4159 = vmul.f32 %v4097, %v4124
    %v4160 = vmul.f32 %v4098, %v4128
    %v4161 = vmul.f32 %v4099, %v4132
    %v4162 = vmul.f32 %v4100, %v4136
    %v4163 = vmul.f32 %v4101, %v4140
    %v4164 = vmul.f32 %v4102, %v4144
    %v4165 = vadd.f32 %v3956, %v4155
    %v4166 = vadd.f32 %v4165, %v4156
    %v4167 = vadd.f32 %v4166, %v4157
    %v4168 = vadd.f32 %v4167, %v4158
    %v4169 = vadd.f32 %v4168, %v4159
    %v4170 = vadd.f32 %v4169, %v4160
    %v4171 = vadd.f32 %v4170, %v4161
    %v4172 = vadd.f32 %v4171, %v4162
    %v4173 = vadd.f32 %v4172, %v4163
    %v4174 = vadd.f32 %v4173, %v4164
    %s4175 = scalar_lea.vmem [#allocation3], 760
    %v4176 = vld [vmem:[%s4175] ss:$4 sm:$0xff]
    %s4177 = scalar_lea.vmem %s4175, 32 [#allocation3]
    %v4178 = vld [vmem:[%s4177] ss:$4 sm:$0x3]
    %s4179 = scalar_lea.vmem %s4175, 1 [#allocation3]
    %v4180 = vld [vmem:[%s4179] ss:$4 sm:$0xff]
    %s4181 = scalar_lea.vmem %s4175, 33 [#allocation3]
    %v4182 = vld [vmem:[%s4181] ss:$4 sm:$0x3]
    %s4183 = scalar_lea.vmem %s4175, 2 [#allocation3]
    %v4184 = vld [vmem:[%s4183] ss:$4 sm:$0xff]
    %s4185 = scalar_lea.vmem %s4175, 34 [#allocation3]
    %v4186 = vld [vmem:[%s4185] ss:$4 sm:$0x3]
    %v4189 = vlaneseq
    %v4190 = vshrl.u32 %v4189, 7
    %v4191 = vsub.s32 0, %v4190
    %v4192 = vrot.slane %v4176, %v4191
    %v4193 = vlaneseq
    %v4194 = vshrl.u32 %v4193, 7
    %v4195 = vsub.s32 1, %v4194
    %v4196 = vrot.slane %v4176, %v4195
    %v4197 = vlaneseq
    %v4198 = vshrl.u32 %v4197, 7
    %v4199 = vsub.s32 2, %v4198
    %v4200 = vrot.slane %v4176, %v4199
    %v4201 = vlaneseq
    %v4202 = vshrl.u32 %v4201, 7
    %v4203 = vsub.s32 3, %v4202
    %v4204 = vrot.slane %v4176, %v4203
    %v4205 = vlaneseq
    %v4206 = vshrl.u32 %v4205, 7
    %v4207 = vsub.s32 4, %v4206
    %v4208 = vrot.slane %v4176, %v4207
    %v4209 = vlaneseq
    %v4210 = vshrl.u32 %v4209, 7
    %v4211 = vsub.s32 5, %v4210
    %v4212 = vrot.slane %v4176, %v4211
    %v4213 = vlaneseq
    %v4214 = vshrl.u32 %v4213, 7
    %v4215 = vsub.s32 6, %v4214
    %v4216 = vrot.slane %v4176, %v4215
    %v4217 = vlaneseq
    %v4218 = vshrl.u32 %v4217, 7
    %v4219 = vsub.s32 7, %v4218
    %v4220 = vrot.slane %v4176, %v4219
    %v4221 = vlaneseq
    %v4222 = vshrl.u32 %v4221, 7
    %v4223 = vsub.s32 0, %v4222
    %v4224 = vrot.slane %v4178, %v4223
    %v4225 = vlaneseq
    %v4226 = vshrl.u32 %v4225, 7
    %v4227 = vsub.s32 1, %v4226
    %v4228 = vrot.slane %v4178, %v4227
    %v4239 = vmul.f32 %v43, %v4192
    %v4240 = vmul.f32 %v43, %v4196
    %v4241 = vmul.f32 %v43, %v4200
    %v4242 = vmul.f32 %v43, %v4204
    %v4243 = vmul.f32 %v43, %v4208
    %v4244 = vmul.f32 %v43, %v4212
    %v4245 = vmul.f32 %v43, %v4216
    %v4246 = vmul.f32 %v43, %v4220
    %v4247 = vmul.f32 %v43, %v4224
    %v4248 = vmul.f32 %v43, %v4228
    %v4251 = vlaneseq
    %v4252 = vshrl.u32 %v4251, 7
    %v4253 = vsub.s32 0, %v4252
    %v4254 = vrot.slane %v4180, %v4253
    %v4255 = vlaneseq
    %v4256 = vshrl.u32 %v4255, 7
    %v4257 = vsub.s32 1, %v4256
    %v4258 = vrot.slane %v4180, %v4257
    %v4259 = vlaneseq
    %v4260 = vshrl.u32 %v4259, 7
    %v4261 = vsub.s32 2, %v4260
    %v4262 = vrot.slane %v4180, %v4261
    %v4263 = vlaneseq
    %v4264 = vshrl.u32 %v4263, 7
    %v4265 = vsub.s32 3, %v4264
    %v4266 = vrot.slane %v4180, %v4265
    %v4267 = vlaneseq
    %v4268 = vshrl.u32 %v4267, 7
    %v4269 = vsub.s32 4, %v4268
    %v4270 = vrot.slane %v4180, %v4269
    %v4271 = vlaneseq
    %v4272 = vshrl.u32 %v4271, 7
    %v4273 = vsub.s32 5, %v4272
    %v4274 = vrot.slane %v4180, %v4273
    %v4275 = vlaneseq
    %v4276 = vshrl.u32 %v4275, 7
    %v4277 = vsub.s32 6, %v4276
    %v4278 = vrot.slane %v4180, %v4277
    %v4279 = vlaneseq
    %v4280 = vshrl.u32 %v4279, 7
    %v4281 = vsub.s32 7, %v4280
    %v4282 = vrot.slane %v4180, %v4281
    %v4283 = vlaneseq
    %v4284 = vshrl.u32 %v4283, 7
    %v4285 = vsub.s32 0, %v4284
    %v4286 = vrot.slane %v4182, %v4285
    %v4287 = vlaneseq
    %v4288 = vshrl.u32 %v4287, 7
    %v4289 = vsub.s32 1, %v4288
    %v4290 = vrot.slane %v4182, %v4289
    %v4301 = vadd.f32 %v4239, %v4254
    %v4302 = vadd.f32 %v4240, %v4258
    %v4303 = vadd.f32 %v4241, %v4262
    %v4304 = vadd.f32 %v4242, %v4266
    %v4305 = vadd.f32 %v4243, %v4270
    %v4306 = vadd.f32 %v4244, %v4274
    %v4307 = vadd.f32 %v4245, %v4278
    %v4308 = vadd.f32 %v4246, %v4282
    %v4309 = vadd.f32 %v4247, %v4286
    %v4310 = vadd.f32 %v4248, %v4290
    %v4311 = vmax.f32 %v4301, 0.0
    %v4312 = vmax.f32 %v4302, 0.0
    %v4313 = vmax.f32 %v4303, 0.0
    %v4314 = vmax.f32 %v4304, 0.0
    %v4315 = vmax.f32 %v4305, 0.0
    %v4316 = vmax.f32 %v4306, 0.0
    %v4317 = vmax.f32 %v4307, 0.0
    %v4318 = vmax.f32 %v4308, 0.0
    %v4319 = vmax.f32 %v4309, 0.0
    %v4320 = vmax.f32 %v4310, 0.0
    %v4323 = vlaneseq
    %v4324 = vshrl.u32 %v4323, 7
    %v4325 = vsub.s32 0, %v4324
    %v4326 = vrot.slane %v4184, %v4325
    %v4327 = vlaneseq
    %v4328 = vshrl.u32 %v4327, 7
    %v4329 = vsub.s32 1, %v4328
    %v4330 = vrot.slane %v4184, %v4329
    %v4331 = vlaneseq
    %v4332 = vshrl.u32 %v4331, 7
    %v4333 = vsub.s32 2, %v4332
    %v4334 = vrot.slane %v4184, %v4333
    %v4335 = vlaneseq
    %v4336 = vshrl.u32 %v4335, 7
    %v4337 = vsub.s32 3, %v4336
    %v4338 = vrot.slane %v4184, %v4337
    %v4339 = vlaneseq
    %v4340 = vshrl.u32 %v4339, 7
    %v4341 = vsub.s32 4, %v4340
    %v4342 = vrot.slane %v4184, %v4341
    %v4343 = vlaneseq
    %v4344 = vshrl.u32 %v4343, 7
    %v4345 = vsub.s32 5, %v4344
    %v4346 = vrot.slane %v4184, %v4345
    %v4347 = vlaneseq
    %v4348 = vshrl.u32 %v4347, 7
    %v4349 = vsub.s32 6, %v4348
    %v4350 = vrot.slane %v4184, %v4349
    %v4351 = vlaneseq
    %v4352 = vshrl.u32 %v4351, 7
    %v4353 = vsub.s32 7, %v4352
    %v4354 = vrot.slane %v4184, %v4353
    %v4355 = vlaneseq
    %v4356 = vshrl.u32 %v4355, 7
    %v4357 = vsub.s32 0, %v4356
    %v4358 = vrot.slane %v4186, %v4357
    %v4359 = vlaneseq
    %v4360 = vshrl.u32 %v4359, 7
    %v4361 = vsub.s32 1, %v4360
    %v4362 = vrot.slane %v4186, %v4361
    %v4373 = vmul.f32 %v4311, %v4326
    %v4374 = vmul.f32 %v4312, %v4330
    %v4375 = vmul.f32 %v4313, %v4334
    %v4376 = vmul.f32 %v4314, %v4338
    %v4377 = vmul.f32 %v4315, %v4342
    %v4378 = vmul.f32 %v4316, %v4346
    %v4379 = vmul.f32 %v4317, %v4350
    %v4380 = vmul.f32 %v4318, %v4354
    %v4381 = vmul.f32 %v4319, %v4358
    %v4382 = vmul.f32 %v4320, %v4362
    %v4383 = vadd.f32 %v4174, %v4373
    %v4384 = vadd.f32 %v4383, %v4374
    %v4385 = vadd.f32 %v4384, %v4375
    %v4386 = vadd.f32 %v4385, %v4376
    %v4387 = vadd.f32 %v4386, %v4377
    %v4388 = vadd.f32 %v4387, %v4378
    %v4389 = vadd.f32 %v4388, %v4379
    %v4390 = vadd.f32 %v4389, %v4380
    %v4391 = vadd.f32 %v4390, %v4381
    %v4392 = vadd.f32 %v4391, %v4382
    %s4393 = scalar_lea.vmem [#allocation3], 800
    %v4394 = vld [vmem:[%s4393] ss:$4 sm:$0xff]
    %s4395 = scalar_lea.vmem %s4393, 32 [#allocation3]
    %v4396 = vld [vmem:[%s4395] ss:$4 sm:$0x3]
    %s4397 = scalar_lea.vmem %s4393, 1 [#allocation3]
    %v4398 = vld [vmem:[%s4397] ss:$4 sm:$0xff]
    %s4399 = scalar_lea.vmem %s4393, 33 [#allocation3]
    %v4400 = vld [vmem:[%s4399] ss:$4 sm:$0x3]
    %s4401 = scalar_lea.vmem %s4393, 2 [#allocation3]
    %v4402 = vld [vmem:[%s4401] ss:$4 sm:$0xff]
    %s4403 = scalar_lea.vmem %s4393, 34 [#allocation3]
    %v4404 = vld [vmem:[%s4403] ss:$4 sm:$0x3]
    %v4407 = vlaneseq
    %v4408 = vshrl.u32 %v4407, 7
    %v4409 = vsub.s32 0, %v4408
    %v4410 = vrot.slane %v4394, %v4409
    %v4411 = vlaneseq
    %v4412 = vshrl.u32 %v4411, 7
    %v4413 = vsub.s32 1, %v4412
    %v4414 = vrot.slane %v4394, %v4413
    %v4415 = vlaneseq
    %v4416 = vshrl.u32 %v4415, 7
    %v4417 = vsub.s32 2, %v4416
    %v4418 = vrot.slane %v4394, %v4417
    %v4419 = vlaneseq
    %v4420 = vshrl.u32 %v4419, 7
    %v4421 = vsub.s32 3, %v4420
    %v4422 = vrot.slane %v4394, %v4421
    %v4423 = vlaneseq
    %v4424 = vshrl.u32 %v4423, 7
    %v4425 = vsub.s32 4, %v4424
    %v4426 = vrot.slane %v4394, %v4425
    %v4427 = vlaneseq
    %v4428 = vshrl.u32 %v4427, 7
    %v4429 = vsub.s32 5, %v4428
    %v4430 = vrot.slane %v4394, %v4429
    %v4431 = vlaneseq
    %v4432 = vshrl.u32 %v4431, 7
    %v4433 = vsub.s32 6, %v4432
    %v4434 = vrot.slane %v4394, %v4433
    %v4435 = vlaneseq
    %v4436 = vshrl.u32 %v4435, 7
    %v4437 = vsub.s32 7, %v4436
    %v4438 = vrot.slane %v4394, %v4437
    %v4439 = vlaneseq
    %v4440 = vshrl.u32 %v4439, 7
    %v4441 = vsub.s32 0, %v4440
    %v4442 = vrot.slane %v4396, %v4441
    %v4443 = vlaneseq
    %v4444 = vshrl.u32 %v4443, 7
    %v4445 = vsub.s32 1, %v4444
    %v4446 = vrot.slane %v4396, %v4445
    %v4457 = vmul.f32 %v43, %v4410
    %v4458 = vmul.f32 %v43, %v4414
    %v4459 = vmul.f32 %v43, %v4418
    %v4460 = vmul.f32 %v43, %v4422
    %v4461 = vmul.f32 %v43, %v4426
    %v4462 = vmul.f32 %v43, %v4430
    %v4463 = vmul.f32 %v43, %v4434
    %v4464 = vmul.f32 %v43, %v4438
    %v4465 = vmul.f32 %v43, %v4442
    %v4466 = vmul.f32 %v43, %v4446
    %v4469 = vlaneseq
    %v4470 = vshrl.u32 %v4469, 7
    %v4471 = vsub.s32 0, %v4470
    %v4472 = vrot.slane %v4398, %v4471
    %v4473 = vlaneseq
    %v4474 = vshrl.u32 %v4473, 7
    %v4475 = vsub.s32 1, %v4474
    %v4476 = vrot.slane %v4398, %v4475
    %v4477 = vlaneseq
    %v4478 = vshrl.u32 %v4477, 7
    %v4479 = vsub.s32 2, %v4478
    %v4480 = vrot.slane %v4398, %v4479
    %v4481 = vlaneseq
    %v4482 = vshrl.u32 %v4481, 7
    %v4483 = vsub.s32 3, %v4482
    %v4484 = vrot.slane %v4398, %v4483
    %v4485 = vlaneseq
    %v4486 = vshrl.u32 %v4485, 7
    %v4487 = vsub.s32 4, %v4486
    %v4488 = vrot.slane %v4398, %v4487
    %v4489 = vlaneseq
    %v4490 = vshrl.u32 %v4489, 7
    %v4491 = vsub.s32 5, %v4490
    %v4492 = vrot.slane %v4398, %v4491
    %v4493 = vlaneseq
    %v4494 = vshrl.u32 %v4493, 7
    %v4495 = vsub.s32 6, %v4494
    %v4496 = vrot.slane %v4398, %v4495
    %v4497 = vlaneseq
    %v4498 = vshrl.u32 %v4497, 7
    %v4499 = vsub.s32 7, %v4498
    %v4500 = vrot.slane %v4398, %v4499
    %v4501 = vlaneseq
    %v4502 = vshrl.u32 %v4501, 7
    %v4503 = vsub.s32 0, %v4502
    %v4504 = vrot.slane %v4400, %v4503
    %v4505 = vlaneseq
    %v4506 = vshrl.u32 %v4505, 7
    %v4507 = vsub.s32 1, %v4506
    %v4508 = vrot.slane %v4400, %v4507
    %v4519 = vadd.f32 %v4457, %v4472
    %v4520 = vadd.f32 %v4458, %v4476
    %v4521 = vadd.f32 %v4459, %v4480
    %v4522 = vadd.f32 %v4460, %v4484
    %v4523 = vadd.f32 %v4461, %v4488
    %v4524 = vadd.f32 %v4462, %v4492
    %v4525 = vadd.f32 %v4463, %v4496
    %v4526 = vadd.f32 %v4464, %v4500
    %v4527 = vadd.f32 %v4465, %v4504
    %v4528 = vadd.f32 %v4466, %v4508
    %v4529 = vmax.f32 %v4519, 0.0
    %v4530 = vmax.f32 %v4520, 0.0
    %v4531 = vmax.f32 %v4521, 0.0
    %v4532 = vmax.f32 %v4522, 0.0
    %v4533 = vmax.f32 %v4523, 0.0
    %v4534 = vmax.f32 %v4524, 0.0
    %v4535 = vmax.f32 %v4525, 0.0
    %v4536 = vmax.f32 %v4526, 0.0
    %v4537 = vmax.f32 %v4527, 0.0
    %v4538 = vmax.f32 %v4528, 0.0
    %v4541 = vlaneseq
    %v4542 = vshrl.u32 %v4541, 7
    %v4543 = vsub.s32 0, %v4542
    %v4544 = vrot.slane %v4402, %v4543
    %v4545 = vlaneseq
    %v4546 = vshrl.u32 %v4545, 7
    %v4547 = vsub.s32 1, %v4546
    %v4548 = vrot.slane %v4402, %v4547
    %v4549 = vlaneseq
    %v4550 = vshrl.u32 %v4549, 7
    %v4551 = vsub.s32 2, %v4550
    %v4552 = vrot.slane %v4402, %v4551
    %v4553 = vlaneseq
    %v4554 = vshrl.u32 %v4553, 7
    %v4555 = vsub.s32 3, %v4554
    %v4556 = vrot.slane %v4402, %v4555
    %v4557 = vlaneseq
    %v4558 = vshrl.u32 %v4557, 7
    %v4559 = vsub.s32 4, %v4558
    %v4560 = vrot.slane %v4402, %v4559
    %v4561 = vlaneseq
    %v4562 = vshrl.u32 %v4561, 7
    %v4563 = vsub.s32 5, %v4562
    %v4564 = vrot.slane %v4402, %v4563
    %v4565 = vlaneseq
    %v4566 = vshrl.u32 %v4565, 7
    %v4567 = vsub.s32 6, %v4566
    %v4568 = vrot.slane %v4402, %v4567
    %v4569 = vlaneseq
    %v4570 = vshrl.u32 %v4569, 7
    %v4571 = vsub.s32 7, %v4570
    %v4572 = vrot.slane %v4402, %v4571
    %v4573 = vlaneseq
    %v4574 = vshrl.u32 %v4573, 7
    %v4575 = vsub.s32 0, %v4574
    %v4576 = vrot.slane %v4404, %v4575
    %v4577 = vlaneseq
    %v4578 = vshrl.u32 %v4577, 7
    %v4579 = vsub.s32 1, %v4578
    %v4580 = vrot.slane %v4404, %v4579
    %v4591 = vmul.f32 %v4529, %v4544
    %v4592 = vmul.f32 %v4530, %v4548
    %v4593 = vmul.f32 %v4531, %v4552
    %v4594 = vmul.f32 %v4532, %v4556
    %v4595 = vmul.f32 %v4533, %v4560
    %v4596 = vmul.f32 %v4534, %v4564
    %v4597 = vmul.f32 %v4535, %v4568
    %v4598 = vmul.f32 %v4536, %v4572
    %v4599 = vmul.f32 %v4537, %v4576
    %v4600 = vmul.f32 %v4538, %v4580
    %v4601 = vadd.f32 %v4392, %v4591
    %v4602 = vadd.f32 %v4601, %v4592
    %v4603 = vadd.f32 %v4602, %v4593
    %v4604 = vadd.f32 %v4603, %v4594
    %v4605 = vadd.f32 %v4604, %v4595
    %v4606 = vadd.f32 %v4605, %v4596
    %v4607 = vadd.f32 %v4606, %v4597
    %v4608 = vadd.f32 %v4607, %v4598
    %v4609 = vadd.f32 %v4608, %v4599
    %v4610 = vadd.f32 %v4609, %v4600
    %s4611 = scalar_lea.vmem [#allocation3], 840
    %v4612 = vld [vmem:[%s4611] ss:$4 sm:$0xff]
    %s4613 = scalar_lea.vmem %s4611, 32 [#allocation3]
    %v4614 = vld [vmem:[%s4613] ss:$4 sm:$0x3]
    %s4615 = scalar_lea.vmem %s4611, 1 [#allocation3]
    %v4616 = vld [vmem:[%s4615] ss:$4 sm:$0xff]
    %s4617 = scalar_lea.vmem %s4611, 33 [#allocation3]
    %v4618 = vld [vmem:[%s4617] ss:$4 sm:$0x3]
    %s4619 = scalar_lea.vmem %s4611, 2 [#allocation3]
    %v4620 = vld [vmem:[%s4619] ss:$4 sm:$0xff]
    %s4621 = scalar_lea.vmem %s4611, 34 [#allocation3]
    %v4622 = vld [vmem:[%s4621] ss:$4 sm:$0x3]
    %v4625 = vlaneseq
    %v4626 = vshrl.u32 %v4625, 7
    %v4627 = vsub.s32 0, %v4626
    %v4628 = vrot.slane %v4612, %v4627
    %v4629 = vlaneseq
    %v4630 = vshrl.u32 %v4629, 7
    %v4631 = vsub.s32 1, %v4630
    %v4632 = vrot.slane %v4612, %v4631
    %v4633 = vlaneseq
    %v4634 = vshrl.u32 %v4633, 7
    %v4635 = vsub.s32 2, %v4634
    %v4636 = vrot.slane %v4612, %v4635
    %v4637 = vlaneseq
    %v4638 = vshrl.u32 %v4637, 7
    %v4639 = vsub.s32 3, %v4638
    %v4640 = vrot.slane %v4612, %v4639
    %v4641 = vlaneseq
    %v4642 = vshrl.u32 %v4641, 7
    %v4643 = vsub.s32 4, %v4642
    %v4644 = vrot.slane %v4612, %v4643
    %v4645 = vlaneseq
    %v4646 = vshrl.u32 %v4645, 7
    %v4647 = vsub.s32 5, %v4646
    %v4648 = vrot.slane %v4612, %v4647
    %v4649 = vlaneseq
    %v4650 = vshrl.u32 %v4649, 7
    %v4651 = vsub.s32 6, %v4650
    %v4652 = vrot.slane %v4612, %v4651
    %v4653 = vlaneseq
    %v4654 = vshrl.u32 %v4653, 7
    %v4655 = vsub.s32 7, %v4654
    %v4656 = vrot.slane %v4612, %v4655
    %v4657 = vlaneseq
    %v4658 = vshrl.u32 %v4657, 7
    %v4659 = vsub.s32 0, %v4658
    %v4660 = vrot.slane %v4614, %v4659
    %v4661 = vlaneseq
    %v4662 = vshrl.u32 %v4661, 7
    %v4663 = vsub.s32 1, %v4662
    %v4664 = vrot.slane %v4614, %v4663
    %v4675 = vmul.f32 %v43, %v4628
    %v4676 = vmul.f32 %v43, %v4632
    %v4677 = vmul.f32 %v43, %v4636
    %v4678 = vmul.f32 %v43, %v4640
    %v4679 = vmul.f32 %v43, %v4644
    %v4680 = vmul.f32 %v43, %v4648
    %v4681 = vmul.f32 %v43, %v4652
    %v4682 = vmul.f32 %v43, %v4656
    %v4683 = vmul.f32 %v43, %v4660
    %v4684 = vmul.f32 %v43, %v4664
    %v4687 = vlaneseq
    %v4688 = vshrl.u32 %v4687, 7
    %v4689 = vsub.s32 0, %v4688
    %v4690 = vrot.slane %v4616, %v4689
    %v4691 = vlaneseq
    %v4692 = vshrl.u32 %v4691, 7
    %v4693 = vsub.s32 1, %v4692
    %v4694 = vrot.slane %v4616, %v4693
    %v4695 = vlaneseq
    %v4696 = vshrl.u32 %v4695, 7
    %v4697 = vsub.s32 2, %v4696
    %v4698 = vrot.slane %v4616, %v4697
    %v4699 = vlaneseq
    %v4700 = vshrl.u32 %v4699, 7
    %v4701 = vsub.s32 3, %v4700
    %v4702 = vrot.slane %v4616, %v4701
    %v4703 = vlaneseq
    %v4704 = vshrl.u32 %v4703, 7
    %v4705 = vsub.s32 4, %v4704
    %v4706 = vrot.slane %v4616, %v4705
    %v4707 = vlaneseq
    %v4708 = vshrl.u32 %v4707, 7
    %v4709 = vsub.s32 5, %v4708
    %v4710 = vrot.slane %v4616, %v4709
    %v4711 = vlaneseq
    %v4712 = vshrl.u32 %v4711, 7
    %v4713 = vsub.s32 6, %v4712
    %v4714 = vrot.slane %v4616, %v4713
    %v4715 = vlaneseq
    %v4716 = vshrl.u32 %v4715, 7
    %v4717 = vsub.s32 7, %v4716
    %v4718 = vrot.slane %v4616, %v4717
    %v4719 = vlaneseq
    %v4720 = vshrl.u32 %v4719, 7
    %v4721 = vsub.s32 0, %v4720
    %v4722 = vrot.slane %v4618, %v4721
    %v4723 = vlaneseq
    %v4724 = vshrl.u32 %v4723, 7
    %v4725 = vsub.s32 1, %v4724
    %v4726 = vrot.slane %v4618, %v4725
    %v4737 = vadd.f32 %v4675, %v4690
    %v4738 = vadd.f32 %v4676, %v4694
    %v4739 = vadd.f32 %v4677, %v4698
    %v4740 = vadd.f32 %v4678, %v4702
    %v4741 = vadd.f32 %v4679, %v4706
    %v4742 = vadd.f32 %v4680, %v4710
    %v4743 = vadd.f32 %v4681, %v4714
    %v4744 = vadd.f32 %v4682, %v4718
    %v4745 = vadd.f32 %v4683, %v4722
    %v4746 = vadd.f32 %v4684, %v4726
    %v4747 = vmax.f32 %v4737, 0.0
    %v4748 = vmax.f32 %v4738, 0.0
    %v4749 = vmax.f32 %v4739, 0.0
    %v4750 = vmax.f32 %v4740, 0.0
    %v4751 = vmax.f32 %v4741, 0.0
    %v4752 = vmax.f32 %v4742, 0.0
    %v4753 = vmax.f32 %v4743, 0.0
    %v4754 = vmax.f32 %v4744, 0.0
    %v4755 = vmax.f32 %v4745, 0.0
    %v4756 = vmax.f32 %v4746, 0.0
    %v4759 = vlaneseq
    %v4760 = vshrl.u32 %v4759, 7
    %v4761 = vsub.s32 0, %v4760
    %v4762 = vrot.slane %v4620, %v4761
    %v4763 = vlaneseq
    %v4764 = vshrl.u32 %v4763, 7
    %v4765 = vsub.s32 1, %v4764
    %v4766 = vrot.slane %v4620, %v4765
    %v4767 = vlaneseq
    %v4768 = vshrl.u32 %v4767, 7
    %v4769 = vsub.s32 2, %v4768
    %v4770 = vrot.slane %v4620, %v4769
    %v4771 = vlaneseq
    %v4772 = vshrl.u32 %v4771, 7
    %v4773 = vsub.s32 3, %v4772
    %v4774 = vrot.slane %v4620, %v4773
    %v4775 = vlaneseq
    %v4776 = vshrl.u32 %v4775, 7
    %v4777 = vsub.s32 4, %v4776
    %v4778 = vrot.slane %v4620, %v4777
    %v4779 = vlaneseq
    %v4780 = vshrl.u32 %v4779, 7
    %v4781 = vsub.s32 5, %v4780
    %v4782 = vrot.slane %v4620, %v4781
    %v4783 = vlaneseq
    %v4784 = vshrl.u32 %v4783, 7
    %v4785 = vsub.s32 6, %v4784
    %v4786 = vrot.slane %v4620, %v4785
    %v4787 = vlaneseq
    %v4788 = vshrl.u32 %v4787, 7
    %v4789 = vsub.s32 7, %v4788
    %v4790 = vrot.slane %v4620, %v4789
    %v4791 = vlaneseq
    %v4792 = vshrl.u32 %v4791, 7
    %v4793 = vsub.s32 0, %v4792
    %v4794 = vrot.slane %v4622, %v4793
    %v4795 = vlaneseq
    %v4796 = vshrl.u32 %v4795, 7
    %v4797 = vsub.s32 1, %v4796
    %v4798 = vrot.slane %v4622, %v4797
    %v4809 = vmul.f32 %v4747, %v4762
    %v4810 = vmul.f32 %v4748, %v4766
    %v4811 = vmul.f32 %v4749, %v4770
    %v4812 = vmul.f32 %v4750, %v4774
    %v4813 = vmul.f32 %v4751, %v4778
    %v4814 = vmul.f32 %v4752, %v4782
    %v4815 = vmul.f32 %v4753, %v4786
    %v4816 = vmul.f32 %v4754, %v4790
    %v4817 = vmul.f32 %v4755, %v4794
    %v4818 = vmul.f32 %v4756, %v4798
    %v4819 = vadd.f32 %v4610, %v4809
    %v4820 = vadd.f32 %v4819, %v4810
    %v4821 = vadd.f32 %v4820, %v4811
    %v4822 = vadd.f32 %v4821, %v4812
    %v4823 = vadd.f32 %v4822, %v4813
    %v4824 = vadd.f32 %v4823, %v4814
    %v4825 = vadd.f32 %v4824, %v4815
    %v4826 = vadd.f32 %v4825, %v4816
    %v4827 = vadd.f32 %v4826, %v4817
    %v4828 = vadd.f32 %v4827, %v4818
    %s4829 = scalar_lea.vmem [#allocation3], 880
    %v4830 = vld [vmem:[%s4829] ss:$4 sm:$0xff]
    %s4831 = scalar_lea.vmem %s4829, 32 [#allocation3]
    %v4832 = vld [vmem:[%s4831] ss:$4 sm:$0x3]
    %s4833 = scalar_lea.vmem %s4829, 1 [#allocation3]
    %v4834 = vld [vmem:[%s4833] ss:$4 sm:$0xff]
    %s4835 = scalar_lea.vmem %s4829, 33 [#allocation3]
    %v4836 = vld [vmem:[%s4835] ss:$4 sm:$0x3]
    %s4837 = scalar_lea.vmem %s4829, 2 [#allocation3]
    %v4838 = vld [vmem:[%s4837] ss:$4 sm:$0xff]
    %s4839 = scalar_lea.vmem %s4829, 34 [#allocation3]
    %v4840 = vld [vmem:[%s4839] ss:$4 sm:$0x3]
    %v4843 = vlaneseq
    %v4844 = vshrl.u32 %v4843, 7
    %v4845 = vsub.s32 0, %v4844
    %v4846 = vrot.slane %v4830, %v4845
    %v4847 = vlaneseq
    %v4848 = vshrl.u32 %v4847, 7
    %v4849 = vsub.s32 1, %v4848
    %v4850 = vrot.slane %v4830, %v4849
    %v4851 = vlaneseq
    %v4852 = vshrl.u32 %v4851, 7
    %v4853 = vsub.s32 2, %v4852
    %v4854 = vrot.slane %v4830, %v4853
    %v4855 = vlaneseq
    %v4856 = vshrl.u32 %v4855, 7
    %v4857 = vsub.s32 3, %v4856
    %v4858 = vrot.slane %v4830, %v4857
    %v4859 = vlaneseq
    %v4860 = vshrl.u32 %v4859, 7
    %v4861 = vsub.s32 4, %v4860
    %v4862 = vrot.slane %v4830, %v4861
    %v4863 = vlaneseq
    %v4864 = vshrl.u32 %v4863, 7
    %v4865 = vsub.s32 5, %v4864
    %v4866 = vrot.slane %v4830, %v4865
    %v4867 = vlaneseq
    %v4868 = vshrl.u32 %v4867, 7
    %v4869 = vsub.s32 6, %v4868
    %v4870 = vrot.slane %v4830, %v4869
    %v4871 = vlaneseq
    %v4872 = vshrl.u32 %v4871, 7
    %v4873 = vsub.s32 7, %v4872
    %v4874 = vrot.slane %v4830, %v4873
    %v4875 = vlaneseq
    %v4876 = vshrl.u32 %v4875, 7
    %v4877 = vsub.s32 0, %v4876
    %v4878 = vrot.slane %v4832, %v4877
    %v4879 = vlaneseq
    %v4880 = vshrl.u32 %v4879, 7
    %v4881 = vsub.s32 1, %v4880
    %v4882 = vrot.slane %v4832, %v4881
    %v4893 = vmul.f32 %v43, %v4846
    %v4894 = vmul.f32 %v43, %v4850
    %v4895 = vmul.f32 %v43, %v4854
    %v4896 = vmul.f32 %v43, %v4858
    %v4897 = vmul.f32 %v43, %v4862
    %v4898 = vmul.f32 %v43, %v4866
    %v4899 = vmul.f32 %v43, %v4870
    %v4900 = vmul.f32 %v43, %v4874
    %v4901 = vmul.f32 %v43, %v4878
    %v4902 = vmul.f32 %v43, %v4882
    %v4905 = vlaneseq
    %v4906 = vshrl.u32 %v4905, 7
    %v4907 = vsub.s32 0, %v4906
    %v4908 = vrot.slane %v4834, %v4907
    %v4909 = vlaneseq
    %v4910 = vshrl.u32 %v4909, 7
    %v4911 = vsub.s32 1, %v4910
    %v4912 = vrot.slane %v4834, %v4911
    %v4913 = vlaneseq
    %v4914 = vshrl.u32 %v4913, 7
    %v4915 = vsub.s32 2, %v4914
    %v4916 = vrot.slane %v4834, %v4915
    %v4917 = vlaneseq
    %v4918 = vshrl.u32 %v4917, 7
    %v4919 = vsub.s32 3, %v4918
    %v4920 = vrot.slane %v4834, %v4919
    %v4921 = vlaneseq
    %v4922 = vshrl.u32 %v4921, 7
    %v4923 = vsub.s32 4, %v4922
    %v4924 = vrot.slane %v4834, %v4923
    %v4925 = vlaneseq
    %v4926 = vshrl.u32 %v4925, 7
    %v4927 = vsub.s32 5, %v4926
    %v4928 = vrot.slane %v4834, %v4927
    %v4929 = vlaneseq
    %v4930 = vshrl.u32 %v4929, 7
    %v4931 = vsub.s32 6, %v4930
    %v4932 = vrot.slane %v4834, %v4931
    %v4933 = vlaneseq
    %v4934 = vshrl.u32 %v4933, 7
    %v4935 = vsub.s32 7, %v4934
    %v4936 = vrot.slane %v4834, %v4935
    %v4937 = vlaneseq
    %v4938 = vshrl.u32 %v4937, 7
    %v4939 = vsub.s32 0, %v4938
    %v4940 = vrot.slane %v4836, %v4939
    %v4941 = vlaneseq
    %v4942 = vshrl.u32 %v4941, 7
    %v4943 = vsub.s32 1, %v4942
    %v4944 = vrot.slane %v4836, %v4943
    %v4955 = vadd.f32 %v4893, %v4908
    %v4956 = vadd.f32 %v4894, %v4912
    %v4957 = vadd.f32 %v4895, %v4916
    %v4958 = vadd.f32 %v4896, %v4920
    %v4959 = vadd.f32 %v4897, %v4924
    %v4960 = vadd.f32 %v4898, %v4928
    %v4961 = vadd.f32 %v4899, %v4932
    %v4962 = vadd.f32 %v4900, %v4936
    %v4963 = vadd.f32 %v4901, %v4940
    %v4964 = vadd.f32 %v4902, %v4944
    %v4965 = vmax.f32 %v4955, 0.0
    %v4966 = vmax.f32 %v4956, 0.0
    %v4967 = vmax.f32 %v4957, 0.0
    %v4968 = vmax.f32 %v4958, 0.0
    %v4969 = vmax.f32 %v4959, 0.0
    %v4970 = vmax.f32 %v4960, 0.0
    %v4971 = vmax.f32 %v4961, 0.0
    %v4972 = vmax.f32 %v4962, 0.0
    %v4973 = vmax.f32 %v4963, 0.0
    %v4974 = vmax.f32 %v4964, 0.0
    %v4977 = vlaneseq
    %v4978 = vshrl.u32 %v4977, 7
    %v4979 = vsub.s32 0, %v4978
    %v4980 = vrot.slane %v4838, %v4979
    %v4981 = vlaneseq
    %v4982 = vshrl.u32 %v4981, 7
    %v4983 = vsub.s32 1, %v4982
    %v4984 = vrot.slane %v4838, %v4983
    %v4985 = vlaneseq
    %v4986 = vshrl.u32 %v4985, 7
    %v4987 = vsub.s32 2, %v4986
    %v4988 = vrot.slane %v4838, %v4987
    %v4989 = vlaneseq
    %v4990 = vshrl.u32 %v4989, 7
    %v4991 = vsub.s32 3, %v4990
    %v4992 = vrot.slane %v4838, %v4991
    %v4993 = vlaneseq
    %v4994 = vshrl.u32 %v4993, 7
    %v4995 = vsub.s32 4, %v4994
    %v4996 = vrot.slane %v4838, %v4995
    %v4997 = vlaneseq
    %v4998 = vshrl.u32 %v4997, 7
    %v4999 = vsub.s32 5, %v4998
    %v5000 = vrot.slane %v4838, %v4999
    %v5001 = vlaneseq
    %v5002 = vshrl.u32 %v5001, 7
    %v5003 = vsub.s32 6, %v5002
    %v5004 = vrot.slane %v4838, %v5003
    %v5005 = vlaneseq
    %v5006 = vshrl.u32 %v5005, 7
    %v5007 = vsub.s32 7, %v5006
    %v5008 = vrot.slane %v4838, %v5007
    %v5009 = vlaneseq
    %v5010 = vshrl.u32 %v5009, 7
    %v5011 = vsub.s32 0, %v5010
    %v5012 = vrot.slane %v4840, %v5011
    %v5013 = vlaneseq
    %v5014 = vshrl.u32 %v5013, 7
    %v5015 = vsub.s32 1, %v5014
    %v5016 = vrot.slane %v4840, %v5015
    %v5027 = vmul.f32 %v4965, %v4980
    %v5028 = vmul.f32 %v4966, %v4984
    %v5029 = vmul.f32 %v4967, %v4988
    %v5030 = vmul.f32 %v4968, %v4992
    %v5031 = vmul.f32 %v4969, %v4996
    %v5032 = vmul.f32 %v4970, %v5000
    %v5033 = vmul.f32 %v4971, %v5004
    %v5034 = vmul.f32 %v4972, %v5008
    %v5035 = vmul.f32 %v4973, %v5012
    %v5036 = vmul.f32 %v4974, %v5016
    %v5037 = vadd.f32 %v4828, %v5027
    %v5038 = vadd.f32 %v5037, %v5028
    %v5039 = vadd.f32 %v5038, %v5029
    %v5040 = vadd.f32 %v5039, %v5030
    %v5041 = vadd.f32 %v5040, %v5031
    %v5042 = vadd.f32 %v5041, %v5032
    %v5043 = vadd.f32 %v5042, %v5033
    %v5044 = vadd.f32 %v5043, %v5034
    %v5045 = vadd.f32 %v5044, %v5035
    %v5046 = vadd.f32 %v5045, %v5036
    %s5047 = scalar_lea.vmem [#allocation3], 920
    %v5048 = vld [vmem:[%s5047] ss:$4 sm:$0xff]
    %s5049 = scalar_lea.vmem %s5047, 32 [#allocation3]
    %v5050 = vld [vmem:[%s5049] ss:$4 sm:$0x3]
    %s5051 = scalar_lea.vmem %s5047, 1 [#allocation3]
    %v5052 = vld [vmem:[%s5051] ss:$4 sm:$0xff]
    %s5053 = scalar_lea.vmem %s5047, 33 [#allocation3]
    %v5054 = vld [vmem:[%s5053] ss:$4 sm:$0x3]
    %s5055 = scalar_lea.vmem %s5047, 2 [#allocation3]
    %v5056 = vld [vmem:[%s5055] ss:$4 sm:$0xff]
    %s5057 = scalar_lea.vmem %s5047, 34 [#allocation3]
    %v5058 = vld [vmem:[%s5057] ss:$4 sm:$0x3]
    %v5061 = vlaneseq
    %v5062 = vshrl.u32 %v5061, 7
    %v5063 = vsub.s32 0, %v5062
    %v5064 = vrot.slane %v5048, %v5063
    %v5065 = vlaneseq
    %v5066 = vshrl.u32 %v5065, 7
    %v5067 = vsub.s32 1, %v5066
    %v5068 = vrot.slane %v5048, %v5067
    %v5069 = vlaneseq
    %v5070 = vshrl.u32 %v5069, 7
    %v5071 = vsub.s32 2, %v5070
    %v5072 = vrot.slane %v5048, %v5071
    %v5073 = vlaneseq
    %v5074 = vshrl.u32 %v5073, 7
    %v5075 = vsub.s32 3, %v5074
    %v5076 = vrot.slane %v5048, %v5075
    %v5077 = vlaneseq
    %v5078 = vshrl.u32 %v5077, 7
    %v5079 = vsub.s32 4, %v5078
    %v5080 = vrot.slane %v5048, %v5079
    %v5081 = vlaneseq
    %v5082 = vshrl.u32 %v5081, 7
    %v5083 = vsub.s32 5, %v5082
    %v5084 = vrot.slane %v5048, %v5083
    %v5085 = vlaneseq
    %v5086 = vshrl.u32 %v5085, 7
    %v5087 = vsub.s32 6, %v5086
    %v5088 = vrot.slane %v5048, %v5087
    %v5089 = vlaneseq
    %v5090 = vshrl.u32 %v5089, 7
    %v5091 = vsub.s32 7, %v5090
    %v5092 = vrot.slane %v5048, %v5091
    %v5093 = vlaneseq
    %v5094 = vshrl.u32 %v5093, 7
    %v5095 = vsub.s32 0, %v5094
    %v5096 = vrot.slane %v5050, %v5095
    %v5097 = vlaneseq
    %v5098 = vshrl.u32 %v5097, 7
    %v5099 = vsub.s32 1, %v5098
    %v5100 = vrot.slane %v5050, %v5099
    %v5111 = vmul.f32 %v43, %v5064
    %v5112 = vmul.f32 %v43, %v5068
    %v5113 = vmul.f32 %v43, %v5072
    %v5114 = vmul.f32 %v43, %v5076
    %v5115 = vmul.f32 %v43, %v5080
    %v5116 = vmul.f32 %v43, %v5084
    %v5117 = vmul.f32 %v43, %v5088
    %v5118 = vmul.f32 %v43, %v5092
    %v5119 = vmul.f32 %v43, %v5096
    %v5120 = vmul.f32 %v43, %v5100
    %v5123 = vlaneseq
    %v5124 = vshrl.u32 %v5123, 7
    %v5125 = vsub.s32 0, %v5124
    %v5126 = vrot.slane %v5052, %v5125
    %v5127 = vlaneseq
    %v5128 = vshrl.u32 %v5127, 7
    %v5129 = vsub.s32 1, %v5128
    %v5130 = vrot.slane %v5052, %v5129
    %v5131 = vlaneseq
    %v5132 = vshrl.u32 %v5131, 7
    %v5133 = vsub.s32 2, %v5132
    %v5134 = vrot.slane %v5052, %v5133
    %v5135 = vlaneseq
    %v5136 = vshrl.u32 %v5135, 7
    %v5137 = vsub.s32 3, %v5136
    %v5138 = vrot.slane %v5052, %v5137
    %v5139 = vlaneseq
    %v5140 = vshrl.u32 %v5139, 7
    %v5141 = vsub.s32 4, %v5140
    %v5142 = vrot.slane %v5052, %v5141
    %v5143 = vlaneseq
    %v5144 = vshrl.u32 %v5143, 7
    %v5145 = vsub.s32 5, %v5144
    %v5146 = vrot.slane %v5052, %v5145
    %v5147 = vlaneseq
    %v5148 = vshrl.u32 %v5147, 7
    %v5149 = vsub.s32 6, %v5148
    %v5150 = vrot.slane %v5052, %v5149
    %v5151 = vlaneseq
    %v5152 = vshrl.u32 %v5151, 7
    %v5153 = vsub.s32 7, %v5152
    %v5154 = vrot.slane %v5052, %v5153
    %v5155 = vlaneseq
    %v5156 = vshrl.u32 %v5155, 7
    %v5157 = vsub.s32 0, %v5156
    %v5158 = vrot.slane %v5054, %v5157
    %v5159 = vlaneseq
    %v5160 = vshrl.u32 %v5159, 7
    %v5161 = vsub.s32 1, %v5160
    %v5162 = vrot.slane %v5054, %v5161
    %v5173 = vadd.f32 %v5111, %v5126
    %v5174 = vadd.f32 %v5112, %v5130
    %v5175 = vadd.f32 %v5113, %v5134
    %v5176 = vadd.f32 %v5114, %v5138
    %v5177 = vadd.f32 %v5115, %v5142
    %v5178 = vadd.f32 %v5116, %v5146
    %v5179 = vadd.f32 %v5117, %v5150
    %v5180 = vadd.f32 %v5118, %v5154
    %v5181 = vadd.f32 %v5119, %v5158
    %v5182 = vadd.f32 %v5120, %v5162
    %v5183 = vmax.f32 %v5173, 0.0
    %v5184 = vmax.f32 %v5174, 0.0
    %v5185 = vmax.f32 %v5175, 0.0
    %v5186 = vmax.f32 %v5176, 0.0
    %v5187 = vmax.f32 %v5177, 0.0
    %v5188 = vmax.f32 %v5178, 0.0
    %v5189 = vmax.f32 %v5179, 0.0
    %v5190 = vmax.f32 %v5180, 0.0
    %v5191 = vmax.f32 %v5181, 0.0
    %v5192 = vmax.f32 %v5182, 0.0
    %v5195 = vlaneseq
    %v5196 = vshrl.u32 %v5195, 7
    %v5197 = vsub.s32 0, %v5196
    %v5198 = vrot.slane %v5056, %v5197
    %v5199 = vlaneseq
    %v5200 = vshrl.u32 %v5199, 7
    %v5201 = vsub.s32 1, %v5200
    %v5202 = vrot.slane %v5056, %v5201
    %v5203 = vlaneseq
    %v5204 = vshrl.u32 %v5203, 7
    %v5205 = vsub.s32 2, %v5204
    %v5206 = vrot.slane %v5056, %v5205
    %v5207 = vlaneseq
    %v5208 = vshrl.u32 %v5207, 7
    %v5209 = vsub.s32 3, %v5208
    %v5210 = vrot.slane %v5056, %v5209
    %v5211 = vlaneseq
    %v5212 = vshrl.u32 %v5211, 7
    %v5213 = vsub.s32 4, %v5212
    %v5214 = vrot.slane %v5056, %v5213
    %v5215 = vlaneseq
    %v5216 = vshrl.u32 %v5215, 7
    %v5217 = vsub.s32 5, %v5216
    %v5218 = vrot.slane %v5056, %v5217
    %v5219 = vlaneseq
    %v5220 = vshrl.u32 %v5219, 7
    %v5221 = vsub.s32 6, %v5220
    %v5222 = vrot.slane %v5056, %v5221
    %v5223 = vlaneseq
    %v5224 = vshrl.u32 %v5223, 7
    %v5225 = vsub.s32 7, %v5224
    %v5226 = vrot.slane %v5056, %v5225
    %v5227 = vlaneseq
    %v5228 = vshrl.u32 %v5227, 7
    %v5229 = vsub.s32 0, %v5228
    %v5230 = vrot.slane %v5058, %v5229
    %v5231 = vlaneseq
    %v5232 = vshrl.u32 %v5231, 7
    %v5233 = vsub.s32 1, %v5232
    %v5234 = vrot.slane %v5058, %v5233
    %v5245 = vmul.f32 %v5183, %v5198
    %v5246 = vmul.f32 %v5184, %v5202
    %v5247 = vmul.f32 %v5185, %v5206
    %v5248 = vmul.f32 %v5186, %v5210
    %v5249 = vmul.f32 %v5187, %v5214
    %v5250 = vmul.f32 %v5188, %v5218
    %v5251 = vmul.f32 %v5189, %v5222
    %v5252 = vmul.f32 %v5190, %v5226
    %v5253 = vmul.f32 %v5191, %v5230
    %v5254 = vmul.f32 %v5192, %v5234
    %v5255 = vadd.f32 %v5046, %v5245
    %v5256 = vadd.f32 %v5255, %v5246
    %v5257 = vadd.f32 %v5256, %v5247
    %v5258 = vadd.f32 %v5257, %v5248
    %v5259 = vadd.f32 %v5258, %v5249
    %v5260 = vadd.f32 %v5259, %v5250
    %v5261 = vadd.f32 %v5260, %v5251
    %v5262 = vadd.f32 %v5261, %v5252
    %v5263 = vadd.f32 %v5262, %v5253
    %v5264 = vadd.f32 %v5263, %v5254
    %s5265 = scalar_lea.vmem [#allocation3], 960
    %v5266 = vld [vmem:[%s5265] ss:$4 sm:$0xff]
    %s5267 = scalar_lea.vmem %s5265, 32 [#allocation3]
    %v5268 = vld [vmem:[%s5267] ss:$4 sm:$0x3]
    %s5269 = scalar_lea.vmem %s5265, 1 [#allocation3]
    %v5270 = vld [vmem:[%s5269] ss:$4 sm:$0xff]
    %s5271 = scalar_lea.vmem %s5265, 33 [#allocation3]
    %v5272 = vld [vmem:[%s5271] ss:$4 sm:$0x3]
    %s5273 = scalar_lea.vmem %s5265, 2 [#allocation3]
    %v5274 = vld [vmem:[%s5273] ss:$4 sm:$0xff]
    %s5275 = scalar_lea.vmem %s5265, 34 [#allocation3]
    %v5276 = vld [vmem:[%s5275] ss:$4 sm:$0x3]
    %v5279 = vlaneseq
    %v5280 = vshrl.u32 %v5279, 7
    %v5281 = vsub.s32 0, %v5280
    %v5282 = vrot.slane %v5266, %v5281
    %v5283 = vlaneseq
    %v5284 = vshrl.u32 %v5283, 7
    %v5285 = vsub.s32 1, %v5284
    %v5286 = vrot.slane %v5266, %v5285
    %v5287 = vlaneseq
    %v5288 = vshrl.u32 %v5287, 7
    %v5289 = vsub.s32 2, %v5288
    %v5290 = vrot.slane %v5266, %v5289
    %v5291 = vlaneseq
    %v5292 = vshrl.u32 %v5291, 7
    %v5293 = vsub.s32 3, %v5292
    %v5294 = vrot.slane %v5266, %v5293
    %v5295 = vlaneseq
    %v5296 = vshrl.u32 %v5295, 7
    %v5297 = vsub.s32 4, %v5296
    %v5298 = vrot.slane %v5266, %v5297
    %v5299 = vlaneseq
    %v5300 = vshrl.u32 %v5299, 7
    %v5301 = vsub.s32 5, %v5300
    %v5302 = vrot.slane %v5266, %v5301
    %v5303 = vlaneseq
    %v5304 = vshrl.u32 %v5303, 7
    %v5305 = vsub.s32 6, %v5304
    %v5306 = vrot.slane %v5266, %v5305
    %v5307 = vlaneseq
    %v5308 = vshrl.u32 %v5307, 7
    %v5309 = vsub.s32 7, %v5308
    %v5310 = vrot.slane %v5266, %v5309
    %v5311 = vlaneseq
    %v5312 = vshrl.u32 %v5311, 7
    %v5313 = vsub.s32 0, %v5312
    %v5314 = vrot.slane %v5268, %v5313
    %v5315 = vlaneseq
    %v5316 = vshrl.u32 %v5315, 7
    %v5317 = vsub.s32 1, %v5316
    %v5318 = vrot.slane %v5268, %v5317
    %v5329 = vmul.f32 %v43, %v5282
    %v5330 = vmul.f32 %v43, %v5286
    %v5331 = vmul.f32 %v43, %v5290
    %v5332 = vmul.f32 %v43, %v5294
    %v5333 = vmul.f32 %v43, %v5298
    %v5334 = vmul.f32 %v43, %v5302
    %v5335 = vmul.f32 %v43, %v5306
    %v5336 = vmul.f32 %v43, %v5310
    %v5337 = vmul.f32 %v43, %v5314
    %v5338 = vmul.f32 %v43, %v5318
    %v5341 = vlaneseq
    %v5342 = vshrl.u32 %v5341, 7
    %v5343 = vsub.s32 0, %v5342
    %v5344 = vrot.slane %v5270, %v5343
    %v5345 = vlaneseq
    %v5346 = vshrl.u32 %v5345, 7
    %v5347 = vsub.s32 1, %v5346
    %v5348 = vrot.slane %v5270, %v5347
    %v5349 = vlaneseq
    %v5350 = vshrl.u32 %v5349, 7
    %v5351 = vsub.s32 2, %v5350
    %v5352 = vrot.slane %v5270, %v5351
    %v5353 = vlaneseq
    %v5354 = vshrl.u32 %v5353, 7
    %v5355 = vsub.s32 3, %v5354
    %v5356 = vrot.slane %v5270, %v5355
    %v5357 = vlaneseq
    %v5358 = vshrl.u32 %v5357, 7
    %v5359 = vsub.s32 4, %v5358
    %v5360 = vrot.slane %v5270, %v5359
    %v5361 = vlaneseq
    %v5362 = vshrl.u32 %v5361, 7
    %v5363 = vsub.s32 5, %v5362
    %v5364 = vrot.slane %v5270, %v5363
    %v5365 = vlaneseq
    %v5366 = vshrl.u32 %v5365, 7
    %v5367 = vsub.s32 6, %v5366
    %v5368 = vrot.slane %v5270, %v5367
    %v5369 = vlaneseq
    %v5370 = vshrl.u32 %v5369, 7
    %v5371 = vsub.s32 7, %v5370
    %v5372 = vrot.slane %v5270, %v5371
    %v5373 = vlaneseq
    %v5374 = vshrl.u32 %v5373, 7
    %v5375 = vsub.s32 0, %v5374
    %v5376 = vrot.slane %v5272, %v5375
    %v5377 = vlaneseq
    %v5378 = vshrl.u32 %v5377, 7
    %v5379 = vsub.s32 1, %v5378
    %v5380 = vrot.slane %v5272, %v5379
    %v5391 = vadd.f32 %v5329, %v5344
    %v5392 = vadd.f32 %v5330, %v5348
    %v5393 = vadd.f32 %v5331, %v5352
    %v5394 = vadd.f32 %v5332, %v5356
    %v5395 = vadd.f32 %v5333, %v5360
    %v5396 = vadd.f32 %v5334, %v5364
    %v5397 = vadd.f32 %v5335, %v5368
    %v5398 = vadd.f32 %v5336, %v5372
    %v5399 = vadd.f32 %v5337, %v5376
    %v5400 = vadd.f32 %v5338, %v5380
    %v5401 = vmax.f32 %v5391, 0.0
    %v5402 = vmax.f32 %v5392, 0.0
    %v5403 = vmax.f32 %v5393, 0.0
    %v5404 = vmax.f32 %v5394, 0.0
    %v5405 = vmax.f32 %v5395, 0.0
    %v5406 = vmax.f32 %v5396, 0.0
    %v5407 = vmax.f32 %v5397, 0.0
    %v5408 = vmax.f32 %v5398, 0.0
    %v5409 = vmax.f32 %v5399, 0.0
    %v5410 = vmax.f32 %v5400, 0.0
    %v5413 = vlaneseq
    %v5414 = vshrl.u32 %v5413, 7
    %v5415 = vsub.s32 0, %v5414
    %v5416 = vrot.slane %v5274, %v5415
    %v5417 = vlaneseq
    %v5418 = vshrl.u32 %v5417, 7
    %v5419 = vsub.s32 1, %v5418
    %v5420 = vrot.slane %v5274, %v5419
    %v5421 = vlaneseq
    %v5422 = vshrl.u32 %v5421, 7
    %v5423 = vsub.s32 2, %v5422
    %v5424 = vrot.slane %v5274, %v5423
    %v5425 = vlaneseq
    %v5426 = vshrl.u32 %v5425, 7
    %v5427 = vsub.s32 3, %v5426
    %v5428 = vrot.slane %v5274, %v5427
    %v5429 = vlaneseq
    %v5430 = vshrl.u32 %v5429, 7
    %v5431 = vsub.s32 4, %v5430
    %v5432 = vrot.slane %v5274, %v5431
    %v5433 = vlaneseq
    %v5434 = vshrl.u32 %v5433, 7
    %v5435 = vsub.s32 5, %v5434
    %v5436 = vrot.slane %v5274, %v5435
    %v5437 = vlaneseq
    %v5438 = vshrl.u32 %v5437, 7
    %v5439 = vsub.s32 6, %v5438
    %v5440 = vrot.slane %v5274, %v5439
    %v5441 = vlaneseq
    %v5442 = vshrl.u32 %v5441, 7
    %v5443 = vsub.s32 7, %v5442
    %v5444 = vrot.slane %v5274, %v5443
    %v5445 = vlaneseq
    %v5446 = vshrl.u32 %v5445, 7
    %v5447 = vsub.s32 0, %v5446
    %v5448 = vrot.slane %v5276, %v5447
    %v5449 = vlaneseq
    %v5450 = vshrl.u32 %v5449, 7
    %v5451 = vsub.s32 1, %v5450
    %v5452 = vrot.slane %v5276, %v5451
    %v5463 = vmul.f32 %v5401, %v5416
    %v5464 = vmul.f32 %v5402, %v5420
    %v5465 = vmul.f32 %v5403, %v5424
    %v5466 = vmul.f32 %v5404, %v5428
    %v5467 = vmul.f32 %v5405, %v5432
    %v5468 = vmul.f32 %v5406, %v5436
    %v5469 = vmul.f32 %v5407, %v5440
    %v5470 = vmul.f32 %v5408, %v5444
    %v5471 = vmul.f32 %v5409, %v5448
    %v5472 = vmul.f32 %v5410, %v5452
    %v5473 = vadd.f32 %v5264, %v5463
    %v5474 = vadd.f32 %v5473, %v5464
    %v5475 = vadd.f32 %v5474, %v5465
    %v5476 = vadd.f32 %v5475, %v5466
    %v5477 = vadd.f32 %v5476, %v5467
    %v5478 = vadd.f32 %v5477, %v5468
    %v5479 = vadd.f32 %v5478, %v5469
    %v5480 = vadd.f32 %v5479, %v5470
    %v5481 = vadd.f32 %v5480, %v5471
    %v5482 = vadd.f32 %v5481, %v5472
    %5483 = vadd.xlane.f32.xlu0 %v5482
    %v5484 = vpop.xlane.xlu0 %5483
    %v5485 = vld [vmem:[#allocation2] sm:$0x1]
    %v5487 = vlaneseq
    %v5488 = vshrl.u32 %v5487, 7
    %v5489 = vsub.s32 0, %v5488
    %v5490 = vrot.slane %v5485, %v5489
    %v5492 = vadd.f32 %v5484, %v5490
    %vm5493 = vcmask 7168
    %5494 = vst.msk [vmem:[%s3] sm:$0xff] %vm5493, %v5492
    // Predicated region
    $region18: #{tpu_custom_call.1} parent=1 // pred_check
      _
    $region19: #{tpu_custom_call.1} parent=1 // pred_check_branch
      %5496 = sbr.rel (0) target = $region21
    $region20: #{tpu_custom_call.1} parent=1 // pred_region
      _
    $region21: #{tpu_custom_call.1} parent=1 // pred_fallthru
      _
    // Predicated region
    $region22: #{tpu_custom_call.1} parent=1 // pred_check
      _
    $region23: #{tpu_custom_call.1} parent=1 // pred_check_branch
      %5498 = sbr.rel (0) target = $region25
    $region24: #{tpu_custom_call.1} parent=1 // pred_region
      _
    $region25: #{tpu_custom_call.1} parent=1 // pred_fallthru
      _
    %5499 = vsyncpa [#allocation4], 1

</llo_original>
